<compile_context>
chip_gen: v7x
topology: tpu7x:2x2x1
jax: 0.10.0
libtpu: 0.0.40
codegen_flags: <defaults>
</compile_context>

<pallas_src>
import jax
import jax.numpy as jnp
from jax.experimental import pallas as pl
from jax.experimental.pallas import tpu as pltpu

EPS = 1e-5


# ----------------------------------------------------------------------------
# In-kernel helper: 3x3 "same" conv of one (H, W, Cin) tile via im2col + 1 dot.
# ----------------------------------------------------------------------------
def _conv3x3_im2col(pad_sc, col_sc, w_ref, interior_hwc):
    """pad_sc: VMEM (H+2, W+2, Cin) f32; col_sc: VMEM (H*W, 9*Cin) bf16;
    w_ref: (9*Cin, Cout) bf16, row = (ky*3+kx)*Cin + ci.  Returns (H*W, Cout) f32."""
    Hp, Wp, Cin = pad_sc.shape
    H, W = Hp - 2, Wp - 2

    # Zero only the 1-pixel halo; the interior is fully overwritten below.
    zrow = jnp.zeros((1, Wp, Cin), pad_sc.dtype)
    pad_sc[0:1, :, :] = zrow
    pad_sc[H + 1:H + 2, :, :] = zrow
    zcol = jnp.zeros((Hp, 1, Cin), pad_sc.dtype)
    pad_sc[:, 0:1, :] = zcol
    pad_sc[:, W + 1:W + 2, :] = zcol
    pad_sc[1:H + 1, 1:W + 1, :] = interior_hwc.astype(pad_sc.dtype)

    # im2col: pack the 9 shifted taps into one (H*W, 9*Cin) bf16 slab.
    for tap in range(9):
        ky, kx = divmod(tap, 3)
        col_sc[:, tap * Cin:(tap + 1) * Cin] = (
            pad_sc[ky:ky + H, kx:kx + W, :]
            .reshape(H * W, Cin).astype(col_sc.dtype))

    # One big-K MXU matmul (bf16 x bf16 -> f32 accumulation).
    return jnp.dot(col_sc[...], w_ref[...], preferred_element_type=jnp.float32)


# ----------------------------------------------------------------------------
# Pass 1: conv1 + per-tile channel sum / sumsq (single-pass BN moments).
# ----------------------------------------------------------------------------
def _conv1_stats_kernel(x_ref, w_ref, y_ref, s_ref, ss_ref, pad_sc, col_sc):
    acc = _conv3x3_im2col(pad_sc, col_sc, w_ref, x_ref[0])   # (H*W, Cout) f32
    y_ref[0] = acc
    s_ref[0] = jnp.sum(acc, axis=0, keepdims=True)
    ss_ref[0] = jnp.sum(acc * acc, axis=0, keepdims=True)


# ----------------------------------------------------------------------------
# Pass 2: bn1 (folded affine) + relu + conv2 + per-tile sum / sumsq.
# ----------------------------------------------------------------------------
def _bn_relu_conv2_stats_kernel(y1_ref, sc_ref, sh_ref, w_ref,
                                y_ref, s_ref, ss_ref, pad_sc, col_sc):
    Hp, Wp, C = pad_sc.shape
    H, W = Hp - 2, Wp - 2
    z = jnp.maximum(y1_ref[0] * sc_ref[...] + sh_ref[...], 0.0)   # bn1 + relu, f32
    acc = _conv3x3_im2col(pad_sc, col_sc, w_ref, z.reshape(H, W, C))
    y_ref[0] = acc
    s_ref[0] = jnp.sum(acc, axis=0, keepdims=True)
    ss_ref[0] = jnp.sum(acc * acc, axis=0, keepdims=True)


# ----------------------------------------------------------------------------
# Pass 3: bn2 (folded affine) + residual add + relu.
# ----------------------------------------------------------------------------
def _bn2_add_relu_kernel(y2_ref, res_ref, sc_ref, sh_ref, o_ref):
    o_ref[0] = jnp.maximum(
        y2_ref[0] * sc_ref[...] + sh_ref[...] + res_ref[0], 0.0)


def _fold_bn(s, ss, gamma, beta, count):
    """Cross-tile reduction of (sum, sumsq) -> folded BN affine (f32)."""
    mean = jnp.sum(s, axis=(0, 1)) / count
    var = jnp.maximum(jnp.sum(ss, axis=(0, 1)) / count - mean * mean, 0.0)
    scale = gamma.astype(jnp.float32) * jax.lax.rsqrt(var + EPS)
    shift = beta.astype(jnp.float32) - mean * scale
    return scale.reshape(1, -1), shift.reshape(1, -1)


def _basic_block_nhwc(x, w1, w2, g1, b1, g2, b2):
    """x: (N, H, W, C) float32.  Returns (N, H, W, C) float32."""
    N, H, W, Cin = x.shape
    Cout = w1.shape[0]
    assert Cin == Cout, "BasicBlock with stride=1 / no downsample requires Cin == Cout"
    M = H * W
    x = x.astype(jnp.float32)

    # (O, I, kH, kW) -> (kH, kW, I, O) -> (9*I, O); bf16 for the MXU datapath.
    w1_mat = jnp.transpose(w1, (2, 3, 1, 0)).reshape(9 * Cin, Cout).astype(jnp.bfloat16)
    w2_mat = jnp.transpose(w2, (2, 3, 1, 0)).reshape(9 * Cout, Cout).astype(jnp.bfloat16)

    cparams = pltpu.CompilerParams(
        dimension_semantics=("parallel",),        # batch tiles across TCs (2x on v7x)
        vmem_limit_bytes=32 * 1024 * 1024)        # explicit, v7x-safe budget

    stat_shape = jax.ShapeDtypeStruct((N, 1, Cout), jnp.float32)
    stat_spec = pl.BlockSpec((1, 1, Cout), lambda n: (n, 0, 0))
    row_spec = pl.BlockSpec((1, M, Cout), lambda n: (n, 0, 0))
    aff_spec = pl.BlockSpec((1, Cout), lambda n: (0, 0))

    # ---- pass 1: conv1 + partial BN1 moments -------------------------------
    y1, s1, ss1 = pl.pallas_call(
        _conv1_stats_kernel,
        out_shape=(jax.ShapeDtypeStruct((N, M, Cout), jnp.float32),
                   stat_shape, stat_shape),
        grid_spec=pltpu.PrefetchScalarGridSpec(
            num_scalar_prefetch=0, grid=(N,),
            in_specs=[pl.BlockSpec((1, H, W, Cin), lambda n: (n, 0, 0, 0)),
                      pl.BlockSpec((9 * Cin, Cout), lambda n: (0, 0))],
            out_specs=[row_spec, stat_spec, stat_spec],
            scratch_shapes=[pltpu.VMEM((H + 2, W + 2, Cin), jnp.float32),
                            pltpu.VMEM((M, 9 * Cin), jnp.bfloat16)]),
        compiler_params=cparams,
    )(x, w1_mat)

    scale1, shift1 = _fold_bn(s1, ss1, g1, b1, float(N * M))

    # ---- pass 2: bn1 + relu + conv2 + partial BN2 moments -------------------
    y2, s2, ss2 = pl.pallas_call(
        _bn_relu_conv2_stats_kernel,
        out_shape=(jax.ShapeDtypeStruct((N, M, Cout), jnp.float32),
                   stat_shape, stat_shape),
        grid_spec=pltpu.PrefetchScalarGridSpec(
            num_scalar_prefetch=0, grid=(N,),
            in_specs=[row_spec, aff_spec, aff_spec,
                      pl.BlockSpec((9 * Cout, Cout), lambda n: (0, 0))],
            out_specs=[row_spec, stat_spec, stat_spec],
            scratch_shapes=[pltpu.VMEM((H + 2, W + 2, Cout), jnp.float32),
                            pltpu.VMEM((M, 9 * Cout), jnp.bfloat16)]),
        compiler_params=cparams,
    )(y1, scale1, shift1, w2_mat)

    scale2, shift2 = _fold_bn(s2, ss2, g2, b2, float(N * M))

    # ---- pass 3: bn2 + residual add + relu ----------------------------------
    out_flat = pl.pallas_call(
        _bn2_add_relu_kernel,
        out_shape=jax.ShapeDtypeStruct((N, M, Cout), jnp.float32),
        grid_spec=pltpu.PrefetchScalarGridSpec(
            num_scalar_prefetch=0, grid=(N,),
            in_specs=[row_spec,
                      pl.BlockSpec((1, M, Cin), lambda n: (n, 0, 0)),
                      aff_spec, aff_spec],
            out_specs=row_spec),
        compiler_params=cparams,
    )(y2, x.reshape(N, M, Cin), scale2, shift2)

    return out_flat.reshape(N, H, W, Cout)


# Native (transpose-free) entry point.
basic_block_forward_nhwc = jax.jit(_basic_block_nhwc)


@jax.jit
def basic_block_forward(x_nchw, w1, w2, g1, b1, g2, b2):
    """PyTorch-layout boundary: (N, C, H, W) in / out."""
    x = jnp.transpose(x_nchw, (0, 2, 3, 1))
    out = _basic_block_nhwc(x, w1, w2, g1, b1, g2, b2)
    return jnp.transpose(out, (0, 3, 1, 2))


def reference_forward(x_nchw, w1, w2, g1, b1, g2, b2):
    """Pure-JAX f32 reference matching PyTorch BasicBlock (training-mode BN)."""
    def conv(x, w):
        return jax.lax.conv_general_dilated(
            x, w, window_strides=(1, 1), padding=((1, 1), (1, 1)),
            dimension_numbers=('NCHW', 'OIHW', 'NCHW'))

    def bn(x, g, b):
        mean = jnp.mean(x, axis=(0, 2, 3), keepdims=True)
        var = jnp.mean((x - mean) ** 2, axis=(0, 2, 3), keepdims=True)
        return ((x - mean) * jax.lax.rsqrt(var + EPS)
                * g.reshape(1, -1, 1, 1) + b.reshape(1, -1, 1, 1))

    out = jnp.maximum(bn(conv(x_nchw, w1), g1, b1), 0.0)
    out = bn(conv(out, w2), g2, b2)
    return jnp.maximum(out + x_nchw, 0.0)


if __name__ == "__main__":
    # Small shapes consistent with BasicBlock(inplanes=4, planes=4, stride=1)
    N, C, H, W = 2, 4, 16, 16

    key = jax.random.PRNGKey(0)
    kx, kw1, kw2, kg1, kb1, kg2, kb2 = jax.random.split(key, 7)

    x = jax.random.normal(kx, (N, C, H, W), jnp.float32)
    w1 = jax.random.normal(kw1, (C, C, 3, 3), jnp.float32) * 0.2
    w2 = jax.random.normal(kw2, (C, C, 3, 3), jnp.float32) * 0.2
    g1 = 1.0 + 0.1 * jax.random.normal(kg1, (C,), jnp.float32)
    b1 = 0.1 * jax.random.normal(kb1, (C,), jnp.float32)
    g2 = 1.0 + 0.1 * jax.random.normal(kg2, (C,), jnp.float32)
    b2 = 0.1 * jax.random.normal(kb2, (C,), jnp.float32)

    out = basic_block_forward(x, w1, w2, g1, b1, g2, b2)
    out = jax.block_until_ready(out)

    ref = reference_forward(x, w1, w2, g1, b1, g2, b2)
    assert out.shape == (N, C, H, W)
    assert bool(jnp.all(jnp.isfinite(out)))
    # bf16 MXU inputs (f32 accumulation) -> slightly looser tolerance than f32.
    assert jnp.allclose(out, ref, rtol=2e-2, atol=2e-2), "mismatch vs reference"

    print("KERNEL_OK")
</pallas_src>

<mosaic_0001>
module attributes {stable_mosaic.version = 11 : i64} {
  func.func @_conv1_stats_kernel(%arg0: i32, %arg1: memref<1x16x16x4xf32, #tpu.memory_space<vmem>>, %arg2: memref<36x4xbf16, #tpu.memory_space<vmem>>, %arg3: memref<1x256x4xf32, #tpu.memory_space<vmem>>, %arg4: memref<1x1x4xf32, #tpu.memory_space<vmem>>, %arg5: memref<1x1x4xf32, #tpu.memory_space<vmem>>, %arg6: memref<18x18x4xf32, #tpu.memory_space<vmem>>, %arg7: memref<256x36xbf16, #tpu.memory_space<vmem>>) attributes {dimension_semantics = [#tpu.dimension_semantics<parallel>], iteration_bounds = array<i64: 2>, scalar_prefetch = 0 : i64, scratch_operands = 2 : i64, tpu.core_type = #tpu.core_type<tc>, window_params = [{transform_indices = @transform_0, window_bounds = array<i64: 1, 16, 16, 4>}, {pipeline_mode = #tpu.pipeline_mode<synchronous>, transform_indices = @transform_1, window_bounds = array<i64: 36, 4>}, {transform_indices = @transform_2, window_bounds = array<i64: 1, 256, 4>}, {transform_indices = @transform_3, window_bounds = array<i64: 1, 1, 4>}, {transform_indices = @transform_4, window_bounds = array<i64: 1, 1, 4>}]} {
    %c0 = arith.constant 0 : index
    %c0_0 = arith.constant 0 : index
    %c0_1 = arith.constant 0 : index
    %c0_2 = arith.constant 0 : index
    %0 = vector.load %arg1[%c0, %c0_0, %c0_1, %c0_2] : memref<1x16x16x4xf32, #tpu.memory_space<vmem>>, vector<1x16x16x4xf32>
    %1 = vector.shape_cast %0 : vector<1x16x16x4xf32> to vector<16x16x4xf32>
    %cst = arith.constant 0.000000e+00 : f32
    %2 = vector.broadcast %cst : f32 to vector<1x18x4xf32>
    %c0_3 = arith.constant 0 : index
    %c0_4 = arith.constant 0 : index
    %c0_5 = arith.constant 0 : index
    %3 = vector.load %arg6[%c0_3, %c0_4, %c0_5] : memref<18x18x4xf32, #tpu.memory_space<vmem>>, vector<1x18x4xf32>
    tpu.vector_store %arg6[%c0_3, %c0_4, %c0_5], %2 {strides = array<i32>} : memref<18x18x4xf32, #tpu.memory_space<vmem>>, vector<1x18x4xf32>,
    %c17 = arith.constant 17 : index
    %c0_6 = arith.constant 0 : index
    %c0_7 = arith.constant 0 : index
    %4 = vector.load %arg6[%c17, %c0_6, %c0_7] : memref<18x18x4xf32, #tpu.memory_space<vmem>>, vector<1x18x4xf32>
    tpu.vector_store %arg6[%c17, %c0_6, %c0_7], %2 {strides = array<i32>} : memref<18x18x4xf32, #tpu.memory_space<vmem>>, vector<1x18x4xf32>,
    %cst_8 = arith.constant 0.000000e+00 : f32
    %5 = vector.broadcast %cst_8 : f32 to vector<18x1x4xf32>
    %c0_9 = arith.constant 0 : index
    %c0_10 = arith.constant 0 : index
    %c0_11 = arith.constant 0 : index
    %6 = vector.load %arg6[%c0_9, %c0_10, %c0_11] : memref<18x18x4xf32, #tpu.memory_space<vmem>>, vector<18x1x4xf32>
    tpu.vector_store %arg6[%c0_9, %c0_10, %c0_11], %5 {strides = array<i32>} : memref<18x18x4xf32, #tpu.memory_space<vmem>>, vector<18x1x4xf32>,
    %c0_12 = arith.constant 0 : index
    %c17_13 = arith.constant 17 : index
    %c0_14 = arith.constant 0 : index
    %7 = vector.load %arg6[%c0_12, %c17_13, %c0_14] : memref<18x18x4xf32, #tpu.memory_space<vmem>>, vector<18x1x4xf32>
    tpu.vector_store %arg6[%c0_12, %c17_13, %c0_14], %5 {strides = array<i32>} : memref<18x18x4xf32, #tpu.memory_space<vmem>>, vector<18x1x4xf32>,
    %c1 = arith.constant 1 : index
    %c1_15 = arith.constant 1 : index
    %c0_16 = arith.constant 0 : index
    %8 = vector.load %arg6[%c1, %c1_15, %c0_16] : memref<18x18x4xf32, #tpu.memory_space<vmem>>, vector<16x16x4xf32>
    tpu.vector_store %arg6[%c1, %c1_15, %c0_16], %1 {strides = array<i32>} : memref<18x18x4xf32, #tpu.memory_space<vmem>>, vector<16x16x4xf32>,
    %c0_17 = arith.constant 0 : index
    %c0_18 = arith.constant 0 : index
    %c0_19 = arith.constant 0 : index
    %9 = vector.load %arg6[%c0_17, %c0_18, %c0_19] : memref<18x18x4xf32, #tpu.memory_space<vmem>>, vector<16x16x4xf32>
    %10 = vector.shape_cast %9 : vector<16x16x4xf32> to vector<256x4xf32>
    %11 = arith.truncf %10 : vector<256x4xf32> to vector<256x4xbf16>
    %c0_20 = arith.constant 0 : index
    %c0_21 = arith.constant 0 : index
    %12 = vector.load %arg7[%c0_20, %c0_21] : memref<256x36xbf16, #tpu.memory_space<vmem>>, vector<256x4xbf16>
    tpu.vector_store %arg7[%c0_20, %c0_21], %11 {strides = array<i32>} : memref<256x36xbf16, #tpu.memory_space<vmem>>, vector<256x4xbf16>,
    %c0_22 = arith.constant 0 : index
    %c1_23 = arith.constant 1 : index
    %c0_24 = arith.constant 0 : index
    %13 = vector.load %arg6[%c0_22, %c1_23, %c0_24] : memref<18x18x4xf32, #tpu.memory_space<vmem>>, vector<16x16x4xf32>
    %14 = vector.shape_cast %13 : vector<16x16x4xf32> to vector<256x4xf32>
    %15 = arith.truncf %14 : vector<256x4xf32> to vector<256x4xbf16>
    %c0_25 = arith.constant 0 : index
    %c4 = arith.constant 4 : index
    %16 = vector.load %arg7[%c0_25, %c4] : memref<256x36xbf16, #tpu.memory_space<vmem>>, vector<256x4xbf16>
    tpu.vector_store %arg7[%c0_25, %c4], %15 {strides = array<i32>} : memref<256x36xbf16, #tpu.memory_space<vmem>>, vector<256x4xbf16>,
    %c0_26 = arith.constant 0 : index
    %c2 = arith.constant 2 : index
    %c0_27 = arith.constant 0 : index
    %17 = vector.load %arg6[%c0_26, %c2, %c0_27] : memref<18x18x4xf32, #tpu.memory_space<vmem>>, vector<16x16x4xf32>
    %18 = vector.shape_cast %17 : vector<16x16x4xf32> to vector<256x4xf32>
    %19 = arith.truncf %18 : vector<256x4xf32> to vector<256x4xbf16>
    %c0_28 = arith.constant 0 : index
    %c8 = arith.constant 8 : index
    %20 = vector.load %arg7[%c0_28, %c8] : memref<256x36xbf16, #tpu.memory_space<vmem>>, vector<256x4xbf16>
    tpu.vector_store %arg7[%c0_28, %c8], %19 {strides = array<i32>} : memref<256x36xbf16, #tpu.memory_space<vmem>>, vector<256x4xbf16>,
    %c1_29 = arith.constant 1 : index
    %c0_30 = arith.constant 0 : index
    %c0_31 = arith.constant 0 : index
    %21 = vector.load %arg6[%c1_29, %c0_30, %c0_31] : memref<18x18x4xf32, #tpu.memory_space<vmem>>, vector<16x16x4xf32>
    %22 = vector.shape_cast %21 : vector<16x16x4xf32> to vector<256x4xf32>
    %23 = arith.truncf %22 : vector<256x4xf32> to vector<256x4xbf16>
    %c0_32 = arith.constant 0 : index
    %c12 = arith.constant 12 : index
    %24 = vector.load %arg7[%c0_32, %c12] : memref<256x36xbf16, #tpu.memory_space<vmem>>, vector<256x4xbf16>
    tpu.vector_store %arg7[%c0_32, %c12], %23 {strides = array<i32>} : memref<256x36xbf16, #tpu.memory_space<vmem>>, vector<256x4xbf16>,
    %c1_33 = arith.constant 1 : index
    %c1_34 = arith.constant 1 : index
    %c0_35 = arith.constant 0 : index
    %25 = vector.load %arg6[%c1_33, %c1_34, %c0_35] : memref<18x18x4xf32, #tpu.memory_space<vmem>>, vector<16x16x4xf32>
    %26 = vector.shape_cast %25 : vector<16x16x4xf32> to vector<256x4xf32>
    %27 = arith.truncf %26 : vector<256x4xf32> to vector<256x4xbf16>
    %c0_36 = arith.constant 0 : index
    %c16 = arith.constant 16 : index
    %28 = vector.load %arg7[%c0_36, %c16] : memref<256x36xbf16, #tpu.memory_space<vmem>>, vector<256x4xbf16>
    tpu.vector_store %arg7[%c0_36, %c16], %27 {strides = array<i32>} : memref<256x36xbf16, #tpu.memory_space<vmem>>, vector<256x4xbf16>,
    %c1_37 = arith.constant 1 : index
    %c2_38 = arith.constant 2 : index
    %c0_39 = arith.constant 0 : index
    %29 = vector.load %arg6[%c1_37, %c2_38, %c0_39] : memref<18x18x4xf32, #tpu.memory_space<vmem>>, vector<16x16x4xf32>
    %30 = vector.shape_cast %29 : vector<16x16x4xf32> to vector<256x4xf32>
    %31 = arith.truncf %30 : vector<256x4xf32> to vector<256x4xbf16>
    %c0_40 = arith.constant 0 : index
    %c20 = arith.constant 20 : index
    %32 = vector.load %arg7[%c0_40, %c20] : memref<256x36xbf16, #tpu.memory_space<vmem>>, vector<256x4xbf16>
    tpu.vector_store %arg7[%c0_40, %c20], %31 {strides = array<i32>} : memref<256x36xbf16, #tpu.memory_space<vmem>>, vector<256x4xbf16>,
    %c2_41 = arith.constant 2 : index
    %c0_42 = arith.constant 0 : index
    %c0_43 = arith.constant 0 : index
    %33 = vector.load %arg6[%c2_41, %c0_42, %c0_43] : memref<18x18x4xf32, #tpu.memory_space<vmem>>, vector<16x16x4xf32>
    %34 = vector.shape_cast %33 : vector<16x16x4xf32> to vector<256x4xf32>
    %35 = arith.truncf %34 : vector<256x4xf32> to vector<256x4xbf16>
    %c0_44 = arith.constant 0 : index
    %c24 = arith.constant 24 : index
    %36 = vector.load %arg7[%c0_44, %c24] : memref<256x36xbf16, #tpu.memory_space<vmem>>, vector<256x4xbf16>
    tpu.vector_store %arg7[%c0_44, %c24], %35 {strides = array<i32>} : memref<256x36xbf16, #tpu.memory_space<vmem>>, vector<256x4xbf16>,
    %c2_45 = arith.constant 2 : index
    %c1_46 = arith.constant 1 : index
    %c0_47 = arith.constant 0 : index
    %37 = vector.load %arg6[%c2_45, %c1_46, %c0_47] : memref<18x18x4xf32, #tpu.memory_space<vmem>>, vector<16x16x4xf32>
    %38 = vector.shape_cast %37 : vector<16x16x4xf32> to vector<256x4xf32>
    %39 = arith.truncf %38 : vector<256x4xf32> to vector<256x4xbf16>
    %c0_48 = arith.constant 0 : index
    %c28 = arith.constant 28 : index
    %40 = vector.load %arg7[%c0_48, %c28] : memref<256x36xbf16, #tpu.memory_space<vmem>>, vector<256x4xbf16>
    tpu.vector_store %arg7[%c0_48, %c28], %39 {strides = array<i32>} : memref<256x36xbf16, #tpu.memory_space<vmem>>, vector<256x4xbf16>,
    %c2_49 = arith.constant 2 : index
    %c2_50 = arith.constant 2 : index
    %c0_51 = arith.constant 0 : index
    %41 = vector.load %arg6[%c2_49, %c2_50, %c0_51] : memref<18x18x4xf32, #tpu.memory_space<vmem>>, vector<16x16x4xf32>
    %42 = vector.shape_cast %41 : vector<16x16x4xf32> to vector<256x4xf32>
    %43 = arith.truncf %42 : vector<256x4xf32> to vector<256x4xbf16>
    %c0_52 = arith.constant 0 : index
    %c32 = arith.constant 32 : index
    %44 = vector.load %arg7[%c0_52, %c32] : memref<256x36xbf16, #tpu.memory_space<vmem>>, vector<256x4xbf16>
    tpu.vector_store %arg7[%c0_52, %c32], %43 {strides = array<i32>} : memref<256x36xbf16, #tpu.memory_space<vmem>>, vector<256x4xbf16>,
    %c0_53 = arith.constant 0 : index
    %c0_54 = arith.constant 0 : index
    %45 = vector.load %arg7[%c0_53, %c0_54] : memref<256x36xbf16, #tpu.memory_space<vmem>>, vector<256x36xbf16>
    %c0_55 = arith.constant 0 : index
    %c0_56 = arith.constant 0 : index
    %46 = vector.load %arg2[%c0_55, %c0_56] : memref<36x4xbf16, #tpu.memory_space<vmem>>, vector<36x4xbf16>
    %cst_57 = arith.constant dense<0.000000e+00> : vector<256x4xf32>
    %47 = tpu.matmul %45, %46, %cst_57 {dimension_numbers = #tpu.dot_dimension_numbers<[1], [0], [0], [1], [0, 0, 1, 1], [], []>} : vector<256x36xbf16>, vector<36x4xbf16>, vector<256x4xf32> -> vector<256x4xf32>
    %c0_58 = arith.constant 0 : index
    %c0_59 = arith.constant 0 : index
    %c0_60 = arith.constant 0 : index
    %48 = vector.load %arg3[%c0_58, %c0_59, %c0_60] : memref<1x256x4xf32, #tpu.memory_space<vmem>>, vector<1x256x4xf32>
    %49 = vector.shape_cast %48 : vector<1x256x4xf32> to vector<256x4xf32>
    %50 = vector.shape_cast %47 : vector<256x4xf32> to vector<1x256x4xf32>
    tpu.vector_store %arg3[%c0_58, %c0_59, %c0_60], %50 {strides = array<i32>} : memref<1x256x4xf32, #tpu.memory_space<vmem>>, vector<1x256x4xf32>,
    %cst_61 = arith.constant dense<0.000000e+00> : vector<4xf32>
    %51 = vector.multi_reduction <add>, %47, %cst_61 [0] : vector<256x4xf32> to vector<4xf32>
    %52 = vector.shape_cast %51 : vector<4xf32> to vector<1x4xf32>
    %c0_62 = arith.constant 0 : index
    %c0_63 = arith.constant 0 : index
    %c0_64 = arith.constant 0 : index
    %53 = vector.load %arg4[%c0_62, %c0_63, %c0_64] : memref<1x1x4xf32, #tpu.memory_space<vmem>>, vector<1x1x4xf32>
    %54 = vector.shape_cast %53 : vector<1x1x4xf32> to vector<1x4xf32>
    %55 = vector.shape_cast %52 : vector<1x4xf32> to vector<1x1x4xf32>
    tpu.vector_store %arg4[%c0_62, %c0_63, %c0_64], %55 {strides = array<i32>} : memref<1x1x4xf32, #tpu.memory_space<vmem>>, vector<1x1x4xf32>,
    %56 = arith.mulf %47, %47 : vector<256x4xf32>
    %cst_65 = arith.constant dense<0.000000e+00> : vector<4xf32>
    %57 = vector.multi_reduction <add>, %56, %cst_65 [0] : vector<256x4xf32> to vector<4xf32>
    %58 = vector.shape_cast %57 : vector<4xf32> to vector<1x4xf32>
    %c0_66 = arith.constant 0 : index
    %c0_67 = arith.constant 0 : index
    %c0_68 = arith.constant 0 : index
    %59 = vector.load %arg5[%c0_66, %c0_67, %c0_68] : memref<1x1x4xf32, #tpu.memory_space<vmem>>, vector<1x1x4xf32>
    %60 = vector.shape_cast %59 : vector<1x1x4xf32> to vector<1x4xf32>
    %61 = vector.shape_cast %58 : vector<1x4xf32> to vector<1x1x4xf32>
    tpu.vector_store %arg5[%c0_66, %c0_67, %c0_68], %61 {strides = array<i32>} : memref<1x1x4xf32, #tpu.memory_space<vmem>>, vector<1x1x4xf32>,
    return
  }
  func.func @transform_0(%arg0: i32) -> (i32, i32, i32, i32) {
    %c0_i32 = arith.constant 0 : i32
    %c0_i32_0 = arith.constant 0 : i32
    %c0_i32_1 = arith.constant 0 : i32
    %c0_i32_2 = arith.constant 0 : i32
    return %arg0, %c0_i32, %c0_i32_0, %c0_i32_1 : i32, i32, i32, i32
  }
  func.func @transform_1(%arg0: i32) -> (i32, i32) {
    %c0_i32 = arith.constant 0 : i32
    %c0_i32_0 = arith.constant 0 : i32
    %c0_i32_1 = arith.constant 0 : i32
    return %c0_i32, %c0_i32_0 : i32, i32
  }
  func.func @transform_2(%arg0: i32) -> (i32, i32, i32) {
    %c0_i32 = arith.constant 0 : i32
    %c0_i32_0 = arith.constant 0 : i32
    %c0_i32_1 = arith.constant 0 : i32
    return %arg0, %c0_i32, %c0_i32_0 : i32, i32, i32
  }
  func.func @transform_3(%arg0: i32) -> (i32, i32, i32) {
    %c0_i32 = arith.constant 0 : i32
    %c0_i32_0 = arith.constant 0 : i32
    %c0_i32_1 = arith.constant 0 : i32
    return %arg0, %c0_i32, %c0_i32_0 : i32, i32, i32
  }
  func.func @transform_4(%arg0: i32) -> (i32, i32, i32) {
    %c0_i32 = arith.constant 0 : i32
    %c0_i32_0 = arith.constant 0 : i32
    %c0_i32_1 = arith.constant 0 : i32
    return %arg0, %c0_i32, %c0_i32_0 : i32, i32, i32
  }
}

module attributes {stable_mosaic.version = 11 : i64} {
  func.func @_bn_relu_conv2_stats_kernel(%arg0: i32, %arg1: memref<1x256x4xf32, #tpu.memory_space<vmem>>, %arg2: memref<1x4xf32, #tpu.memory_space<vmem>>, %arg3: memref<1x4xf32, #tpu.memory_space<vmem>>, %arg4: memref<36x4xbf16, #tpu.memory_space<vmem>>, %arg5: memref<1x256x4xf32, #tpu.memory_space<vmem>>, %arg6: memref<1x1x4xf32, #tpu.memory_space<vmem>>, %arg7: memref<1x1x4xf32, #tpu.memory_space<vmem>>, %arg8: memref<18x18x4xf32, #tpu.memory_space<vmem>>, %arg9: memref<256x36xbf16, #tpu.memory_space<vmem>>) attributes {dimension_semantics = [#tpu.dimension_semantics<parallel>], iteration_bounds = array<i64: 2>, scalar_prefetch = 0 : i64, scratch_operands = 2 : i64, tpu.core_type = #tpu.core_type<tc>, window_params = [{transform_indices = @transform_0, window_bounds = array<i64: 1, 256, 4>}, {pipeline_mode = #tpu.pipeline_mode<synchronous>, transform_indices = @transform_1, window_bounds = array<i64: 1, 4>}, {pipeline_mode = #tpu.pipeline_mode<synchronous>, transform_indices = @transform_2, window_bounds = array<i64: 1, 4>}, {pipeline_mode = #tpu.pipeline_mode<synchronous>, transform_indices = @transform_3, window_bounds = array<i64: 36, 4>}, {transform_indices = @transform_4, window_bounds = array<i64: 1, 256, 4>}, {transform_indices = @transform_5, window_bounds = array<i64: 1, 1, 4>}, {transform_indices = @transform_6, window_bounds = array<i64: 1, 1, 4>}]} {
    %c0 = arith.constant 0 : index
    %c0_0 = arith.constant 0 : index
    %c0_1 = arith.constant 0 : index
    %0 = vector.load %arg1[%c0, %c0_0, %c0_1] : memref<1x256x4xf32, #tpu.memory_space<vmem>>, vector<1x256x4xf32>
    %1 = vector.shape_cast %0 : vector<1x256x4xf32> to vector<256x4xf32>
    %c0_2 = arith.constant 0 : index
    %c0_3 = arith.constant 0 : index
    %2 = vector.load %arg2[%c0_2, %c0_3] : memref<1x4xf32, #tpu.memory_space<vmem>>, vector<1x4xf32>
    %3 = vector.broadcast %2 : vector<1x4xf32> to vector<256x4xf32>
    %4 = arith.mulf %1, %3 : vector<256x4xf32>
    %c0_4 = arith.constant 0 : index
    %c0_5 = arith.constant 0 : index
    %5 = vector.load %arg3[%c0_4, %c0_5] : memref<1x4xf32, #tpu.memory_space<vmem>>, vector<1x4xf32>
    %6 = vector.broadcast %5 : vector<1x4xf32> to vector<256x4xf32>
    %7 = arith.addf %4, %6 : vector<256x4xf32>
    %cst = arith.constant 0.000000e+00 : f32
    %8 = vector.broadcast %cst : f32 to vector<256x4xf32>
    %9 = arith.maximumf %7, %8 : vector<256x4xf32>
    %10 = vector.shape_cast %9 : vector<256x4xf32> to vector<16x16x4xf32>
    %cst_6 = arith.constant 0.000000e+00 : f32
    %11 = vector.broadcast %cst_6 : f32 to vector<1x18x4xf32>
    %c0_7 = arith.constant 0 : index
    %c0_8 = arith.constant 0 : index
    %c0_9 = arith.constant 0 : index
    %12 = vector.load %arg8[%c0_7, %c0_8, %c0_9] : memref<18x18x4xf32, #tpu.memory_space<vmem>>, vector<1x18x4xf32>
    tpu.vector_store %arg8[%c0_7, %c0_8, %c0_9], %11 {strides = array<i32>} : memref<18x18x4xf32, #tpu.memory_space<vmem>>, vector<1x18x4xf32>,
    %c17 = arith.constant 17 : index
    %c0_10 = arith.constant 0 : index
    %c0_11 = arith.constant 0 : index
    %13 = vector.load %arg8[%c17, %c0_10, %c0_11] : memref<18x18x4xf32, #tpu.memory_space<vmem>>, vector<1x18x4xf32>
    tpu.vector_store %arg8[%c17, %c0_10, %c0_11], %11 {strides = array<i32>} : memref<18x18x4xf32, #tpu.memory_space<vmem>>, vector<1x18x4xf32>,
    %cst_12 = arith.constant 0.000000e+00 : f32
    %14 = vector.broadcast %cst_12 : f32 to vector<18x1x4xf32>
    %c0_13 = arith.constant 0 : index
    %c0_14 = arith.constant 0 : index
    %c0_15 = arith.constant 0 : index
    %15 = vector.load %arg8[%c0_13, %c0_14, %c0_15] : memref<18x18x4xf32, #tpu.memory_space<vmem>>, vector<18x1x4xf32>
    tpu.vector_store %arg8[%c0_13, %c0_14, %c0_15], %14 {strides = array<i32>} : memref<18x18x4xf32, #tpu.memory_space<vmem>>, vector<18x1x4xf32>,
    %c0_16 = arith.constant 0 : index
    %c17_17 = arith.constant 17 : index
    %c0_18 = arith.constant 0 : index
    %16 = vector.load %arg8[%c0_16, %c17_17, %c0_18] : memref<18x18x4xf32, #tpu.memory_space<vmem>>, vector<18x1x4xf32>
    tpu.vector_store %arg8[%c0_16, %c17_17, %c0_18], %14 {strides = array<i32>} : memref<18x18x4xf32, #tpu.memory_space<vmem>>, vector<18x1x4xf32>,
    %c1 = arith.constant 1 : index
    %c1_19 = arith.constant 1 : index
    %c0_20 = arith.constant 0 : index
    %17 = vector.load %arg8[%c1, %c1_19, %c0_20] : memref<18x18x4xf32, #tpu.memory_space<vmem>>, vector<16x16x4xf32>
    tpu.vector_store %arg8[%c1, %c1_19, %c0_20], %10 {strides = array<i32>} : memref<18x18x4xf32, #tpu.memory_space<vmem>>, vector<16x16x4xf32>,
    %c0_21 = arith.constant 0 : index
    %c0_22 = arith.constant 0 : index
    %c0_23 = arith.constant 0 : index
    %18 = vector.load %arg8[%c0_21, %c0_22, %c0_23] : memref<18x18x4xf32, #tpu.memory_space<vmem>>, vector<16x16x4xf32>
    %19 = vector.shape_cast %18 : vector<16x16x4xf32> to vector<256x4xf32>
    %20 = arith.truncf %19 : vector<256x4xf32> to vector<256x4xbf16>
    %c0_24 = arith.constant 0 : index
    %c0_25 = arith.constant 0 : index
    %21 = vector.load %arg9[%c0_24, %c0_25] : memref<256x36xbf16, #tpu.memory_space<vmem>>, vector<256x4xbf16>
    tpu.vector_store %arg9[%c0_24, %c0_25], %20 {strides = array<i32>} : memref<256x36xbf16, #tpu.memory_space<vmem>>, vector<256x4xbf16>,
    %c0_26 = arith.constant 0 : index
    %c1_27 = arith.constant 1 : index
    %c0_28 = arith.constant 0 : index
    %22 = vector.load %arg8[%c0_26, %c1_27, %c0_28] : memref<18x18x4xf32, #tpu.memory_space<vmem>>, vector<16x16x4xf32>
    %23 = vector.shape_cast %22 : vector<16x16x4xf32> to vector<256x4xf32>
    %24 = arith.truncf %23 : vector<256x4xf32> to vector<256x4xbf16>
    %c0_29 = arith.constant 0 : index
    %c4 = arith.constant 4 : index
    %25 = vector.load %arg9[%c0_29, %c4] : memref<256x36xbf16, #tpu.memory_space<vmem>>, vector<256x4xbf16>
    tpu.vector_store %arg9[%c0_29, %c4], %24 {strides = array<i32>} : memref<256x36xbf16, #tpu.memory_space<vmem>>, vector<256x4xbf16>,
    %c0_30 = arith.constant 0 : index
    %c2 = arith.constant 2 : index
    %c0_31 = arith.constant 0 : index
    %26 = vector.load %arg8[%c0_30, %c2, %c0_31] : memref<18x18x4xf32, #tpu.memory_space<vmem>>, vector<16x16x4xf32>
    %27 = vector.shape_cast %26 : vector<16x16x4xf32> to vector<256x4xf32>
    %28 = arith.truncf %27 : vector<256x4xf32> to vector<256x4xbf16>
    %c0_32 = arith.constant 0 : index
    %c8 = arith.constant 8 : index
    %29 = vector.load %arg9[%c0_32, %c8] : memref<256x36xbf16, #tpu.memory_space<vmem>>, vector<256x4xbf16>
    tpu.vector_store %arg9[%c0_32, %c8], %28 {strides = array<i32>} : memref<256x36xbf16, #tpu.memory_space<vmem>>, vector<256x4xbf16>,
    %c1_33 = arith.constant 1 : index
    %c0_34 = arith.constant 0 : index
    %c0_35 = arith.constant 0 : index
    %30 = vector.load %arg8[%c1_33, %c0_34, %c0_35] : memref<18x18x4xf32, #tpu.memory_space<vmem>>, vector<16x16x4xf32>
    %31 = vector.shape_cast %30 : vector<16x16x4xf32> to vector<256x4xf32>
    %32 = arith.truncf %31 : vector<256x4xf32> to vector<256x4xbf16>
    %c0_36 = arith.constant 0 : index
    %c12 = arith.constant 12 : index
    %33 = vector.load %arg9[%c0_36, %c12] : memref<256x36xbf16, #tpu.memory_space<vmem>>, vector<256x4xbf16>
    tpu.vector_store %arg9[%c0_36, %c12], %32 {strides = array<i32>} : memref<256x36xbf16, #tpu.memory_space<vmem>>, vector<256x4xbf16>,
    %c1_37 = arith.constant 1 : index
    %c1_38 = arith.constant 1 : index
    %c0_39 = arith.constant 0 : index
    %34 = vector.load %arg8[%c1_37, %c1_38, %c0_39] : memref<18x18x4xf32, #tpu.memory_space<vmem>>, vector<16x16x4xf32>
    %35 = vector.shape_cast %34 : vector<16x16x4xf32> to vector<256x4xf32>
    %36 = arith.truncf %35 : vector<256x4xf32> to vector<256x4xbf16>
    %c0_40 = arith.constant 0 : index
    %c16 = arith.constant 16 : index
    %37 = vector.load %arg9[%c0_40, %c16] : memref<256x36xbf16, #tpu.memory_space<vmem>>, vector<256x4xbf16>
    tpu.vector_store %arg9[%c0_40, %c16], %36 {strides = array<i32>} : memref<256x36xbf16, #tpu.memory_space<vmem>>, vector<256x4xbf16>,
    %c1_41 = arith.constant 1 : index
    %c2_42 = arith.constant 2 : index
    %c0_43 = arith.constant 0 : index
    %38 = vector.load %arg8[%c1_41, %c2_42, %c0_43] : memref<18x18x4xf32, #tpu.memory_space<vmem>>, vector<16x16x4xf32>
    %39 = vector.shape_cast %38 : vector<16x16x4xf32> to vector<256x4xf32>
    %40 = arith.truncf %39 : vector<256x4xf32> to vector<256x4xbf16>
    %c0_44 = arith.constant 0 : index
    %c20 = arith.constant 20 : index
    %41 = vector.load %arg9[%c0_44, %c20] : memref<256x36xbf16, #tpu.memory_space<vmem>>, vector<256x4xbf16>
    tpu.vector_store %arg9[%c0_44, %c20], %40 {strides = array<i32>} : memref<256x36xbf16, #tpu.memory_space<vmem>>, vector<256x4xbf16>,
    %c2_45 = arith.constant 2 : index
    %c0_46 = arith.constant 0 : index
    %c0_47 = arith.constant 0 : index
    %42 = vector.load %arg8[%c2_45, %c0_46, %c0_47] : memref<18x18x4xf32, #tpu.memory_space<vmem>>, vector<16x16x4xf32>
    %43 = vector.shape_cast %42 : vector<16x16x4xf32> to vector<256x4xf32>
    %44 = arith.truncf %43 : vector<256x4xf32> to vector<256x4xbf16>
    %c0_48 = arith.constant 0 : index
    %c24 = arith.constant 24 : index
    %45 = vector.load %arg9[%c0_48, %c24] : memref<256x36xbf16, #tpu.memory_space<vmem>>, vector<256x4xbf16>
    tpu.vector_store %arg9[%c0_48, %c24], %44 {strides = array<i32>} : memref<256x36xbf16, #tpu.memory_space<vmem>>, vector<256x4xbf16>,
    %c2_49 = arith.constant 2 : index
    %c1_50 = arith.constant 1 : index
    %c0_51 = arith.constant 0 : index
    %46 = vector.load %arg8[%c2_49, %c1_50, %c0_51] : memref<18x18x4xf32, #tpu.memory_space<vmem>>, vector<16x16x4xf32>
    %47 = vector.shape_cast %46 : vector<16x16x4xf32> to vector<256x4xf32>
    %48 = arith.truncf %47 : vector<256x4xf32> to vector<256x4xbf16>
    %c0_52 = arith.constant 0 : index
    %c28 = arith.constant 28 : index
    %49 = vector.load %arg9[%c0_52, %c28] : memref<256x36xbf16, #tpu.memory_space<vmem>>, vector<256x4xbf16>
    tpu.vector_store %arg9[%c0_52, %c28], %48 {strides = array<i32>} : memref<256x36xbf16, #tpu.memory_space<vmem>>, vector<256x4xbf16>,
    %c2_53 = arith.constant 2 : index
    %c2_54 = arith.constant 2 : index
    %c0_55 = arith.constant 0 : index
    %50 = vector.load %arg8[%c2_53, %c2_54, %c0_55] : memref<18x18x4xf32, #tpu.memory_space<vmem>>, vector<16x16x4xf32>
    %51 = vector.shape_cast %50 : vector<16x16x4xf32> to vector<256x4xf32>
    %52 = arith.truncf %51 : vector<256x4xf32> to vector<256x4xbf16>
    %c0_56 = arith.constant 0 : index
    %c32 = arith.constant 32 : index
    %53 = vector.load %arg9[%c0_56, %c32] : memref<256x36xbf16, #tpu.memory_space<vmem>>, vector<256x4xbf16>
    tpu.vector_store %arg9[%c0_56, %c32], %52 {strides = array<i32>} : memref<256x36xbf16, #tpu.memory_space<vmem>>, vector<256x4xbf16>,
    %c0_57 = arith.constant 0 : index
    %c0_58 = arith.constant 0 : index
    %54 = vector.load %arg9[%c0_57, %c0_58] : memref<256x36xbf16, #tpu.memory_space<vmem>>, vector<256x36xbf16>
    %c0_59 = arith.constant 0 : index
    %c0_60 = arith.constant 0 : index
    %55 = vector.load %arg4[%c0_59, %c0_60] : memref<36x4xbf16, #tpu.memory_space<vmem>>, vector<36x4xbf16>
    %cst_61 = arith.constant dense<0.000000e+00> : vector<256x4xf32>
    %56 = tpu.matmul %54, %55, %cst_61 {dimension_numbers = #tpu.dot_dimension_numbers<[1], [0], [0], [1], [0, 0, 1, 1], [], []>} : vector<256x36xbf16>, vector<36x4xbf16>, vector<256x4xf32> -> vector<256x4xf32>
    %c0_62 = arith.constant 0 : index
    %c0_63 = arith.constant 0 : index
    %c0_64 = arith.constant 0 : index
    %57 = vector.load %arg5[%c0_62, %c0_63, %c0_64] : memref<1x256x4xf32, #tpu.memory_space<vmem>>, vector<1x256x4xf32>
    %58 = vector.shape_cast %57 : vector<1x256x4xf32> to vector<256x4xf32>
    %59 = vector.shape_cast %56 : vector<256x4xf32> to vector<1x256x4xf32>
    tpu.vector_store %arg5[%c0_62, %c0_63, %c0_64], %59 {strides = array<i32>} : memref<1x256x4xf32, #tpu.memory_space<vmem>>, vector<1x256x4xf32>,
    %cst_65 = arith.constant dense<0.000000e+00> : vector<4xf32>
    %60 = vector.multi_reduction <add>, %56, %cst_65 [0] : vector<256x4xf32> to vector<4xf32>
    %61 = vector.shape_cast %60 : vector<4xf32> to vector<1x4xf32>
    %c0_66 = arith.constant 0 : index
    %c0_67 = arith.constant 0 : index
    %c0_68 = arith.constant 0 : index
    %62 = vector.load %arg6[%c0_66, %c0_67, %c0_68] : memref<1x1x4xf32, #tpu.memory_space<vmem>>, vector<1x1x4xf32>
    %63 = vector.shape_cast %62 : vector<1x1x4xf32> to vector<1x4xf32>
    %64 = vector.shape_cast %61 : vector<1x4xf32> to vector<1x1x4xf32>
    tpu.vector_store %arg6[%c0_66, %c0_67, %c0_68], %64 {strides = array<i32>} : memref<1x1x4xf32, #tpu.memory_space<vmem>>, vector<1x1x4xf32>,
    %65 = arith.mulf %56, %56 : vector<256x4xf32>
    %cst_69 = arith.constant dense<0.000000e+00> : vector<4xf32>
    %66 = vector.multi_reduction <add>, %65, %cst_69 [0] : vector<256x4xf32> to vector<4xf32>
    %67 = vector.shape_cast %66 : vector<4xf32> to vector<1x4xf32>
    %c0_70 = arith.constant 0 : index
    %c0_71 = arith.constant 0 : index
    %c0_72 = arith.constant 0 : index
    %68 = vector.load %arg7[%c0_70, %c0_71, %c0_72] : memref<1x1x4xf32, #tpu.memory_space<vmem>>, vector<1x1x4xf32>
    %69 = vector.shape_cast %68 : vector<1x1x4xf32> to vector<1x4xf32>
    %70 = vector.shape_cast %67 : vector<1x4xf32> to vector<1x1x4xf32>
    tpu.vector_store %arg7[%c0_70, %c0_71, %c0_72], %70 {strides = array<i32>} : memref<1x1x4xf32, #tpu.memory_space<vmem>>, vector<1x1x4xf32>,
    return
  }
  func.func @transform_0(%arg0: i32) -> (i32, i32, i32) {
    %c0_i32 = arith.constant 0 : i32
    %c0_i32_0 = arith.constant 0 : i32
    %c0_i32_1 = arith.constant 0 : i32
    return %arg0, %c0_i32, %c0_i32_0 : i32, i32, i32
  }
  func.func @transform_1(%arg0: i32) -> (i32, i32) {
    %c0_i32 = arith.constant 0 : i32
    %c0_i32_0 = arith.constant 0 : i32
    %c0_i32_1 = arith.constant 0 : i32
    return %c0_i32, %c0_i32_0 : i32, i32
  }
  func.func @transform_2(%arg0: i32) -> (i32, i32) {
    %c0_i32 = arith.constant 0 : i32
    %c0_i32_0 = arith.constant 0 : i32
    %c0_i32_1 = arith.constant 0 : i32
    return %c0_i32, %c0_i32_0 : i32, i32
  }
  func.func @transform_3(%arg0: i32) -> (i32, i32) {
    %c0_i32 = arith.constant 0 : i32
    %c0_i32_0 = arith.constant 0 : i32
    %c0_i32_1 = arith.constant 0 : i32
    return %c0_i32, %c0_i32_0 : i32, i32
  }
  func.func @transform_4(%arg0: i32) -> (i32, i32, i32) {
    %c0_i32 = arith.constant 0 : i32
    %c0_i32_0 = arith.constant 0 : i32
    %c0_i32_1 = arith.constant 0 : i32
    return %arg0, %c0_i32, %c0_i32_0 : i32, i32, i32
  }
  func.func @transform_5(%arg0: i32) -> (i32, i32, i32) {
    %c0_i32 = arith.constant 0 : i32
    %c0_i32_0 = arith.constant 0 : i32
    %c0_i32_1 = arith.constant 0 : i32
    return %arg0, %c0_i32, %c0_i32_0 : i32, i32, i32
  }
  func.func @transform_6(%arg0: i32) -> (i32, i32, i32) {
    %c0_i32 = arith.constant 0 : i32
    %c0_i32_0 = arith.constant 0 : i32
    %c0_i32_1 = arith.constant 0 : i32
    return %arg0, %c0_i32, %c0_i32_0 : i32, i32, i32
  }
}

module attributes {stable_mosaic.version = 11 : i64} {
  func.func @_bn2_add_relu_kernel(%arg0: i32, %arg1: memref<1x256x4xf32, #tpu.memory_space<vmem>>, %arg2: memref<1x256x4xf32, #tpu.memory_space<vmem>>, %arg3: memref<1x4xf32, #tpu.memory_space<vmem>>, %arg4: memref<1x4xf32, #tpu.memory_space<vmem>>, %arg5: memref<1x256x4xf32, #tpu.memory_space<vmem>>) attributes {dimension_semantics = [#tpu.dimension_semantics<parallel>], iteration_bounds = array<i64: 2>, scalar_prefetch = 0 : i64, scratch_operands = 0 : i64, tpu.core_type = #tpu.core_type<tc>, window_params = [{transform_indices = @transform_0, window_bounds = array<i64: 1, 256, 4>}, {transform_indices = @transform_1, window_bounds = array<i64: 1, 256, 4>}, {pipeline_mode = #tpu.pipeline_mode<synchronous>, transform_indices = @transform_2, window_bounds = array<i64: 1, 4>}, {pipeline_mode = #tpu.pipeline_mode<synchronous>, transform_indices = @transform_3, window_bounds = array<i64: 1, 4>}, {transform_indices = @transform_4, window_bounds = array<i64: 1, 256, 4>}]} {
    %c0 = arith.constant 0 : index
    %c0_0 = arith.constant 0 : index
    %c0_1 = arith.constant 0 : index
    %0 = vector.load %arg1[%c0, %c0_0, %c0_1] : memref<1x256x4xf32, #tpu.memory_space<vmem>>, vector<1x256x4xf32>
    %1 = vector.shape_cast %0 : vector<1x256x4xf32> to vector<256x4xf32>
    %c0_2 = arith.constant 0 : index
    %c0_3 = arith.constant 0 : index
    %2 = vector.load %arg3[%c0_2, %c0_3] : memref<1x4xf32, #tpu.memory_space<vmem>>, vector<1x4xf32>
    %3 = vector.broadcast %2 : vector<1x4xf32> to vector<256x4xf32>
    %4 = arith.mulf %1, %3 : vector<256x4xf32>
    %c0_4 = arith.constant 0 : index
    %c0_5 = arith.constant 0 : index
    %5 = vector.load %arg4[%c0_4, %c0_5] : memref<1x4xf32, #tpu.memory_space<vmem>>, vector<1x4xf32>
    %6 = vector.broadcast %5 : vector<1x4xf32> to vector<256x4xf32>
    %7 = arith.addf %4, %6 : vector<256x4xf32>
    %c0_6 = arith.constant 0 : index
    %c0_7 = arith.constant 0 : index
    %c0_8 = arith.constant 0 : index
    %8 = vector.load %arg2[%c0_6, %c0_7, %c0_8] : memref<1x256x4xf32, #tpu.memory_space<vmem>>, vector<1x256x4xf32>
    %9 = vector.shape_cast %8 : vector<1x256x4xf32> to vector<256x4xf32>
    %10 = arith.addf %7, %9 : vector<256x4xf32>
    %cst = arith.constant 0.000000e+00 : f32
    %11 = vector.broadcast %cst : f32 to vector<256x4xf32>
    %12 = arith.maximumf %10, %11 : vector<256x4xf32>
    %c0_9 = arith.constant 0 : index
    %c0_10 = arith.constant 0 : index
    %c0_11 = arith.constant 0 : index
    %13 = vector.load %arg5[%c0_9, %c0_10, %c0_11] : memref<1x256x4xf32, #tpu.memory_space<vmem>>, vector<1x256x4xf32>
    %14 = vector.shape_cast %13 : vector<1x256x4xf32> to vector<256x4xf32>
    %15 = vector.shape_cast %12 : vector<256x4xf32> to vector<1x256x4xf32>
    tpu.vector_store %arg5[%c0_9, %c0_10, %c0_11], %15 {strides = array<i32>} : memref<1x256x4xf32, #tpu.memory_space<vmem>>, vector<1x256x4xf32>,
    return
  }
  func.func @transform_0(%arg0: i32) -> (i32, i32, i32) {
    %c0_i32 = arith.constant 0 : i32
    %c0_i32_0 = arith.constant 0 : i32
    %c0_i32_1 = arith.constant 0 : i32
    return %arg0, %c0_i32, %c0_i32_0 : i32, i32, i32
  }
  func.func @transform_1(%arg0: i32) -> (i32, i32, i32) {
    %c0_i32 = arith.constant 0 : i32
    %c0_i32_0 = arith.constant 0 : i32
    %c0_i32_1 = arith.constant 0 : i32
    return %arg0, %c0_i32, %c0_i32_0 : i32, i32, i32
  }
  func.func @transform_2(%arg0: i32) -> (i32, i32) {
    %c0_i32 = arith.constant 0 : i32
    %c0_i32_0 = arith.constant 0 : i32
    %c0_i32_1 = arith.constant 0 : i32
    return %c0_i32, %c0_i32_0 : i32, i32
  }
  func.func @transform_3(%arg0: i32) -> (i32, i32) {
    %c0_i32 = arith.constant 0 : i32
    %c0_i32_0 = arith.constant 0 : i32
    %c0_i32_1 = arith.constant 0 : i32
    return %c0_i32, %c0_i32_0 : i32, i32
  }
  func.func @transform_4(%arg0: i32) -> (i32, i32, i32) {
    %c0_i32 = arith.constant 0 : i32
    %c0_i32_0 = arith.constant 0 : i32
    %c0_i32_1 = arith.constant 0 : i32
    return %arg0, %c0_i32, %c0_i32_0 : i32, i32, i32
  }
}

</mosaic_0001>

<llo_original>
// kernel: basic_block_forward.5
$region0: #{basic_block_forward.5}
  #allocation0 [shape = 'u32[]', space=smem, size = 0x4, offset = 0x4, fixed_abs, tag = 'smem constant byte address 0x4 - core index']
  #allocation1 [shape = 'u32[144,128]{1,0:T(1,128)}', space=vmem, size = 0x12000, scoped, tag = 'internal scratch']
  %s0 = inlined_call_operand.vmem [shape: f32[2,256,4], index: 0, kind: input, shape index: {}]
  %s1 = inlined_call_operand.vmem [shape: f32[2,256,4], index: 1, kind: input, shape index: {}]
  %s2 = inlined_call_operand.vmem [shape: f32[1,4], index: 2, kind: input, shape index: {}]
  %s3 = inlined_call_operand.vmem [shape: f32[1,4], index: 3, kind: input, shape index: {}]
  %s4 = inlined_call_operand.vmem [shape: f32[2,256,4], index: 4, kind: output, shape index: {}]
  %s5 = sld [smem:[#allocation0]]
  $region49: #{basic_block_forward.5} parent=0
    _
  %s7 = ssub.s32 1, %s5
  %s8 = scalar_select 0, %s7, %s5
  loop: start=0, step=1, limit=4
  $region2: #{basic_block_forward.5} parent=0 // loop_pre_header
    _
  $region3: #{basic_block_forward.5} parent=0 // loop_header
    %s10 = sphi 0, %s14
    %p11 = scmp.ge.s32.totalorder %s10, 4
    %s20 = sphi 0, %s22
    %s23 = sphi 0, %s20
    %s24 = sphi 0, %s23
    %s40 = sphi 0, %s24
    %s46 = sphi 0, %s48
    %s49 = sphi 0, %s46
    %s50 = sphi 0, %s49
    %s66 = sphi 0, %s50
    %s70 = sphi 0, %s70
    %s72 = sphi 0, %s70
    %s73 = sphi 0, %s72
    %s87 = sphi 0, %s73
    %s91 = sphi 0, %s91
    %s93 = sphi 0, %s91
    %s94 = sphi 0, %s93
    %s108 = sphi 0, %s94
    %s114 = sphi 0, %s116
    %s117 = sphi 0, %s114
    %s118 = sphi 0, %s117
    %s134 = sphi 0, %s118
  $region4: #{basic_block_forward.5} parent=0 // loop_header_branch
    %13 = sbr.rel (%p11) target = $region8
  $region5: #{basic_block_forward.5} parent=0 // loop_body
    %s15 = ssub.s32 %s10, 1
    %s16 = ssub.s32 %s10, 2
    %s17 = sadd.s32 %s10, 1
    %s18 = ssub.s32 %s10, %s17
    %p19 = scmp.eq.s32.totalorder %s18, 0
    %s21 = sadd.s32 %s20, 1
    %s22 = scalar_select %p19, %s20, %s21
    %p25 = pneg %p19
    %p26 = scmp.eq.s32.totalorder %s10, 1
    %p27 = por %p25, %p26
    %p28 = scmp.ne.s32.totalorder %s20, %s23
    %p29 = scmp.eq.s32.totalorder %s10, 0
    %p30 = por %p28, %p29
    %p31 = scmp.ne.s32.totalorder %s20, %s23
    %p32 = scmp.eq.s32.totalorder %s15, 1
    %p33 = por %p31, %p32
    %p34 = scmp.ne.s32.totalorder %s23, %s24
    %p35 = scmp.eq.s32.totalorder %s15, 0
    %p36 = por %p34, %p35
    %p37 = scmp.ne.s32.totalorder %s23, %s24
    %p38 = scmp.eq.s32.totalorder %s16, 1
    %p39 = por %p37, %p38
    %p41 = scmp.ne.s32.totalorder %s24, %s40
    %p42 = scmp.eq.s32.totalorder %s16, 0
    %p43 = por %p41, %p42
    %s44 = ssub.s32 %s10, %s17
    %p45 = scmp.eq.s32.totalorder %s44, 0
    %s47 = sadd.s32 %s46, 1
    %s48 = scalar_select %p45, %s46, %s47
    %p51 = pneg %p45
    %p52 = scmp.eq.s32.totalorder %s10, 1
    %p53 = por %p51, %p52
    %p54 = scmp.ne.s32.totalorder %s46, %s49
    %p55 = scmp.eq.s32.totalorder %s10, 0
    %p56 = por %p54, %p55
    %p57 = scmp.ne.s32.totalorder %s46, %s49
    %p58 = scmp.eq.s32.totalorder %s15, 1
    %p59 = por %p57, %p58
    %p60 = scmp.ne.s32.totalorder %s49, %s50
    %p61 = scmp.eq.s32.totalorder %s15, 0
    %p62 = por %p60, %p61
    %p63 = scmp.ne.s32.totalorder %s49, %s50
    %p64 = scmp.eq.s32.totalorder %s16, 1
    %p65 = por %p63, %p64
    %p67 = scmp.ne.s32.totalorder %s50, %s66
    %p68 = scmp.eq.s32.totalorder %s16, 0
    %p69 = por %p67, %p68
    %s71 = sadd.s32 %s70, 1
    %p74 = scmp.eq.s32.totalorder %s10, 1
    %p75 = scmp.ne.s32.totalorder %s70, %s72
    %p76 = scmp.eq.s32.totalorder %s10, 0
    %p77 = por %p75, %p76
    %p78 = scmp.ne.s32.totalorder %s70, %s72
    %p79 = scmp.eq.s32.totalorder %s15, 1
    %p80 = por %p78, %p79
    %p81 = scmp.ne.s32.totalorder %s72, %s73
    %p82 = scmp.eq.s32.totalorder %s15, 0
    %p83 = por %p81, %p82
    %p84 = scmp.ne.s32.totalorder %s72, %s73
    %p85 = scmp.eq.s32.totalorder %s16, 1
    %p86 = por %p84, %p85
    %p88 = scmp.ne.s32.totalorder %s73, %s87
    %p89 = scmp.eq.s32.totalorder %s16, 0
    %p90 = por %p88, %p89
    %s92 = sadd.s32 %s91, 1
    %p95 = scmp.eq.s32.totalorder %s10, 1
    %p96 = scmp.ne.s32.totalorder %s91, %s93
    %p97 = scmp.eq.s32.totalorder %s10, 0
    %p98 = por %p96, %p97
    %p99 = scmp.ne.s32.totalorder %s91, %s93
    %p100 = scmp.eq.s32.totalorder %s15, 1
    %p101 = por %p99, %p100
    %p102 = scmp.ne.s32.totalorder %s93, %s94
    %p103 = scmp.eq.s32.totalorder %s15, 0
    %p104 = por %p102, %p103
    %p105 = scmp.ne.s32.totalorder %s93, %s94
    %p106 = scmp.eq.s32.totalorder %s16, 1
    %p107 = por %p105, %p106
    %p109 = scmp.ne.s32.totalorder %s94, %s108
    %p110 = scmp.eq.s32.totalorder %s16, 0
    %p111 = por %p109, %p110
    %s112 = ssub.s32 %s10, %s17
    %p113 = scmp.eq.s32.totalorder %s112, 0
    %s115 = sadd.s32 %s114, 1
    %s116 = scalar_select %p113, %s114, %s115
    %p119 = pneg %p113
    %p120 = scmp.eq.s32.totalorder %s10, 1
    %p121 = por %p119, %p120
    %p122 = scmp.ne.s32.totalorder %s114, %s117
    %p123 = scmp.eq.s32.totalorder %s10, 0
    %p124 = por %p122, %p123
    %p125 = scmp.ne.s32.totalorder %s114, %s117
    %p126 = scmp.eq.s32.totalorder %s15, 1
    %p127 = por %p125, %p126
    %p128 = scmp.ne.s32.totalorder %s117, %s118
    %p129 = scmp.eq.s32.totalorder %s15, 0
    %p130 = por %p128, %p129
    %p131 = scmp.ne.s32.totalorder %s117, %s118
    %p132 = scmp.eq.s32.totalorder %s16, 1
    %p133 = por %p131, %p132
    %p135 = scmp.ne.s32.totalorder %s118, %s134
    %p136 = scmp.eq.s32.totalorder %s16, 0
    %p137 = por %p135, %p136
    %p138 = scmp.le.s32.totalorder 1, %s10
    %p139 = scmp.lt.s32.totalorder %s10, 3
    %p140 = pnand %p138, %p139
    %p141 = pneg %p140
    // Predicated region
    $region9: #{basic_block_forward.5} parent=5 // pred_check
      _
    $region10: #{basic_block_forward.5} parent=5 // pred_check_branch
      %143 = sbr.rel (%p140) target = $region12
    $region11: #{basic_block_forward.5} parent=5 // pred_region
      %s144 = ssub.s32 %s10, 1
      // Predicated region
      $region13: #{basic_block_forward.5} parent=11 // pred_check
        %p145 = pneg %p83
      $region14: #{basic_block_forward.5} parent=11 // pred_check_branch
        %147 = sbr.rel (%p145) target = $region16
      $region15: #{basic_block_forward.5} parent=11 // pred_region
        _
      $region16: #{basic_block_forward.5} parent=11 // pred_fallthru
        _
      // Predicated region
      $region17: #{basic_block_forward.5} parent=11 // pred_check
        %p148 = pneg %p104
      $region18: #{basic_block_forward.5} parent=11 // pred_check_branch
        %150 = sbr.rel (%p148) target = $region20
      $region19: #{basic_block_forward.5} parent=11 // pred_region
        _
      $region20: #{basic_block_forward.5} parent=11 // pred_fallthru
        _
    $region12: #{basic_block_forward.5} parent=5 // pred_fallthru
      _
    %p151 = scmp.lt.s32.totalorder %s10, 2
    // Predicated region
    $region21: #{basic_block_forward.5} parent=5 // pred_check
      %p152 = pneg %p151
    $region22: #{basic_block_forward.5} parent=5 // pred_check_branch
      %154 = sbr.rel (%p152) target = $region24
    $region23: #{basic_block_forward.5} parent=5 // pred_region
      // Predicated region
      $region25: #{basic_block_forward.5} parent=23 // pred_check
        %p155 = pneg %p30
      $region26: #{basic_block_forward.5} parent=23 // pred_check_branch
        %157 = sbr.rel (%p155) target = $region28
      $region27: #{basic_block_forward.5} parent=23 // pred_region
        %p158 = scmp.lt.s32.totalorder %s10, 1
        %s159 = scalar_select %p158, %s10, 1
        %s160 = smul.addr %s159, 32
        %s161 = smul.addr %s160, 8
        %s162 = scalar_lea.vmem %s0, %s161
      $region28: #{basic_block_forward.5} parent=23 // pred_fallthru
        _
      // Predicated region
      $region29: #{basic_block_forward.5} parent=23 // pred_check
        %p163 = pneg %p56
      $region30: #{basic_block_forward.5} parent=23 // pred_check_branch
        %165 = sbr.rel (%p163) target = $region32
      $region31: #{basic_block_forward.5} parent=23 // pred_region
        %p166 = scmp.lt.s32.totalorder %s10, 1
        %s167 = scalar_select %p166, %s10, 1
        %s168 = smul.addr %s167, 32
        %s169 = smul.addr %s168, 8
        %s170 = scalar_lea.vmem %s1, %s169
      $region32: #{basic_block_forward.5} parent=23 // pred_fallthru
        _
    $region24: #{basic_block_forward.5} parent=5 // pred_fallthru
      _
    %p171 = scmp.le.s32.totalorder 1, %s10
    %p172 = scmp.lt.s32.totalorder %s10, 3
    %p173 = pnand %p171, %p172
    %p174 = pneg %p173
    // Predicated region
    $region33: #{basic_block_forward.5} parent=5 // pred_check
      _
    $region34: #{basic_block_forward.5} parent=5 // pred_check_branch
      %176 = sbr.rel (%p173) target = $region36
    $region35: #{basic_block_forward.5} parent=5 // pred_region
      %s177 = ssub.s32 %s10, 1
      %p178 = scmp.lt.s32.totalorder %s15, 1
      %s179 = scalar_select %p178, %s15, 1
      %s180 = smul.addr %s179, 32
      %s181 = smul.addr %s180, 8
      %s182 = scalar_lea.vmem %s0, %s181
      %p183 = pneg %p36
      %p184 = pneg %p33
      %p185 = scmp.lt.s32.totalorder %s15, 1
      %s186 = scalar_select %p185, %s15, 1
      %s187 = smul.addr %s186, 32
      %s188 = smul.addr %s187, 8
      %s189 = scalar_lea.vmem %s1, %s188
      %p190 = pneg %p62
      %p191 = pneg %p59
      %p192 = pneg %p83
      %p193 = pneg %p80
      %p194 = pneg %p104
      %p195 = pneg %p101
      %p196 = pneg %p130
      %p197 = pneg %p127
      %p198 = scmp.lt.s32.totalorder %s15, 1
      %s199 = scalar_select %p198, %s15, 1
      %s200 = smul.addr %s199, 32
      %s201 = smul.addr %s200, 8
      %s202 = scalar_lea.vmem %s4, %s201
      %p203 = scmp.lt.s32.totalorder %s15, 1
      %s204 = scalar_select %p203, %s15, 1
      %s205 = smul.addr %s204, 32
      %s206 = smul.addr %s205, 8
      %s207 = scalar_lea.vmem %s0, %s206
      %p208 = scmp.lt.s32.totalorder %s15, 1
      %s209 = scalar_select %p208, %s15, 1
      %s210 = smul.addr %s209, 32
      %s211 = smul.addr %s210, 8
      %s212 = scalar_lea.vmem %s1, %s211
      %p213 = scmp.lt.s32.totalorder %s15, 1
      %s214 = scalar_select %p213, %s15, 1
      %s215 = smul.addr %s214, 32
      %s216 = smul.addr %s215, 8
      %s217 = scalar_lea.vmem %s4, %s216
      %v218 = vld [vmem:[%s207] sm:$0xff]
      %v219 = vld [vmem:[%s207 + $0x8] sm:$0xff]
      %v220 = vld [vmem:[%s207 + $0x10] sm:$0xff]
      %v221 = vld [vmem:[%s207 + $0x18] sm:$0xff]
      %v222 = vld [vmem:[%s207 + $0x20] sm:$0xff]
      %v223 = vld [vmem:[%s207 + $0x28] sm:$0xff]
      %v224 = vld [vmem:[%s207 + $0x30] sm:$0xff]
      %v225 = vld [vmem:[%s207 + $0x38] sm:$0xff]
      %v226 = vld [vmem:[%s207 + $0x40] sm:$0xff]
      %v227 = vld [vmem:[%s207 + $0x48] sm:$0xff]
      %v228 = vld [vmem:[%s207 + $0x50] sm:$0xff]
      %v229 = vld [vmem:[%s207 + $0x58] sm:$0xff]
      %v230 = vld [vmem:[%s207 + $0x60] sm:$0xff]
      %v231 = vld [vmem:[%s207 + $0x68] sm:$0xff]
      %v232 = vld [vmem:[%s207 + $0x70] sm:$0xff]
      %v233 = vld [vmem:[%s207 + $0x78] sm:$0xff]
      %v234 = vld [vmem:[%s207 + $0x80] sm:$0xff]
      %v235 = vld [vmem:[%s207 + $0x88] sm:$0xff]
      %v236 = vld [vmem:[%s207 + $0x90] sm:$0xff]
      %v237 = vld [vmem:[%s207 + $0x98] sm:$0xff]
      %v238 = vld [vmem:[%s207 + $0xa0] sm:$0xff]
      %v239 = vld [vmem:[%s207 + $0xa8] sm:$0xff]
      %v240 = vld [vmem:[%s207 + $0xb0] sm:$0xff]
      %v241 = vld [vmem:[%s207 + $0xb8] sm:$0xff]
      %v242 = vld [vmem:[%s207 + $0xc0] sm:$0xff]
      %v243 = vld [vmem:[%s207 + $0xc8] sm:$0xff]
      %v244 = vld [vmem:[%s207 + $0xd0] sm:$0xff]
      %v245 = vld [vmem:[%s207 + $0xd8] sm:$0xff]
      %v246 = vld [vmem:[%s207 + $0xe0] sm:$0xff]
      %v247 = vld [vmem:[%s207 + $0xe8] sm:$0xff]
      %v248 = vld [vmem:[%s207 + $0xf0] sm:$0xff]
      %v249 = vld [vmem:[%s207 + $0xf8] sm:$0xff]
      %v250 = vld [vmem:[%s2] sm:$0x1]
      %v252 = vlaneseq
      %v253 = vshrl.u32 %v252, 7
      %v254 = vsub.s32 0, %v253
      %v255 = vrot.slane %v250, %v254
      %v257 = vmul.f32 %v218, %v255
      %v258 = vmul.f32 %v219, %v255
      %v259 = vmul.f32 %v220, %v255
      %v260 = vmul.f32 %v221, %v255
      %v261 = vmul.f32 %v222, %v255
      %v262 = vmul.f32 %v223, %v255
      %v263 = vmul.f32 %v224, %v255
      %v264 = vmul.f32 %v225, %v255
      %v265 = vmul.f32 %v226, %v255
      %v266 = vmul.f32 %v227, %v255
      %v267 = vmul.f32 %v228, %v255
      %v268 = vmul.f32 %v229, %v255
      %v269 = vmul.f32 %v230, %v255
      %v270 = vmul.f32 %v231, %v255
      %v271 = vmul.f32 %v232, %v255
      %v272 = vmul.f32 %v233, %v255
      %v273 = vmul.f32 %v234, %v255
      %v274 = vmul.f32 %v235, %v255
      %v275 = vmul.f32 %v236, %v255
      %v276 = vmul.f32 %v237, %v255
      %v277 = vmul.f32 %v238, %v255
      %v278 = vmul.f32 %v239, %v255
      %v279 = vmul.f32 %v240, %v255
      %v280 = vmul.f32 %v241, %v255
      %v281 = vmul.f32 %v242, %v255
      %v282 = vmul.f32 %v243, %v255
      %v283 = vmul.f32 %v244, %v255
      %v284 = vmul.f32 %v245, %v255
      %v285 = vmul.f32 %v246, %v255
      %v286 = vmul.f32 %v247, %v255
      %v287 = vmul.f32 %v248, %v255
      %v288 = vmul.f32 %v249, %v255
      %v289 = vld [vmem:[%s3] sm:$0x1]
      %v291 = vlaneseq
      %v292 = vshrl.u32 %v291, 7
      %v293 = vsub.s32 0, %v292
      %v294 = vrot.slane %v289, %v293
      %v296 = vadd.f32 %v257, %v294
      %v297 = vadd.f32 %v258, %v294
      %v298 = vadd.f32 %v259, %v294
      %v299 = vadd.f32 %v260, %v294
      %v300 = vadd.f32 %v261, %v294
      %v301 = vadd.f32 %v262, %v294
      %v302 = vadd.f32 %v263, %v294
      %v303 = vadd.f32 %v264, %v294
      %v304 = vadd.f32 %v265, %v294
      %v305 = vadd.f32 %v266, %v294
      %v306 = vadd.f32 %v267, %v294
      %v307 = vadd.f32 %v268, %v294
      %v308 = vadd.f32 %v269, %v294
      %v309 = vadd.f32 %v270, %v294
      %v310 = vadd.f32 %v271, %v294
      %v311 = vadd.f32 %v272, %v294
      %v312 = vadd.f32 %v273, %v294
      %v313 = vadd.f32 %v274, %v294
      %v314 = vadd.f32 %v275, %v294
      %v315 = vadd.f32 %v276, %v294
      %v316 = vadd.f32 %v277, %v294
      %v317 = vadd.f32 %v278, %v294
      %v318 = vadd.f32 %v279, %v294
      %v319 = vadd.f32 %v280, %v294
      %v320 = vadd.f32 %v281, %v294
      %v321 = vadd.f32 %v282, %v294
      %v322 = vadd.f32 %v283, %v294
      %v323 = vadd.f32 %v284, %v294
      %v324 = vadd.f32 %v285, %v294
      %v325 = vadd.f32 %v286, %v294
      %v326 = vadd.f32 %v287, %v294
      %v327 = vadd.f32 %v288, %v294
      %v328 = vld [vmem:[%s212] sm:$0xff]
      %v329 = vld [vmem:[%s212 + $0x8] sm:$0xff]
      %v330 = vld [vmem:[%s212 + $0x10] sm:$0xff]
      %v331 = vld [vmem:[%s212 + $0x18] sm:$0xff]
      %v332 = vld [vmem:[%s212 + $0x20] sm:$0xff]
      %v333 = vld [vmem:[%s212 + $0x28] sm:$0xff]
      %v334 = vld [vmem:[%s212 + $0x30] sm:$0xff]
      %v335 = vld [vmem:[%s212 + $0x38] sm:$0xff]
      %v336 = vld [vmem:[%s212 + $0x40] sm:$0xff]
      %v337 = vld [vmem:[%s212 + $0x48] sm:$0xff]
      %v338 = vld [vmem:[%s212 + $0x50] sm:$0xff]
      %v339 = vld [vmem:[%s212 + $0x58] sm:$0xff]
      %v340 = vld [vmem:[%s212 + $0x60] sm:$0xff]
      %v341 = vld [vmem:[%s212 + $0x68] sm:$0xff]
      %v342 = vld [vmem:[%s212 + $0x70] sm:$0xff]
      %v343 = vld [vmem:[%s212 + $0x78] sm:$0xff]
      %v344 = vld [vmem:[%s212 + $0x80] sm:$0xff]
      %v345 = vld [vmem:[%s212 + $0x88] sm:$0xff]
      %v346 = vld [vmem:[%s212 + $0x90] sm:$0xff]
      %v347 = vld [vmem:[%s212 + $0x98] sm:$0xff]
      %v348 = vld [vmem:[%s212 + $0xa0] sm:$0xff]
      %v349 = vld [vmem:[%s212 + $0xa8] sm:$0xff]
      %v350 = vld [vmem:[%s212 + $0xb0] sm:$0xff]
      %v351 = vld [vmem:[%s212 + $0xb8] sm:$0xff]
      %v352 = vld [vmem:[%s212 + $0xc0] sm:$0xff]
      %v353 = vld [vmem:[%s212 + $0xc8] sm:$0xff]
      %v354 = vld [vmem:[%s212 + $0xd0] sm:$0xff]
      %v355 = vld [vmem:[%s212 + $0xd8] sm:$0xff]
      %v356 = vld [vmem:[%s212 + $0xe0] sm:$0xff]
      %v357 = vld [vmem:[%s212 + $0xe8] sm:$0xff]
      %v358 = vld [vmem:[%s212 + $0xf0] sm:$0xff]
      %v359 = vld [vmem:[%s212 + $0xf8] sm:$0xff]
      %v360 = vadd.f32 %v296, %v328
      %v361 = vadd.f32 %v297, %v329
      %v362 = vadd.f32 %v298, %v330
      %v363 = vadd.f32 %v299, %v331
      %v364 = vadd.f32 %v300, %v332
      %v365 = vadd.f32 %v301, %v333
      %v366 = vadd.f32 %v302, %v334
      %v367 = vadd.f32 %v303, %v335
      %v368 = vadd.f32 %v304, %v336
      %v369 = vadd.f32 %v305, %v337
      %v370 = vadd.f32 %v306, %v338
      %v371 = vadd.f32 %v307, %v339
      %v372 = vadd.f32 %v308, %v340
      %v373 = vadd.f32 %v309, %v341
      %v374 = vadd.f32 %v310, %v342
      %v375 = vadd.f32 %v311, %v343
      %v376 = vadd.f32 %v312, %v344
      %v377 = vadd.f32 %v313, %v345
      %v378 = vadd.f32 %v314, %v346
      %v379 = vadd.f32 %v315, %v347
      %v380 = vadd.f32 %v316, %v348
      %v381 = vadd.f32 %v317, %v349
      %v382 = vadd.f32 %v318, %v350
      %v383 = vadd.f32 %v319, %v351
      %v384 = vadd.f32 %v320, %v352
      %v385 = vadd.f32 %v321, %v353
      %v386 = vadd.f32 %v322, %v354
      %v387 = vadd.f32 %v323, %v355
      %v388 = vadd.f32 %v324, %v356
      %v389 = vadd.f32 %v325, %v357
      %v390 = vadd.f32 %v326, %v358
      %v391 = vadd.f32 %v327, %v359
      %v392 = vmax.f32 %v360, 0.0
      %v393 = vmax.f32 %v361, 0.0
      %v394 = vmax.f32 %v362, 0.0
      %v395 = vmax.f32 %v363, 0.0
      %v396 = vmax.f32 %v364, 0.0
      %v397 = vmax.f32 %v365, 0.0
      %v398 = vmax.f32 %v366, 0.0
      %v399 = vmax.f32 %v367, 0.0
      %v400 = vmax.f32 %v368, 0.0
      %v401 = vmax.f32 %v369, 0.0
      %v402 = vmax.f32 %v370, 0.0
      %v403 = vmax.f32 %v371, 0.0
      %v404 = vmax.f32 %v372, 0.0
      %v405 = vmax.f32 %v373, 0.0
      %v406 = vmax.f32 %v374, 0.0
      %v407 = vmax.f32 %v375, 0.0
      %v408 = vmax.f32 %v376, 0.0
      %v409 = vmax.f32 %v377, 0.0
      %v410 = vmax.f32 %v378, 0.0
      %v411 = vmax.f32 %v379, 0.0
      %v412 = vmax.f32 %v380, 0.0
      %v413 = vmax.f32 %v381, 0.0
      %v414 = vmax.f32 %v382, 0.0
      %v415 = vmax.f32 %v383, 0.0
      %v416 = vmax.f32 %v384, 0.0
      %v417 = vmax.f32 %v385, 0.0
      %v418 = vmax.f32 %v386, 0.0
      %v419 = vmax.f32 %v387, 0.0
      %v420 = vmax.f32 %v388, 0.0
      %v421 = vmax.f32 %v389, 0.0
      %v422 = vmax.f32 %v390, 0.0
      %v423 = vmax.f32 %v391, 0.0
      %vm424 = vcmask 31744
      %425 = vst.msk [vmem:[%s217] sm:$0xff] %vm424, %v392
      %426 = vst.msk [vmem:[%s217 + $0x8] sm:$0xff] %vm424, %v393
      %427 = vst.msk [vmem:[%s217 + $0x10] sm:$0xff] %vm424, %v394
      %428 = vst.msk [vmem:[%s217 + $0x18] sm:$0xff] %vm424, %v395
      %429 = vst.msk [vmem:[%s217 + $0x20] sm:$0xff] %vm424, %v396
      %430 = vst.msk [vmem:[%s217 + $0x28] sm:$0xff] %vm424, %v397
      %431 = vst.msk [vmem:[%s217 + $0x30] sm:$0xff] %vm424, %v398
      %432 = vst.msk [vmem:[%s217 + $0x38] sm:$0xff] %vm424, %v399
      %433 = vst.msk [vmem:[%s217 + $0x40] sm:$0xff] %vm424, %v400
      %434 = vst.msk [vmem:[%s217 + $0x48] sm:$0xff] %vm424, %v401
      %435 = vst.msk [vmem:[%s217 + $0x50] sm:$0xff] %vm424, %v402
      %436 = vst.msk [vmem:[%s217 + $0x58] sm:$0xff] %vm424, %v403
      %437 = vst.msk [vmem:[%s217 + $0x60] sm:$0xff] %vm424, %v404
      %438 = vst.msk [vmem:[%s217 + $0x68] sm:$0xff] %vm424, %v405
      %439 = vst.msk [vmem:[%s217 + $0x70] sm:$0xff] %vm424, %v406
      %440 = vst.msk [vmem:[%s217 + $0x78] sm:$0xff] %vm424, %v407
      %441 = vst.msk [vmem:[%s217 + $0x80] sm:$0xff] %vm424, %v408
      %442 = vst.msk [vmem:[%s217 + $0x88] sm:$0xff] %vm424, %v409
      %443 = vst.msk [vmem:[%s217 + $0x90] sm:$0xff] %vm424, %v410
      %444 = vst.msk [vmem:[%s217 + $0x98] sm:$0xff] %vm424, %v411
      %445 = vst.msk [vmem:[%s217 + $0xa0] sm:$0xff] %vm424, %v412
      %446 = vst.msk [vmem:[%s217 + $0xa8] sm:$0xff] %vm424, %v413
      %447 = vst.msk [vmem:[%s217 + $0xb0] sm:$0xff] %vm424, %v414
      %448 = vst.msk [vmem:[%s217 + $0xb8] sm:$0xff] %vm424, %v415
      %449 = vst.msk [vmem:[%s217 + $0xc0] sm:$0xff] %vm424, %v416
      %450 = vst.msk [vmem:[%s217 + $0xc8] sm:$0xff] %vm424, %v417
      %451 = vst.msk [vmem:[%s217 + $0xd0] sm:$0xff] %vm424, %v418
      %452 = vst.msk [vmem:[%s217 + $0xd8] sm:$0xff] %vm424, %v419
      %453 = vst.msk [vmem:[%s217 + $0xe0] sm:$0xff] %vm424, %v420
      %454 = vst.msk [vmem:[%s217 + $0xe8] sm:$0xff] %vm424, %v421
      %455 = vst.msk [vmem:[%s217 + $0xf0] sm:$0xff] %vm424, %v422
      %456 = vst.msk [vmem:[%s217 + $0xf8] sm:$0xff] %vm424, %v423
      %p457 = scmp.lt.s32.totalorder %s15, 1
      %s458 = scalar_select %p457, %s15, 1
      %s459 = smul.addr %s458, 32
      %s460 = smul.addr %s459, 8
      %s461 = scalar_lea.vmem %s4, %s460
      // Predicated region
      $region37: #{basic_block_forward.5} parent=35 // pred_check
        %p462 = pneg %p127
      $region38: #{basic_block_forward.5} parent=35 // pred_check_branch
        %464 = sbr.rel (%p462) target = $region40
      $region39: #{basic_block_forward.5} parent=35 // pred_region
        _
      $region40: #{basic_block_forward.5} parent=35 // pred_fallthru
        _
    $region36: #{basic_block_forward.5} parent=5 // pred_fallthru
      _
    %p465 = scmp.le.s32.totalorder 2, %s10
    // Predicated region
    $region41: #{basic_block_forward.5} parent=5 // pred_check
      %p466 = pneg %p465
    $region42: #{basic_block_forward.5} parent=5 // pred_check_branch
      %468 = sbr.rel (%p466) target = $region44
    $region43: #{basic_block_forward.5} parent=5 // pred_region
      %s469 = ssub.s32 %s10, 2
      // Predicated region
      $region45: #{basic_block_forward.5} parent=43 // pred_check
        %p470 = pneg %p133
      $region46: #{basic_block_forward.5} parent=43 // pred_check_branch
        %472 = sbr.rel (%p470) target = $region48
      $region47: #{basic_block_forward.5} parent=43 // pred_region
        %p473 = scmp.lt.s32.totalorder %s16, 1
        %s474 = scalar_select %p473, %s16, 1
        %s475 = smul.addr %s474, 32
        %s476 = smul.addr %s475, 8
        %s477 = scalar_lea.vmem %s4, %s476
      $region48: #{basic_block_forward.5} parent=43 // pred_fallthru
        _
    $region44: #{basic_block_forward.5} parent=5 // pred_fallthru
      _
  $region6: #{basic_block_forward.5} parent=0 // loop_footer
    %s14 = sadd.s32 1, %s10
  $region7: #{basic_block_forward.5} parent=0 // loop_footer_branch
    %9 = sbr.rel target = $region3
  $region8: #{basic_block_forward.5} parent=0 // loop_exit
    _

// kernel: basic_block_forward.3
$region0: #{basic_block_forward.3}
  #allocation0 [shape = 'u32[]', space=smem, size = 0x4, offset = 0x4, fixed_abs, tag = 'smem constant byte address 0x4 - core index']
  #allocation1 [shape = 'u32[144,128]{1,0:T(1,128)}', space=vmem, size = 0x12000, scoped, tag = 'internal scratch']
  #allocation2 [shape = 'f32[18,18,4]{2,1,0:T(8,128)}', space=vmem, size = 0x36000, scoped, tag = 'scratch operand']
  #allocation3 [shape = 'bf16[256,36]{1,0:T(16,128)(2,1)}', space=vmem, size = 0x10000, scoped, tag = 'scratch operand']
  %s0 = inlined_call_operand.vmem [shape: f32[2,16,16,4], index: 0, kind: input, shape index: {}]
  %s1 = inlined_call_operand.vmem [shape: bf16[36,4], index: 1, kind: input, shape index: {}]
  %s2 = inlined_call_operand.vmem [shape: f32[2,256,4], index: 2, kind: output, shape index: {0}]
  %s3 = inlined_call_operand.vmem [shape: f32[2,1,4], index: 3, kind: output, shape index: {1}]
  %s4 = inlined_call_operand.vmem [shape: f32[2,1,4], index: 4, kind: output, shape index: {2}]
  %5 = xla_tuple %s2, %s3, %s4
  %s6 = sld [smem:[#allocation0]]
  $region57: #{basic_block_forward.3} parent=0
    _
  %s8 = ssub.s32 1, %s6
  %s9 = scalar_select 0, %s8, %s6
  loop: start=0, step=1, limit=4
  $region2: #{basic_block_forward.3} parent=0 // loop_pre_header
    _
  $region3: #{basic_block_forward.3} parent=0 // loop_header
    %s11 = sphi 0, %s15
    %p12 = scmp.ge.s32.totalorder %s11, 4
    %s21 = sphi 0, %s23
    %s24 = sphi 0, %s21
    %s25 = sphi 0, %s24
    %s41 = sphi 0, %s25
    %s45 = sphi 0, %s45
    %s47 = sphi 0, %s45
    %s48 = sphi 0, %s47
    %s62 = sphi 0, %s48
    %s68 = sphi 0, %s70
    %s71 = sphi 0, %s68
    %s72 = sphi 0, %s71
    %s88 = sphi 0, %s72
    %s94 = sphi 0, %s96
    %s97 = sphi 0, %s94
    %s98 = sphi 0, %s97
    %s114 = sphi 0, %s98
    %s120 = sphi 0, %s122
    %s123 = sphi 0, %s120
    %s124 = sphi 0, %s123
    %s140 = sphi 0, %s124
  $region4: #{basic_block_forward.3} parent=0 // loop_header_branch
    %14 = sbr.rel (%p12) target = $region8
  $region5: #{basic_block_forward.3} parent=0 // loop_body
    %s16 = ssub.s32 %s11, 1
    %s17 = ssub.s32 %s11, 2
    %s18 = sadd.s32 %s11, 1
    %s19 = ssub.s32 %s11, %s18
    %p20 = scmp.eq.s32.totalorder %s19, 0
    %s22 = sadd.s32 %s21, 1
    %s23 = scalar_select %p20, %s21, %s22
    %p26 = pneg %p20
    %p27 = scmp.eq.s32.totalorder %s11, 1
    %p28 = por %p26, %p27
    %p29 = scmp.ne.s32.totalorder %s21, %s24
    %p30 = scmp.eq.s32.totalorder %s11, 0
    %p31 = por %p29, %p30
    %p32 = scmp.ne.s32.totalorder %s21, %s24
    %p33 = scmp.eq.s32.totalorder %s16, 1
    %p34 = por %p32, %p33
    %p35 = scmp.ne.s32.totalorder %s24, %s25
    %p36 = scmp.eq.s32.totalorder %s16, 0
    %p37 = por %p35, %p36
    %p38 = scmp.ne.s32.totalorder %s24, %s25
    %p39 = scmp.eq.s32.totalorder %s17, 1
    %p40 = por %p38, %p39
    %p42 = scmp.ne.s32.totalorder %s25, %s41
    %p43 = scmp.eq.s32.totalorder %s17, 0
    %p44 = por %p42, %p43
    %s46 = sadd.s32 %s45, 1
    %p49 = scmp.eq.s32.totalorder %s11, 1
    %p50 = scmp.ne.s32.totalorder %s45, %s47
    %p51 = scmp.eq.s32.totalorder %s11, 0
    %p52 = por %p50, %p51
    %p53 = scmp.ne.s32.totalorder %s45, %s47
    %p54 = scmp.eq.s32.totalorder %s16, 1
    %p55 = por %p53, %p54
    %p56 = scmp.ne.s32.totalorder %s47, %s48
    %p57 = scmp.eq.s32.totalorder %s16, 0
    %p58 = por %p56, %p57
    %p59 = scmp.ne.s32.totalorder %s47, %s48
    %p60 = scmp.eq.s32.totalorder %s17, 1
    %p61 = por %p59, %p60
    %p63 = scmp.ne.s32.totalorder %s48, %s62
    %p64 = scmp.eq.s32.totalorder %s17, 0
    %p65 = por %p63, %p64
    %s66 = ssub.s32 %s11, %s18
    %p67 = scmp.eq.s32.totalorder %s66, 0
    %s69 = sadd.s32 %s68, 1
    %s70 = scalar_select %p67, %s68, %s69
    %p73 = pneg %p67
    %p74 = scmp.eq.s32.totalorder %s11, 1
    %p75 = por %p73, %p74
    %p76 = scmp.ne.s32.totalorder %s68, %s71
    %p77 = scmp.eq.s32.totalorder %s11, 0
    %p78 = por %p76, %p77
    %p79 = scmp.ne.s32.totalorder %s68, %s71
    %p80 = scmp.eq.s32.totalorder %s16, 1
    %p81 = por %p79, %p80
    %p82 = scmp.ne.s32.totalorder %s71, %s72
    %p83 = scmp.eq.s32.totalorder %s16, 0
    %p84 = por %p82, %p83
    %p85 = scmp.ne.s32.totalorder %s71, %s72
    %p86 = scmp.eq.s32.totalorder %s17, 1
    %p87 = por %p85, %p86
    %p89 = scmp.ne.s32.totalorder %s72, %s88
    %p90 = scmp.eq.s32.totalorder %s17, 0
    %p91 = por %p89, %p90
    %s92 = ssub.s32 %s11, %s18
    %p93 = scmp.eq.s32.totalorder %s92, 0
    %s95 = sadd.s32 %s94, 1
    %s96 = scalar_select %p93, %s94, %s95
    %p99 = pneg %p93
    %p100 = scmp.eq.s32.totalorder %s11, 1
    %p101 = por %p99, %p100
    %p102 = scmp.ne.s32.totalorder %s94, %s97
    %p103 = scmp.eq.s32.totalorder %s11, 0
    %p104 = por %p102, %p103
    %p105 = scmp.ne.s32.totalorder %s94, %s97
    %p106 = scmp.eq.s32.totalorder %s16, 1
    %p107 = por %p105, %p106
    %p108 = scmp.ne.s32.totalorder %s97, %s98
    %p109 = scmp.eq.s32.totalorder %s16, 0
    %p110 = por %p108, %p109
    %p111 = scmp.ne.s32.totalorder %s97, %s98
    %p112 = scmp.eq.s32.totalorder %s17, 1
    %p113 = por %p111, %p112
    %p115 = scmp.ne.s32.totalorder %s98, %s114
    %p116 = scmp.eq.s32.totalorder %s17, 0
    %p117 = por %p115, %p116
    %s118 = ssub.s32 %s11, %s18
    %p119 = scmp.eq.s32.totalorder %s118, 0
    %s121 = sadd.s32 %s120, 1
    %s122 = scalar_select %p119, %s120, %s121
    %p125 = pneg %p119
    %p126 = scmp.eq.s32.totalorder %s11, 1
    %p127 = por %p125, %p126
    %p128 = scmp.ne.s32.totalorder %s120, %s123
    %p129 = scmp.eq.s32.totalorder %s11, 0
    %p130 = por %p128, %p129
    %p131 = scmp.ne.s32.totalorder %s120, %s123
    %p132 = scmp.eq.s32.totalorder %s16, 1
    %p133 = por %p131, %p132
    %p134 = scmp.ne.s32.totalorder %s123, %s124
    %p135 = scmp.eq.s32.totalorder %s16, 0
    %p136 = por %p134, %p135
    %p137 = scmp.ne.s32.totalorder %s123, %s124
    %p138 = scmp.eq.s32.totalorder %s17, 1
    %p139 = por %p137, %p138
    %p141 = scmp.ne.s32.totalorder %s124, %s140
    %p142 = scmp.eq.s32.totalorder %s17, 0
    %p143 = por %p141, %p142
    %p144 = scmp.le.s32.totalorder 1, %s11
    %p145 = scmp.lt.s32.totalorder %s11, 3
    %p146 = pnand %p144, %p145
    %p147 = pneg %p146
    // Predicated region
    $region9: #{basic_block_forward.3} parent=5 // pred_check
      _
    $region10: #{basic_block_forward.3} parent=5 // pred_check_branch
      %149 = sbr.rel (%p146) target = $region12
    $region11: #{basic_block_forward.3} parent=5 // pred_region
      %s150 = ssub.s32 %s11, 1
      // Predicated region
      $region13: #{basic_block_forward.3} parent=11 // pred_check
        %p151 = pneg %p58
      $region14: #{basic_block_forward.3} parent=11 // pred_check_branch
        %153 = sbr.rel (%p151) target = $region16
      $region15: #{basic_block_forward.3} parent=11 // pred_region
        _
      $region16: #{basic_block_forward.3} parent=11 // pred_fallthru
        _
    $region12: #{basic_block_forward.3} parent=5 // pred_fallthru
      _
    %p154 = scmp.lt.s32.totalorder %s11, 2
    // Predicated region
    $region17: #{basic_block_forward.3} parent=5 // pred_check
      %p155 = pneg %p154
    $region18: #{basic_block_forward.3} parent=5 // pred_check_branch
      %157 = sbr.rel (%p155) target = $region20
    $region19: #{basic_block_forward.3} parent=5 // pred_region
      // Predicated region
      $region21: #{basic_block_forward.3} parent=19 // pred_check
        %p158 = pneg %p31
      $region22: #{basic_block_forward.3} parent=19 // pred_check_branch
        %160 = sbr.rel (%p158) target = $region24
      $region23: #{basic_block_forward.3} parent=19 // pred_region
        %p161 = scmp.lt.s32.totalorder %s11, 1
        %s162 = scalar_select %p161, %s11, 1
        %s163 = smul.addr %s162, 32
        %s164 = smul.addr %s163, 8
        %s165 = scalar_lea.vmem %s0, %s164
      $region24: #{basic_block_forward.3} parent=19 // pred_fallthru
        _
    $region20: #{basic_block_forward.3} parent=5 // pred_fallthru
      _
    %p166 = scmp.le.s32.totalorder 1, %s11
    %p167 = scmp.lt.s32.totalorder %s11, 3
    %p168 = pnand %p166, %p167
    %p169 = pneg %p168
    // Predicated region
    $region25: #{basic_block_forward.3} parent=5 // pred_check
      _
    $region26: #{basic_block_forward.3} parent=5 // pred_check_branch
      %171 = sbr.rel (%p168) target = $region28
    $region27: #{basic_block_forward.3} parent=5 // pred_region
      %s172 = ssub.s32 %s11, 1
      %p173 = scmp.lt.s32.totalorder %s16, 1
      %s174 = scalar_select %p173, %s16, 1
      %s175 = smul.addr %s174, 32
      %s176 = smul.addr %s175, 8
      %s177 = scalar_lea.vmem %s0, %s176
      %p178 = pneg %p37
      %p179 = pneg %p34
      %p180 = pneg %p58
      %p181 = pneg %p55
      %p182 = pneg %p84
      %p183 = pneg %p81
      %p184 = scmp.lt.s32.totalorder %s16, 1
      %s185 = scalar_select %p184, %s16, 1
      %s186 = smul.addr %s185, 32
      %s187 = smul.addr %s186, 8
      %s188 = scalar_lea.vmem %s2, %s187
      %p189 = pneg %p110
      %p190 = pneg %p107
      %p191 = scmp.lt.s32.totalorder %s16, 1
      %s192 = scalar_select %p191, %s16, 1
      %s193 = scalar_lea.vmem %s3, %s192
      %p194 = pneg %p136
      %p195 = pneg %p133
      %p196 = scmp.lt.s32.totalorder %s16, 1
      %s197 = scalar_select %p196, %s16, 1
      %s198 = scalar_lea.vmem %s4, %s197
      %p199 = scmp.lt.s32.totalorder %s16, 1
      %s200 = scalar_select %p199, %s16, 1
      %s201 = smul.addr %s200, 32
      %s202 = smul.addr %s201, 8
      %s203 = scalar_lea.vmem %s0, %s202
      %p204 = scmp.lt.s32.totalorder %s16, 1
      %s205 = scalar_select %p204, %s16, 1
      %s206 = smul.addr %s205, 32
      %s207 = smul.addr %s206, 8
      %s208 = scalar_lea.vmem %s2, %s207
      %p209 = scmp.lt.s32.totalorder %s16, 1
      %s210 = scalar_select %p209, %s16, 1
      %s211 = scalar_lea.vmem %s3, %s210
      %p212 = scmp.lt.s32.totalorder %s16, 1
      %s213 = scalar_select %p212, %s16, 1
      %s214 = scalar_lea.vmem %s4, %s213
      %v216 = vld [vmem:[%s203] sm:$0xff]
      %v217 = vld [vmem:[%s203 + $0x8] sm:$0xff]
      %v218 = vld [vmem:[%s203 + $0x10] sm:$0xff]
      %v219 = vld [vmem:[%s203 + $0x18] sm:$0xff]
      %v220 = vld [vmem:[%s203 + $0x20] sm:$0xff]
      %v221 = vld [vmem:[%s203 + $0x28] sm:$0xff]
      %v222 = vld [vmem:[%s203 + $0x30] sm:$0xff]
      %v223 = vld [vmem:[%s203 + $0x38] sm:$0xff]
      %v224 = vld [vmem:[%s203 + $0x40] sm:$0xff]
      %v225 = vld [vmem:[%s203 + $0x48] sm:$0xff]
      %v226 = vld [vmem:[%s203 + $0x50] sm:$0xff]
      %v227 = vld [vmem:[%s203 + $0x58] sm:$0xff]
      %v228 = vld [vmem:[%s203 + $0x60] sm:$0xff]
      %v229 = vld [vmem:[%s203 + $0x68] sm:$0xff]
      %v230 = vld [vmem:[%s203 + $0x70] sm:$0xff]
      %v231 = vld [vmem:[%s203 + $0x78] sm:$0xff]
      %v232 = vld [vmem:[%s203 + $0x80] sm:$0xff]
      %v233 = vld [vmem:[%s203 + $0x88] sm:$0xff]
      %v234 = vld [vmem:[%s203 + $0x90] sm:$0xff]
      %v235 = vld [vmem:[%s203 + $0x98] sm:$0xff]
      %v236 = vld [vmem:[%s203 + $0xa0] sm:$0xff]
      %v237 = vld [vmem:[%s203 + $0xa8] sm:$0xff]
      %v238 = vld [vmem:[%s203 + $0xb0] sm:$0xff]
      %v239 = vld [vmem:[%s203 + $0xb8] sm:$0xff]
      %v240 = vld [vmem:[%s203 + $0xc0] sm:$0xff]
      %v241 = vld [vmem:[%s203 + $0xc8] sm:$0xff]
      %v242 = vld [vmem:[%s203 + $0xd0] sm:$0xff]
      %v243 = vld [vmem:[%s203 + $0xd8] sm:$0xff]
      %v244 = vld [vmem:[%s203 + $0xe0] sm:$0xff]
      %v245 = vld [vmem:[%s203 + $0xe8] sm:$0xff]
      %v246 = vld [vmem:[%s203 + $0xf0] sm:$0xff]
      %v247 = vld [vmem:[%s203 + $0xf8] sm:$0xff]
      %vm248 = vcmask 31744
      %249 = vst.msk [vmem:[#allocation2] sm:$0xff] %vm248, 0.0
      %250 = vst.msk [vmem:[#allocation2 + $0x8] sm:$0xff] %vm248, 0.0
      %vm251 = vcmask 25600
      %252 = vst.msk [vmem:[#allocation2 + $0x10] sm:$0x3] %vm251, 0.0
      %s253 = scalar_lea.vmem [#allocation2], 408
      %254 = vst.msk [vmem:[%s253] sm:$0xff] %vm248, 0.0
      %255 = vst.msk [vmem:[%s253 + $0x8] sm:$0xff] %vm248, 0.0
      %256 = vst.msk [vmem:[%s253 + $0x10] sm:$0x3] %vm251, 0.0
      %vm257 = vcmask 24576
      %258 = vst.msk [vmem:[#allocation2] sm:$0x1] %vm257, 0.0
      %259 = vst.msk [vmem:[#allocation2 + $0x18] sm:$0x1] %vm257, 0.0
      %260 = vst.msk [vmem:[#allocation2 + $0x30] sm:$0x1] %vm257, 0.0
      %261 = vst.msk [vmem:[#allocation2 + $0x48] sm:$0x1] %vm257, 0.0
      %262 = vst.msk [vmem:[#allocation2 + $0x60] sm:$0x1] %vm257, 0.0
      %263 = vst.msk [vmem:[#allocation2 + $0x78] sm:$0x1] %vm257, 0.0
      %264 = vst.msk [vmem:[#allocation2 + $0x90] sm:$0x1] %vm257, 0.0
      %265 = vst.msk [vmem:[#allocation2 + $0xa8] sm:$0x1] %vm257, 0.0
      %266 = vst.msk [vmem:[#allocation2 + $0xc0] sm:$0x1] %vm257, 0.0
      %267 = vst.msk [vmem:[#allocation2 + $0xd8] sm:$0x1] %vm257, 0.0
      %268 = vst.msk [vmem:[#allocation2 + $0xf0] sm:$0x1] %vm257, 0.0
      %269 = vst.msk [vmem:[#allocation2 + $0x108] sm:$0x1] %vm257, 0.0
      %270 = vst.msk [vmem:[#allocation2 + $0x120] sm:$0x1] %vm257, 0.0
      %271 = vst.msk [vmem:[#allocation2 + $0x138] sm:$0x1] %vm257, 0.0
      %272 = vst.msk [vmem:[#allocation2 + $0x150] sm:$0x1] %vm257, 0.0
      %273 = vst.msk [vmem:[#allocation2 + $0x168] sm:$0x1] %vm257, 0.0
      %274 = vst.msk [vmem:[#allocation2 + $0x180] sm:$0x1] %vm257, 0.0
      %275 = vst.msk [vmem:[#allocation2 + $0x198] sm:$0x1] %vm257, 0.0
      %276 = vst.msk [vmem:[#allocation2 + $0x11] sm:$0x1] %vm257, 0.0
      %277 = vst.msk [vmem:[#allocation2 + $0x29] sm:$0x1] %vm257, 0.0
      %278 = vst.msk [vmem:[#allocation2 + $0x41] sm:$0x1] %vm257, 0.0
      %279 = vst.msk [vmem:[#allocation2 + $0x59] sm:$0x1] %vm257, 0.0
      %280 = vst.msk [vmem:[#allocation2 + $0x71] sm:$0x1] %vm257, 0.0
      %281 = vst.msk [vmem:[#allocation2 + $0x89] sm:$0x1] %vm257, 0.0
      %282 = vst.msk [vmem:[#allocation2 + $0xa1] sm:$0x1] %vm257, 0.0
      %283 = vst.msk [vmem:[#allocation2 + $0xb9] sm:$0x1] %vm257, 0.0
      %284 = vst.msk [vmem:[#allocation2 + $0xd1] sm:$0x1] %vm257, 0.0
      %285 = vst.msk [vmem:[#allocation2 + $0xe9] sm:$0x1] %vm257, 0.0
      %286 = vst.msk [vmem:[#allocation2 + $0x101] sm:$0x1] %vm257, 0.0
      %287 = vst.msk [vmem:[#allocation2 + $0x119] sm:$0x1] %vm257, 0.0
      %288 = vst.msk [vmem:[#allocation2 + $0x131] sm:$0x1] %vm257, 0.0
      %289 = vst.msk [vmem:[#allocation2 + $0x149] sm:$0x1] %vm257, 0.0
      %290 = vst.msk [vmem:[#allocation2 + $0x161] sm:$0x1] %vm257, 0.0
      %291 = vst.msk [vmem:[#allocation2 + $0x179] sm:$0x1] %vm257, 0.0
      %292 = vst.msk [vmem:[#allocation2 + $0x191] sm:$0x1] %vm257, 0.0
      %293 = vst.msk [vmem:[#allocation2 + $0x1a9] sm:$0x1] %vm257, 0.0
      %s294 = scalar_lea.vmem [#allocation2], 24
      %295 = vst.msk [vmem:[%s294 + $0x1] sm:$0xff] %vm248, %v216
      %296 = vst.msk [vmem:[%s294 + $0x9] sm:$0xff] %vm248, %v217
      %297 = vst.msk [vmem:[%s294 + $0x19] sm:$0xff] %vm248, %v218
      %298 = vst.msk [vmem:[%s294 + $0x21] sm:$0xff] %vm248, %v219
      %299 = vst.msk [vmem:[%s294 + $0x31] sm:$0xff] %vm248, %v220
      %300 = vst.msk [vmem:[%s294 + $0x39] sm:$0xff] %vm248, %v221
      %301 = vst.msk [vmem:[%s294 + $0x49] sm:$0xff] %vm248, %v222
      %302 = vst.msk [vmem:[%s294 + $0x51] sm:$0xff] %vm248, %v223
      %303 = vst.msk [vmem:[%s294 + $0x61] sm:$0xff] %vm248, %v224
      %304 = vst.msk [vmem:[%s294 + $0x69] sm:$0xff] %vm248, %v225
      %305 = vst.msk [vmem:[%s294 + $0x79] sm:$0xff] %vm248, %v226
      %306 = vst.msk [vmem:[%s294 + $0x81] sm:$0xff] %vm248, %v227
      %307 = vst.msk [vmem:[%s294 + $0x91] sm:$0xff] %vm248, %v228
      %308 = vst.msk [vmem:[%s294 + $0x99] sm:$0xff] %vm248, %v229
      %309 = vst.msk [vmem:[%s294 + $0xa9] sm:$0xff] %vm248, %v230
      %310 = vst.msk [vmem:[%s294 + $0xb1] sm:$0xff] %vm248, %v231
      %311 = vst.msk [vmem:[%s294 + $0xc1] sm:$0xff] %vm248, %v232
      %312 = vst.msk [vmem:[%s294 + $0xc9] sm:$0xff] %vm248, %v233
      %313 = vst.msk [vmem:[%s294 + $0xd9] sm:$0xff] %vm248, %v234
      %314 = vst.msk [vmem:[%s294 + $0xe1] sm:$0xff] %vm248, %v235
      %315 = vst.msk [vmem:[%s294 + $0xf1] sm:$0xff] %vm248, %v236
      %316 = vst.msk [vmem:[%s294 + $0xf9] sm:$0xff] %vm248, %v237
      %317 = vst.msk [vmem:[%s294 + $0x109] sm:$0xff] %vm248, %v238
      %318 = vst.msk [vmem:[%s294 + $0x111] sm:$0xff] %vm248, %v239
      %319 = vst.msk [vmem:[%s294 + $0x121] sm:$0xff] %vm248, %v240
      %320 = vst.msk [vmem:[%s294 + $0x129] sm:$0xff] %vm248, %v241
      %321 = vst.msk [vmem:[%s294 + $0x139] sm:$0xff] %vm248, %v242
      %322 = vst.msk [vmem:[%s294 + $0x141] sm:$0xff] %vm248, %v243
      %323 = vst.msk [vmem:[%s294 + $0x151] sm:$0xff] %vm248, %v244
      %324 = vst.msk [vmem:[%s294 + $0x159] sm:$0xff] %vm248, %v245
      %325 = vst.msk [vmem:[%s294 + $0x169] sm:$0xff] %vm248, %v246
      %326 = vst.msk [vmem:[%s294 + $0x171] sm:$0xff] %vm248, %v247
      %v327 = vld [vmem:[#allocation2] sm:$0xff]
      %v328 = vld [vmem:[#allocation2 + $0x8] sm:$0xff]
      %v329 = vld [vmem:[#allocation2 + $0x18] sm:$0xff]
      %v330 = vld [vmem:[#allocation2 + $0x20] sm:$0xff]
      %v331 = vld [vmem:[#allocation2 + $0x30] sm:$0xff]
      %v332 = vld [vmem:[#allocation2 + $0x38] sm:$0xff]
      %v333 = vld [vmem:[#allocation2 + $0x48] sm:$0xff]
      %v334 = vld [vmem:[#allocation2 + $0x50] sm:$0xff]
      %v335 = vld [vmem:[#allocation2 + $0x60] sm:$0xff]
      %v336 = vld [vmem:[#allocation2 + $0x68] sm:$0xff]
      %v337 = vld [vmem:[#allocation2 + $0x78] sm:$0xff]
      %v338 = vld [vmem:[#allocation2 + $0x80] sm:$0xff]
      %v339 = vld [vmem:[#allocation2 + $0x90] sm:$0xff]
      %v340 = vld [vmem:[#allocation2 + $0x98] sm:$0xff]
      %v341 = vld [vmem:[#allocation2 + $0xa8] sm:$0xff]
      %v342 = vld [vmem:[#allocation2 + $0xb0] sm:$0xff]
      %v343 = vld [vmem:[#allocation2 + $0xc0] sm:$0xff]
      %v344 = vld [vmem:[#allocation2 + $0xc8] sm:$0xff]
      %v345 = vld [vmem:[#allocation2 + $0xd8] sm:$0xff]
      %v346 = vld [vmem:[#allocation2 + $0xe0] sm:$0xff]
      %v347 = vld [vmem:[#allocation2 + $0xf0] sm:$0xff]
      %v348 = vld [vmem:[#allocation2 + $0xf8] sm:$0xff]
      %v349 = vld [vmem:[#allocation2 + $0x108] sm:$0xff]
      %v350 = vld [vmem:[#allocation2 + $0x110] sm:$0xff]
      %v351 = vld [vmem:[#allocation2 + $0x120] sm:$0xff]
      %v352 = vld [vmem:[#allocation2 + $0x128] sm:$0xff]
      %v353 = vld [vmem:[#allocation2 + $0x138] sm:$0xff]
      %v354 = vld [vmem:[#allocation2 + $0x140] sm:$0xff]
      %v355 = vld [vmem:[#allocation2 + $0x150] sm:$0xff]
      %v356 = vld [vmem:[#allocation2 + $0x158] sm:$0xff]
      %v357 = vld [vmem:[#allocation2 + $0x168] sm:$0xff]
      %v358 = vld [vmem:[#allocation2 + $0x170] sm:$0xff]
      %v359 = vpack.c.bf16 %v328, %v327
      %v360 = vpack.c.bf16 %v330, %v329
      %v361 = vpack.c.bf16 %v332, %v331
      %v362 = vpack.c.bf16 %v334, %v333
      %v363 = vpack.c.bf16 %v336, %v335
      %v364 = vpack.c.bf16 %v338, %v337
      %v365 = vpack.c.bf16 %v340, %v339
      %v366 = vpack.c.bf16 %v342, %v341
      %v367 = vpack.c.bf16 %v344, %v343
      %v368 = vpack.c.bf16 %v346, %v345
      %v369 = vpack.c.bf16 %v348, %v347
      %v370 = vpack.c.bf16 %v350, %v349
      %v371 = vpack.c.bf16 %v352, %v351
      %v372 = vpack.c.bf16 %v354, %v353
      %v373 = vpack.c.bf16 %v356, %v355
      %v374 = vpack.c.bf16 %v358, %v357
      %375 = vst.msk [vmem:[#allocation3] sm:$0xff] %vm248, %v359
      %376 = vst.msk [vmem:[#allocation3 + $0x8] sm:$0xff] %vm248, %v360
      %377 = vst.msk [vmem:[#allocation3 + $0x10] sm:$0xff] %vm248, %v361
      %378 = vst.msk [vmem:[#allocation3 + $0x18] sm:$0xff] %vm248, %v362
      %379 = vst.msk [vmem:[#allocation3 + $0x20] sm:$0xff] %vm248, %v363
      %380 = vst.msk [vmem:[#allocation3 + $0x28] sm:$0xff] %vm248, %v364
      %381 = vst.msk [vmem:[#allocation3 + $0x30] sm:$0xff] %vm248, %v365
      %382 = vst.msk [vmem:[#allocation3 + $0x38] sm:$0xff] %vm248, %v366
      %383 = vst.msk [vmem:[#allocation3 + $0x40] sm:$0xff] %vm248, %v367
      %384 = vst.msk [vmem:[#allocation3 + $0x48] sm:$0xff] %vm248, %v368
      %385 = vst.msk [vmem:[#allocation3 + $0x50] sm:$0xff] %vm248, %v369
      %386 = vst.msk [vmem:[#allocation3 + $0x58] sm:$0xff] %vm248, %v370
      %387 = vst.msk [vmem:[#allocation3 + $0x60] sm:$0xff] %vm248, %v371
      %388 = vst.msk [vmem:[#allocation3 + $0x68] sm:$0xff] %vm248, %v372
      %389 = vst.msk [vmem:[#allocation3 + $0x70] sm:$0xff] %vm248, %v373
      %390 = vst.msk [vmem:[#allocation3 + $0x78] sm:$0xff] %vm248, %v374
      %v391 = vld [vmem:[#allocation2 + $0x1] sm:$0xff]
      %v392 = vld [vmem:[#allocation2 + $0x9] sm:$0xff]
      %v393 = vld [vmem:[#allocation2 + $0x19] sm:$0xff]
      %v394 = vld [vmem:[#allocation2 + $0x21] sm:$0xff]
      %v395 = vld [vmem:[#allocation2 + $0x31] sm:$0xff]
      %v396 = vld [vmem:[#allocation2 + $0x39] sm:$0xff]
      %v397 = vld [vmem:[#allocation2 + $0x49] sm:$0xff]
      %v398 = vld [vmem:[#allocation2 + $0x51] sm:$0xff]
      %v399 = vld [vmem:[#allocation2 + $0x61] sm:$0xff]
      %v400 = vld [vmem:[#allocation2 + $0x69] sm:$0xff]
      %v401 = vld [vmem:[#allocation2 + $0x79] sm:$0xff]
      %v402 = vld [vmem:[#allocation2 + $0x81] sm:$0xff]
      %v403 = vld [vmem:[#allocation2 + $0x91] sm:$0xff]
      %v404 = vld [vmem:[#allocation2 + $0x99] sm:$0xff]
      %v405 = vld [vmem:[#allocation2 + $0xa9] sm:$0xff]
      %v406 = vld [vmem:[#allocation2 + $0xb1] sm:$0xff]
      %v407 = vld [vmem:[#allocation2 + $0xc1] sm:$0xff]
      %v408 = vld [vmem:[#allocation2 + $0xc9] sm:$0xff]
      %v409 = vld [vmem:[#allocation2 + $0xd9] sm:$0xff]
      %v410 = vld [vmem:[#allocation2 + $0xe1] sm:$0xff]
      %v411 = vld [vmem:[#allocation2 + $0xf1] sm:$0xff]
      %v412 = vld [vmem:[#allocation2 + $0xf9] sm:$0xff]
      %v413 = vld [vmem:[#allocation2 + $0x109] sm:$0xff]
      %v414 = vld [vmem:[#allocation2 + $0x111] sm:$0xff]
      %v415 = vld [vmem:[#allocation2 + $0x121] sm:$0xff]
      %v416 = vld [vmem:[#allocation2 + $0x129] sm:$0xff]
      %v417 = vld [vmem:[#allocation2 + $0x139] sm:$0xff]
      %v418 = vld [vmem:[#allocation2 + $0x141] sm:$0xff]
      %v419 = vld [vmem:[#allocation2 + $0x151] sm:$0xff]
      %v420 = vld [vmem:[#allocation2 + $0x159] sm:$0xff]
      %v421 = vld [vmem:[#allocation2 + $0x169] sm:$0xff]
      %v422 = vld [vmem:[#allocation2 + $0x171] sm:$0xff]
      %v423 = vpack.c.bf16 %v392, %v391
      %v424 = vpack.c.bf16 %v394, %v393
      %v425 = vpack.c.bf16 %v396, %v395
      %v426 = vpack.c.bf16 %v398, %v397
      %v427 = vpack.c.bf16 %v400, %v399
      %v428 = vpack.c.bf16 %v402, %v401
      %v429 = vpack.c.bf16 %v404, %v403
      %v430 = vpack.c.bf16 %v406, %v405
      %v431 = vpack.c.bf16 %v408, %v407
      %v432 = vpack.c.bf16 %v410, %v409
      %v433 = vpack.c.bf16 %v412, %v411
      %v434 = vpack.c.bf16 %v414, %v413
      %v435 = vpack.c.bf16 %v416, %v415
      %v436 = vpack.c.bf16 %v418, %v417
      %v437 = vpack.c.bf16 %v420, %v419
      %v438 = vpack.c.bf16 %v422, %v421
      %455 = vrot.lane.b32.xlu0 %v423, 4
      %v456 = vpop.permute.xlu0 %455
      %457 = vrot.lane.b32.xlu0 %v424, 4
      %v458 = vpop.permute.xlu0 %457
      %459 = vrot.lane.b32.xlu0 %v425, 4
      %v460 = vpop.permute.xlu0 %459
      %461 = vrot.lane.b32.xlu0 %v426, 4
      %v462 = vpop.permute.xlu0 %461
      %463 = vrot.lane.b32.xlu0 %v427, 4
      %v464 = vpop.permute.xlu0 %463
      %465 = vrot.lane.b32.xlu0 %v428, 4
      %v466 = vpop.permute.xlu0 %465
      %467 = vrot.lane.b32.xlu0 %v429, 4
      %v468 = vpop.permute.xlu0 %467
      %469 = vrot.lane.b32.xlu0 %v430, 4
      %v470 = vpop.permute.xlu0 %469
      %471 = vrot.lane.b32.xlu0 %v431, 4
      %v472 = vpop.permute.xlu0 %471
      %473 = vrot.lane.b32.xlu0 %v432, 4
      %v474 = vpop.permute.xlu0 %473
      %475 = vrot.lane.b32.xlu0 %v433, 4
      %v476 = vpop.permute.xlu0 %475
      %477 = vrot.lane.b32.xlu0 %v434, 4
      %v478 = vpop.permute.xlu0 %477
      %479 = vrot.lane.b32.xlu0 %v435, 4
      %v480 = vpop.permute.xlu0 %479
      %481 = vrot.lane.b32.xlu0 %v436, 4
      %v482 = vpop.permute.xlu0 %481
      %483 = vrot.lane.b32.xlu0 %v437, 4
      %v484 = vpop.permute.xlu0 %483
      %485 = vrot.lane.b32.xlu0 %v438, 4
      %v486 = vpop.permute.xlu0 %485
      %vm503 = vcmask 64544
      %504 = vst.msk [vmem:[#allocation3] sm:$0xff] %vm503, %v456
      %505 = vst.msk [vmem:[#allocation3 + $0x8] sm:$0xff] %vm503, %v458
      %506 = vst.msk [vmem:[#allocation3 + $0x10] sm:$0xff] %vm503, %v460
      %507 = vst.msk [vmem:[#allocation3 + $0x18] sm:$0xff] %vm503, %v462
      %508 = vst.msk [vmem:[#allocation3 + $0x20] sm:$0xff] %vm503, %v464
      %509 = vst.msk [vmem:[#allocation3 + $0x28] sm:$0xff] %vm503, %v466
      %510 = vst.msk [vmem:[#allocation3 + $0x30] sm:$0xff] %vm503, %v468
      %511 = vst.msk [vmem:[#allocation3 + $0x38] sm:$0xff] %vm503, %v470
      %512 = vst.msk [vmem:[#allocation3 + $0x40] sm:$0xff] %vm503, %v472
      %513 = vst.msk [vmem:[#allocation3 + $0x48] sm:$0xff] %vm503, %v474
      %514 = vst.msk [vmem:[#allocation3 + $0x50] sm:$0xff] %vm503, %v476
      %515 = vst.msk [vmem:[#allocation3 + $0x58] sm:$0xff] %vm503, %v478
      %516 = vst.msk [vmem:[#allocation3 + $0x60] sm:$0xff] %vm503, %v480
      %517 = vst.msk [vmem:[#allocation3 + $0x68] sm:$0xff] %vm503, %v482
      %518 = vst.msk [vmem:[#allocation3 + $0x70] sm:$0xff] %vm503, %v484
      %519 = vst.msk [vmem:[#allocation3 + $0x78] sm:$0xff] %vm503, %v486
      %v520 = vld [vmem:[#allocation2 + $0x2] sm:$0xff]
      %v521 = vld [vmem:[#allocation2 + $0xa] sm:$0xff]
      %v522 = vld [vmem:[#allocation2 + $0x1a] sm:$0xff]
      %v523 = vld [vmem:[#allocation2 + $0x22] sm:$0xff]
      %v524 = vld [vmem:[#allocation2 + $0x32] sm:$0xff]
      %v525 = vld [vmem:[#allocation2 + $0x3a] sm:$0xff]
      %v526 = vld [vmem:[#allocation2 + $0x4a] sm:$0xff]
      %v527 = vld [vmem:[#allocation2 + $0x52] sm:$0xff]
      %v528 = vld [vmem:[#allocation2 + $0x62] sm:$0xff]
      %v529 = vld [vmem:[#allocation2 + $0x6a] sm:$0xff]
      %v530 = vld [vmem:[#allocation2 + $0x7a] sm:$0xff]
      %v531 = vld [vmem:[#allocation2 + $0x82] sm:$0xff]
      %v532 = vld [vmem:[#allocation2 + $0x92] sm:$0xff]
      %v533 = vld [vmem:[#allocation2 + $0x9a] sm:$0xff]
      %v534 = vld [vmem:[#allocation2 + $0xaa] sm:$0xff]
      %v535 = vld [vmem:[#allocation2 + $0xb2] sm:$0xff]
      %v536 = vld [vmem:[#allocation2 + $0xc2] sm:$0xff]
      %v537 = vld [vmem:[#allocation2 + $0xca] sm:$0xff]
      %v538 = vld [vmem:[#allocation2 + $0xda] sm:$0xff]
      %v539 = vld [vmem:[#allocation2 + $0xe2] sm:$0xff]
      %v540 = vld [vmem:[#allocation2 + $0xf2] sm:$0xff]
      %v541 = vld [vmem:[#allocation2 + $0xfa] sm:$0xff]
      %v542 = vld [vmem:[#allocation2 + $0x10a] sm:$0xff]
      %v543 = vld [vmem:[#allocation2 + $0x112] sm:$0xff]
      %v544 = vld [vmem:[#allocation2 + $0x122] sm:$0xff]
      %v545 = vld [vmem:[#allocation2 + $0x12a] sm:$0xff]
      %v546 = vld [vmem:[#allocation2 + $0x13a] sm:$0xff]
      %v547 = vld [vmem:[#allocation2 + $0x142] sm:$0xff]
      %v548 = vld [vmem:[#allocation2 + $0x152] sm:$0xff]
      %v549 = vld [vmem:[#allocation2 + $0x15a] sm:$0xff]
      %v550 = vld [vmem:[#allocation2 + $0x16a] sm:$0xff]
      %v551 = vld [vmem:[#allocation2 + $0x172] sm:$0xff]
      %v552 = vpack.c.bf16 %v521, %v520
      %v553 = vpack.c.bf16 %v523, %v522
      %v554 = vpack.c.bf16 %v525, %v524
      %v555 = vpack.c.bf16 %v527, %v526
      %v556 = vpack.c.bf16 %v529, %v528
      %v557 = vpack.c.bf16 %v531, %v530
      %v558 = vpack.c.bf16 %v533, %v532
      %v559 = vpack.c.bf16 %v535, %v534
      %v560 = vpack.c.bf16 %v537, %v536
      %v561 = vpack.c.bf16 %v539, %v538
      %v562 = vpack.c.bf16 %v541, %v540
      %v563 = vpack.c.bf16 %v543, %v542
      %v564 = vpack.c.bf16 %v545, %v544
      %v565 = vpack.c.bf16 %v547, %v546
      %v566 = vpack.c.bf16 %v549, %v548
      %v567 = vpack.c.bf16 %v551, %v550
      %584 = vrot.lane.b32.xlu0 %v552, 8
      %v585 = vpop.permute.xlu0 %584
      %586 = vrot.lane.b32.xlu0 %v553, 8
      %v587 = vpop.permute.xlu0 %586
      %588 = vrot.lane.b32.xlu0 %v554, 8
      %v589 = vpop.permute.xlu0 %588
      %590 = vrot.lane.b32.xlu0 %v555, 8
      %v591 = vpop.permute.xlu0 %590
      %592 = vrot.lane.b32.xlu0 %v556, 8
      %v593 = vpop.permute.xlu0 %592
      %594 = vrot.lane.b32.xlu0 %v557, 8
      %v595 = vpop.permute.xlu0 %594
      %596 = vrot.lane.b32.xlu0 %v558, 8
      %v597 = vpop.permute.xlu0 %596
      %598 = vrot.lane.b32.xlu0 %v559, 8
      %v599 = vpop.permute.xlu0 %598
      %600 = vrot.lane.b32.xlu0 %v560, 8
      %v601 = vpop.permute.xlu0 %600
      %602 = vrot.lane.b32.xlu0 %v561, 8
      %v603 = vpop.permute.xlu0 %602
      %604 = vrot.lane.b32.xlu0 %v562, 8
      %v605 = vpop.permute.xlu0 %604
      %606 = vrot.lane.b32.xlu0 %v563, 8
      %v607 = vpop.permute.xlu0 %606
      %608 = vrot.lane.b32.xlu0 %v564, 8
      %v609 = vpop.permute.xlu0 %608
      %610 = vrot.lane.b32.xlu0 %v565, 8
      %v611 = vpop.permute.xlu0 %610
      %612 = vrot.lane.b32.xlu0 %v566, 8
      %v613 = vpop.permute.xlu0 %612
      %614 = vrot.lane.b32.xlu0 %v567, 8
      %v615 = vpop.permute.xlu0 %614
      %vm632 = vcmask 97344
      %633 = vst.msk [vmem:[#allocation3] sm:$0xff] %vm632, %v585
      %634 = vst.msk [vmem:[#allocation3 + $0x8] sm:$0xff] %vm632, %v587
      %635 = vst.msk [vmem:[#allocation3 + $0x10] sm:$0xff] %vm632, %v589
      %636 = vst.msk [vmem:[#allocation3 + $0x18] sm:$0xff] %vm632, %v591
      %637 = vst.msk [vmem:[#allocation3 + $0x20] sm:$0xff] %vm632, %v593
      %638 = vst.msk [vmem:[#allocation3 + $0x28] sm:$0xff] %vm632, %v595
      %639 = vst.msk [vmem:[#allocation3 + $0x30] sm:$0xff] %vm632, %v597
      %640 = vst.msk [vmem:[#allocation3 + $0x38] sm:$0xff] %vm632, %v599
      %641 = vst.msk [vmem:[#allocation3 + $0x40] sm:$0xff] %vm632, %v601
      %642 = vst.msk [vmem:[#allocation3 + $0x48] sm:$0xff] %vm632, %v603
      %643 = vst.msk [vmem:[#allocation3 + $0x50] sm:$0xff] %vm632, %v605
      %644 = vst.msk [vmem:[#allocation3 + $0x58] sm:$0xff] %vm632, %v607
      %645 = vst.msk [vmem:[#allocation3 + $0x60] sm:$0xff] %vm632, %v609
      %646 = vst.msk [vmem:[#allocation3 + $0x68] sm:$0xff] %vm632, %v611
      %647 = vst.msk [vmem:[#allocation3 + $0x70] sm:$0xff] %vm632, %v613
      %648 = vst.msk [vmem:[#allocation3 + $0x78] sm:$0xff] %vm632, %v615
      %v649 = vld [vmem:[%s294] sm:$0xff]
      %v650 = vld [vmem:[%s294 + $0x8] sm:$0xff]
      %v651 = vld [vmem:[%s294 + $0x18] sm:$0xff]
      %v652 = vld [vmem:[%s294 + $0x20] sm:$0xff]
      %v653 = vld [vmem:[%s294 + $0x30] sm:$0xff]
      %v654 = vld [vmem:[%s294 + $0x38] sm:$0xff]
      %v655 = vld [vmem:[%s294 + $0x48] sm:$0xff]
      %v656 = vld [vmem:[%s294 + $0x50] sm:$0xff]
      %v657 = vld [vmem:[%s294 + $0x60] sm:$0xff]
      %v658 = vld [vmem:[%s294 + $0x68] sm:$0xff]
      %v659 = vld [vmem:[%s294 + $0x78] sm:$0xff]
      %v660 = vld [vmem:[%s294 + $0x80] sm:$0xff]
      %v661 = vld [vmem:[%s294 + $0x90] sm:$0xff]
      %v662 = vld [vmem:[%s294 + $0x98] sm:$0xff]
      %v663 = vld [vmem:[%s294 + $0xa8] sm:$0xff]
      %v664 = vld [vmem:[%s294 + $0xb0] sm:$0xff]
      %v665 = vld [vmem:[%s294 + $0xc0] sm:$0xff]
      %v666 = vld [vmem:[%s294 + $0xc8] sm:$0xff]
      %v667 = vld [vmem:[%s294 + $0xd8] sm:$0xff]
      %v668 = vld [vmem:[%s294 + $0xe0] sm:$0xff]
      %v669 = vld [vmem:[%s294 + $0xf0] sm:$0xff]
      %v670 = vld [vmem:[%s294 + $0xf8] sm:$0xff]
      %v671 = vld [vmem:[%s294 + $0x108] sm:$0xff]
      %v672 = vld [vmem:[%s294 + $0x110] sm:$0xff]
      %v673 = vld [vmem:[%s294 + $0x120] sm:$0xff]
      %v674 = vld [vmem:[%s294 + $0x128] sm:$0xff]
      %v675 = vld [vmem:[%s294 + $0x138] sm:$0xff]
      %v676 = vld [vmem:[%s294 + $0x140] sm:$0xff]
      %v677 = vld [vmem:[%s294 + $0x150] sm:$0xff]
      %v678 = vld [vmem:[%s294 + $0x158] sm:$0xff]
      %v679 = vld [vmem:[%s294 + $0x168] sm:$0xff]
      %v680 = vld [vmem:[%s294 + $0x170] sm:$0xff]
      %v681 = vpack.c.bf16 %v650, %v649
      %v682 = vpack.c.bf16 %v652, %v651
      %v683 = vpack.c.bf16 %v654, %v653
      %v684 = vpack.c.bf16 %v656, %v655
      %v685 = vpack.c.bf16 %v658, %v657
      %v686 = vpack.c.bf16 %v660, %v659
      %v687 = vpack.c.bf16 %v662, %v661
      %v688 = vpack.c.bf16 %v664, %v663
      %v689 = vpack.c.bf16 %v666, %v665
      %v690 = vpack.c.bf16 %v668, %v667
      %v691 = vpack.c.bf16 %v670, %v669
      %v692 = vpack.c.bf16 %v672, %v671
      %v693 = vpack.c.bf16 %v674, %v673
      %v694 = vpack.c.bf16 %v676, %v675
      %v695 = vpack.c.bf16 %v678, %v677
      %v696 = vpack.c.bf16 %v680, %v679
      %713 = vrot.lane.b32.xlu0 %v681, 12
      %v714 = vpop.permute.xlu0 %713
      %715 = vrot.lane.b32.xlu0 %v682, 12
      %v716 = vpop.permute.xlu0 %715
      %717 = vrot.lane.b32.xlu0 %v683, 12
      %v718 = vpop.permute.xlu0 %717
      %719 = vrot.lane.b32.xlu0 %v684, 12
      %v720 = vpop.permute.xlu0 %719
      %721 = vrot.lane.b32.xlu0 %v685, 12
      %v722 = vpop.permute.xlu0 %721
      %723 = vrot.lane.b32.xlu0 %v686, 12
      %v724 = vpop.permute.xlu0 %723
      %725 = vrot.lane.b32.xlu0 %v687, 12
      %v726 = vpop.permute.xlu0 %725
      %727 = vrot.lane.b32.xlu0 %v688, 12
      %v728 = vpop.permute.xlu0 %727
      %729 = vrot.lane.b32.xlu0 %v689, 12
      %v730 = vpop.permute.xlu0 %729
      %731 = vrot.lane.b32.xlu0 %v690, 12
      %v732 = vpop.permute.xlu0 %731
      %733 = vrot.lane.b32.xlu0 %v691, 12
      %v734 = vpop.permute.xlu0 %733
      %735 = vrot.lane.b32.xlu0 %v692, 12
      %v736 = vpop.permute.xlu0 %735
      %737 = vrot.lane.b32.xlu0 %v693, 12
      %v738 = vpop.permute.xlu0 %737
      %739 = vrot.lane.b32.xlu0 %v694, 12
      %v740 = vpop.permute.xlu0 %739
      %741 = vrot.lane.b32.xlu0 %v695, 12
      %v742 = vpop.permute.xlu0 %741
      %743 = vrot.lane.b32.xlu0 %v696, 12
      %v744 = vpop.permute.xlu0 %743
      %vm761 = vcmask 130144
      %762 = vst.msk [vmem:[#allocation3] sm:$0xff] %vm761, %v714
      %763 = vst.msk [vmem:[#allocation3 + $0x8] sm:$0xff] %vm761, %v716
      %764 = vst.msk [vmem:[#allocation3 + $0x10] sm:$0xff] %vm761, %v718
      %765 = vst.msk [vmem:[#allocation3 + $0x18] sm:$0xff] %vm761, %v720
      %766 = vst.msk [vmem:[#allocation3 + $0x20] sm:$0xff] %vm761, %v722
      %767 = vst.msk [vmem:[#allocation3 + $0x28] sm:$0xff] %vm761, %v724
      %768 = vst.msk [vmem:[#allocation3 + $0x30] sm:$0xff] %vm761, %v726
      %769 = vst.msk [vmem:[#allocation3 + $0x38] sm:$0xff] %vm761, %v728
      %770 = vst.msk [vmem:[#allocation3 + $0x40] sm:$0xff] %vm761, %v730
      %771 = vst.msk [vmem:[#allocation3 + $0x48] sm:$0xff] %vm761, %v732
      %772 = vst.msk [vmem:[#allocation3 + $0x50] sm:$0xff] %vm761, %v734
      %773 = vst.msk [vmem:[#allocation3 + $0x58] sm:$0xff] %vm761, %v736
      %774 = vst.msk [vmem:[#allocation3 + $0x60] sm:$0xff] %vm761, %v738
      %775 = vst.msk [vmem:[#allocation3 + $0x68] sm:$0xff] %vm761, %v740
      %776 = vst.msk [vmem:[#allocation3 + $0x70] sm:$0xff] %vm761, %v742
      %777 = vst.msk [vmem:[#allocation3 + $0x78] sm:$0xff] %vm761, %v744
      %v778 = vld [vmem:[%s294 + $0x1] sm:$0xff]
      %v779 = vld [vmem:[%s294 + $0x9] sm:$0xff]
      %v780 = vld [vmem:[%s294 + $0x19] sm:$0xff]
      %v781 = vld [vmem:[%s294 + $0x21] sm:$0xff]
      %v782 = vld [vmem:[%s294 + $0x31] sm:$0xff]
      %v783 = vld [vmem:[%s294 + $0x39] sm:$0xff]
      %v784 = vld [vmem:[%s294 + $0x49] sm:$0xff]
      %v785 = vld [vmem:[%s294 + $0x51] sm:$0xff]
      %v786 = vld [vmem:[%s294 + $0x61] sm:$0xff]
      %v787 = vld [vmem:[%s294 + $0x69] sm:$0xff]
      %v788 = vld [vmem:[%s294 + $0x79] sm:$0xff]
      %v789 = vld [vmem:[%s294 + $0x81] sm:$0xff]
      %v790 = vld [vmem:[%s294 + $0x91] sm:$0xff]
      %v791 = vld [vmem:[%s294 + $0x99] sm:$0xff]
      %v792 = vld [vmem:[%s294 + $0xa9] sm:$0xff]
      %v793 = vld [vmem:[%s294 + $0xb1] sm:$0xff]
      %v794 = vld [vmem:[%s294 + $0xc1] sm:$0xff]
      %v795 = vld [vmem:[%s294 + $0xc9] sm:$0xff]
      %v796 = vld [vmem:[%s294 + $0xd9] sm:$0xff]
      %v797 = vld [vmem:[%s294 + $0xe1] sm:$0xff]
      %v798 = vld [vmem:[%s294 + $0xf1] sm:$0xff]
      %v799 = vld [vmem:[%s294 + $0xf9] sm:$0xff]
      %v800 = vld [vmem:[%s294 + $0x109] sm:$0xff]
      %v801 = vld [vmem:[%s294 + $0x111] sm:$0xff]
      %v802 = vld [vmem:[%s294 + $0x121] sm:$0xff]
      %v803 = vld [vmem:[%s294 + $0x129] sm:$0xff]
      %v804 = vld [vmem:[%s294 + $0x139] sm:$0xff]
      %v805 = vld [vmem:[%s294 + $0x141] sm:$0xff]
      %v806 = vld [vmem:[%s294 + $0x151] sm:$0xff]
      %v807 = vld [vmem:[%s294 + $0x159] sm:$0xff]
      %v808 = vld [vmem:[%s294 + $0x169] sm:$0xff]
      %v809 = vld [vmem:[%s294 + $0x171] sm:$0xff]
      %v810 = vpack.c.bf16 %v779, %v778
      %v811 = vpack.c.bf16 %v781, %v780
      %v812 = vpack.c.bf16 %v783, %v782
      %v813 = vpack.c.bf16 %v785, %v784
      %v814 = vpack.c.bf16 %v787, %v786
      %v815 = vpack.c.bf16 %v789, %v788
      %v816 = vpack.c.bf16 %v791, %v790
      %v817 = vpack.c.bf16 %v793, %v792
      %v818 = vpack.c.bf16 %v795, %v794
      %v819 = vpack.c.bf16 %v797, %v796
      %v820 = vpack.c.bf16 %v799, %v798
      %v821 = vpack.c.bf16 %v801, %v800
      %v822 = vpack.c.bf16 %v803, %v802
      %v823 = vpack.c.bf16 %v805, %v804
      %v824 = vpack.c.bf16 %v807, %v806
      %v825 = vpack.c.bf16 %v809, %v808
      %842 = vrot.lane.b32.xlu0 %v810, 16
      %v843 = vpop.permute.xlu0 %842
      %844 = vrot.lane.b32.xlu0 %v811, 16
      %v845 = vpop.permute.xlu0 %844
      %846 = vrot.lane.b32.xlu0 %v812, 16
      %v847 = vpop.permute.xlu0 %846
      %848 = vrot.lane.b32.xlu0 %v813, 16
      %v849 = vpop.permute.xlu0 %848
      %850 = vrot.lane.b32.xlu0 %v814, 16
      %v851 = vpop.permute.xlu0 %850
      %852 = vrot.lane.b32.xlu0 %v815, 16
      %v853 = vpop.permute.xlu0 %852
      %854 = vrot.lane.b32.xlu0 %v816, 16
      %v855 = vpop.permute.xlu0 %854
      %856 = vrot.lane.b32.xlu0 %v817, 16
      %v857 = vpop.permute.xlu0 %856
      %858 = vrot.lane.b32.xlu0 %v818, 16
      %v859 = vpop.permute.xlu0 %858
      %860 = vrot.lane.b32.xlu0 %v819, 16
      %v861 = vpop.permute.xlu0 %860
      %862 = vrot.lane.b32.xlu0 %v820, 16
      %v863 = vpop.permute.xlu0 %862
      %864 = vrot.lane.b32.xlu0 %v821, 16
      %v865 = vpop.permute.xlu0 %864
      %866 = vrot.lane.b32.xlu0 %v822, 16
      %v867 = vpop.permute.xlu0 %866
      %868 = vrot.lane.b32.xlu0 %v823, 16
      %v869 = vpop.permute.xlu0 %868
      %870 = vrot.lane.b32.xlu0 %v824, 16
      %v871 = vpop.permute.xlu0 %870
      %872 = vrot.lane.b32.xlu0 %v825, 16
      %v873 = vpop.permute.xlu0 %872
      %vm890 = vcmask 162944
      %891 = vst.msk [vmem:[#allocation3] sm:$0xff] %vm890, %v843
      %892 = vst.msk [vmem:[#allocation3 + $0x8] sm:$0xff] %vm890, %v845
      %893 = vst.msk [vmem:[#allocation3 + $0x10] sm:$0xff] %vm890, %v847
      %894 = vst.msk [vmem:[#allocation3 + $0x18] sm:$0xff] %vm890, %v849
      %895 = vst.msk [vmem:[#allocation3 + $0x20] sm:$0xff] %vm890, %v851
      %896 = vst.msk [vmem:[#allocation3 + $0x28] sm:$0xff] %vm890, %v853
      %897 = vst.msk [vmem:[#allocation3 + $0x30] sm:$0xff] %vm890, %v855
      %898 = vst.msk [vmem:[#allocation3 + $0x38] sm:$0xff] %vm890, %v857
      %899 = vst.msk [vmem:[#allocation3 + $0x40] sm:$0xff] %vm890, %v859
      %900 = vst.msk [vmem:[#allocation3 + $0x48] sm:$0xff] %vm890, %v861
      %901 = vst.msk [vmem:[#allocation3 + $0x50] sm:$0xff] %vm890, %v863
      %902 = vst.msk [vmem:[#allocation3 + $0x58] sm:$0xff] %vm890, %v865
      %903 = vst.msk [vmem:[#allocation3 + $0x60] sm:$0xff] %vm890, %v867
      %904 = vst.msk [vmem:[#allocation3 + $0x68] sm:$0xff] %vm890, %v869
      %905 = vst.msk [vmem:[#allocation3 + $0x70] sm:$0xff] %vm890, %v871
      %906 = vst.msk [vmem:[#allocation3 + $0x78] sm:$0xff] %vm890, %v873
      %v907 = vld [vmem:[%s294 + $0x2] sm:$0xff]
      %v908 = vld [vmem:[%s294 + $0xa] sm:$0xff]
      %v909 = vld [vmem:[%s294 + $0x1a] sm:$0xff]
      %v910 = vld [vmem:[%s294 + $0x22] sm:$0xff]
      %v911 = vld [vmem:[%s294 + $0x32] sm:$0xff]
      %v912 = vld [vmem:[%s294 + $0x3a] sm:$0xff]
      %v913 = vld [vmem:[%s294 + $0x4a] sm:$0xff]
      %v914 = vld [vmem:[%s294 + $0x52] sm:$0xff]
      %v915 = vld [vmem:[%s294 + $0x62] sm:$0xff]
      %v916 = vld [vmem:[%s294 + $0x6a] sm:$0xff]
      %v917 = vld [vmem:[%s294 + $0x7a] sm:$0xff]
      %v918 = vld [vmem:[%s294 + $0x82] sm:$0xff]
      %v919 = vld [vmem:[%s294 + $0x92] sm:$0xff]
      %v920 = vld [vmem:[%s294 + $0x9a] sm:$0xff]
      %v921 = vld [vmem:[%s294 + $0xaa] sm:$0xff]
      %v922 = vld [vmem:[%s294 + $0xb2] sm:$0xff]
      %v923 = vld [vmem:[%s294 + $0xc2] sm:$0xff]
      %v924 = vld [vmem:[%s294 + $0xca] sm:$0xff]
      %v925 = vld [vmem:[%s294 + $0xda] sm:$0xff]
      %v926 = vld [vmem:[%s294 + $0xe2] sm:$0xff]
      %v927 = vld [vmem:[%s294 + $0xf2] sm:$0xff]
      %v928 = vld [vmem:[%s294 + $0xfa] sm:$0xff]
      %v929 = vld [vmem:[%s294 + $0x10a] sm:$0xff]
      %v930 = vld [vmem:[%s294 + $0x112] sm:$0xff]
      %v931 = vld [vmem:[%s294 + $0x122] sm:$0xff]
      %v932 = vld [vmem:[%s294 + $0x12a] sm:$0xff]
      %v933 = vld [vmem:[%s294 + $0x13a] sm:$0xff]
      %v934 = vld [vmem:[%s294 + $0x142] sm:$0xff]
      %v935 = vld [vmem:[%s294 + $0x152] sm:$0xff]
      %v936 = vld [vmem:[%s294 + $0x15a] sm:$0xff]
      %v937 = vld [vmem:[%s294 + $0x16a] sm:$0xff]
      %v938 = vld [vmem:[%s294 + $0x172] sm:$0xff]
      %v939 = vpack.c.bf16 %v908, %v907
      %v940 = vpack.c.bf16 %v910, %v909
      %v941 = vpack.c.bf16 %v912, %v911
      %v942 = vpack.c.bf16 %v914, %v913
      %v943 = vpack.c.bf16 %v916, %v915
      %v944 = vpack.c.bf16 %v918, %v917
      %v945 = vpack.c.bf16 %v920, %v919
      %v946 = vpack.c.bf16 %v922, %v921
      %v947 = vpack.c.bf16 %v924, %v923
      %v948 = vpack.c.bf16 %v926, %v925
      %v949 = vpack.c.bf16 %v928, %v927
      %v950 = vpack.c.bf16 %v930, %v929
      %v951 = vpack.c.bf16 %v932, %v931
      %v952 = vpack.c.bf16 %v934, %v933
      %v953 = vpack.c.bf16 %v936, %v935
      %v954 = vpack.c.bf16 %v938, %v937
      %971 = vrot.lane.b32.xlu0 %v939, 20
      %v972 = vpop.permute.xlu0 %971
      %973 = vrot.lane.b32.xlu0 %v940, 20
      %v974 = vpop.permute.xlu0 %973
      %975 = vrot.lane.b32.xlu0 %v941, 20
      %v976 = vpop.permute.xlu0 %975
      %977 = vrot.lane.b32.xlu0 %v942, 20
      %v978 = vpop.permute.xlu0 %977
      %979 = vrot.lane.b32.xlu0 %v943, 20
      %v980 = vpop.permute.xlu0 %979
      %981 = vrot.lane.b32.xlu0 %v944, 20
      %v982 = vpop.permute.xlu0 %981
      %983 = vrot.lane.b32.xlu0 %v945, 20
      %v984 = vpop.permute.xlu0 %983
      %985 = vrot.lane.b32.xlu0 %v946, 20
      %v986 = vpop.permute.xlu0 %985
      %987 = vrot.lane.b32.xlu0 %v947, 20
      %v988 = vpop.permute.xlu0 %987
      %989 = vrot.lane.b32.xlu0 %v948, 20
      %v990 = vpop.permute.xlu0 %989
      %991 = vrot.lane.b32.xlu0 %v949, 20
      %v992 = vpop.permute.xlu0 %991
      %993 = vrot.lane.b32.xlu0 %v950, 20
      %v994 = vpop.permute.xlu0 %993
      %995 = vrot.lane.b32.xlu0 %v951, 20
      %v996 = vpop.permute.xlu0 %995
      %997 = vrot.lane.b32.xlu0 %v952, 20
      %v998 = vpop.permute.xlu0 %997
      %999 = vrot.lane.b32.xlu0 %v953, 20
      %v1000 = vpop.permute.xlu0 %999
      %1001 = vrot.lane.b32.xlu0 %v954, 20
      %v1002 = vpop.permute.xlu0 %1001
      %vm1019 = vcmask 195744
      %1020 = vst.msk [vmem:[#allocation3] sm:$0xff] %vm1019, %v972
      %1021 = vst.msk [vmem:[#allocation3 + $0x8] sm:$0xff] %vm1019, %v974
      %1022 = vst.msk [vmem:[#allocation3 + $0x10] sm:$0xff] %vm1019, %v976
      %1023 = vst.msk [vmem:[#allocation3 + $0x18] sm:$0xff] %vm1019, %v978
      %1024 = vst.msk [vmem:[#allocation3 + $0x20] sm:$0xff] %vm1019, %v980
      %1025 = vst.msk [vmem:[#allocation3 + $0x28] sm:$0xff] %vm1019, %v982
      %1026 = vst.msk [vmem:[#allocation3 + $0x30] sm:$0xff] %vm1019, %v984
      %1027 = vst.msk [vmem:[#allocation3 + $0x38] sm:$0xff] %vm1019, %v986
      %1028 = vst.msk [vmem:[#allocation3 + $0x40] sm:$0xff] %vm1019, %v988
      %1029 = vst.msk [vmem:[#allocation3 + $0x48] sm:$0xff] %vm1019, %v990
      %1030 = vst.msk [vmem:[#allocation3 + $0x50] sm:$0xff] %vm1019, %v992
      %1031 = vst.msk [vmem:[#allocation3 + $0x58] sm:$0xff] %vm1019, %v994
      %1032 = vst.msk [vmem:[#allocation3 + $0x60] sm:$0xff] %vm1019, %v996
      %1033 = vst.msk [vmem:[#allocation3 + $0x68] sm:$0xff] %vm1019, %v998
      %1034 = vst.msk [vmem:[#allocation3 + $0x70] sm:$0xff] %vm1019, %v1000
      %1035 = vst.msk [vmem:[#allocation3 + $0x78] sm:$0xff] %vm1019, %v1002
      %s1036 = scalar_lea.vmem [#allocation2], 48
      %v1037 = vld [vmem:[%s1036] sm:$0xff]
      %v1038 = vld [vmem:[%s1036 + $0x8] sm:$0xff]
      %v1039 = vld [vmem:[%s1036 + $0x18] sm:$0xff]
      %v1040 = vld [vmem:[%s1036 + $0x20] sm:$0xff]
      %v1041 = vld [vmem:[%s1036 + $0x30] sm:$0xff]
      %v1042 = vld [vmem:[%s1036 + $0x38] sm:$0xff]
      %v1043 = vld [vmem:[%s1036 + $0x48] sm:$0xff]
      %v1044 = vld [vmem:[%s1036 + $0x50] sm:$0xff]
      %v1045 = vld [vmem:[%s1036 + $0x60] sm:$0xff]
      %v1046 = vld [vmem:[%s1036 + $0x68] sm:$0xff]
      %v1047 = vld [vmem:[%s1036 + $0x78] sm:$0xff]
      %v1048 = vld [vmem:[%s1036 + $0x80] sm:$0xff]
      %v1049 = vld [vmem:[%s1036 + $0x90] sm:$0xff]
      %v1050 = vld [vmem:[%s1036 + $0x98] sm:$0xff]
      %v1051 = vld [vmem:[%s1036 + $0xa8] sm:$0xff]
      %v1052 = vld [vmem:[%s1036 + $0xb0] sm:$0xff]
      %v1053 = vld [vmem:[%s1036 + $0xc0] sm:$0xff]
      %v1054 = vld [vmem:[%s1036 + $0xc8] sm:$0xff]
      %v1055 = vld [vmem:[%s1036 + $0xd8] sm:$0xff]
      %v1056 = vld [vmem:[%s1036 + $0xe0] sm:$0xff]
      %v1057 = vld [vmem:[%s1036 + $0xf0] sm:$0xff]
      %v1058 = vld [vmem:[%s1036 + $0xf8] sm:$0xff]
      %v1059 = vld [vmem:[%s1036 + $0x108] sm:$0xff]
      %v1060 = vld [vmem:[%s1036 + $0x110] sm:$0xff]
      %v1061 = vld [vmem:[%s1036 + $0x120] sm:$0xff]
      %v1062 = vld [vmem:[%s1036 + $0x128] sm:$0xff]
      %v1063 = vld [vmem:[%s1036 + $0x138] sm:$0xff]
      %v1064 = vld [vmem:[%s1036 + $0x140] sm:$0xff]
      %v1065 = vld [vmem:[%s1036 + $0x150] sm:$0xff]
      %v1066 = vld [vmem:[%s1036 + $0x158] sm:$0xff]
      %v1067 = vld [vmem:[%s1036 + $0x168] sm:$0xff]
      %v1068 = vld [vmem:[%s1036 + $0x170] sm:$0xff]
      %v1069 = vpack.c.bf16 %v1038, %v1037
      %v1070 = vpack.c.bf16 %v1040, %v1039
      %v1071 = vpack.c.bf16 %v1042, %v1041
      %v1072 = vpack.c.bf16 %v1044, %v1043
      %v1073 = vpack.c.bf16 %v1046, %v1045
      %v1074 = vpack.c.bf16 %v1048, %v1047
      %v1075 = vpack.c.bf16 %v1050, %v1049
      %v1076 = vpack.c.bf16 %v1052, %v1051
      %v1077 = vpack.c.bf16 %v1054, %v1053
      %v1078 = vpack.c.bf16 %v1056, %v1055
      %v1079 = vpack.c.bf16 %v1058, %v1057
      %v1080 = vpack.c.bf16 %v1060, %v1059
      %v1081 = vpack.c.bf16 %v1062, %v1061
      %v1082 = vpack.c.bf16 %v1064, %v1063
      %v1083 = vpack.c.bf16 %v1066, %v1065
      %v1084 = vpack.c.bf16 %v1068, %v1067
      %1101 = vrot.lane.b32.xlu0 %v1069, 24
      %v1102 = vpop.permute.xlu0 %1101
      %1103 = vrot.lane.b32.xlu0 %v1070, 24
      %v1104 = vpop.permute.xlu0 %1103
      %1105 = vrot.lane.b32.xlu0 %v1071, 24
      %v1106 = vpop.permute.xlu0 %1105
      %1107 = vrot.lane.b32.xlu0 %v1072, 24
      %v1108 = vpop.permute.xlu0 %1107
      %1109 = vrot.lane.b32.xlu0 %v1073, 24
      %v1110 = vpop.permute.xlu0 %1109
      %1111 = vrot.lane.b32.xlu0 %v1074, 24
      %v1112 = vpop.permute.xlu0 %1111
      %1113 = vrot.lane.b32.xlu0 %v1075, 24
      %v1114 = vpop.permute.xlu0 %1113
      %1115 = vrot.lane.b32.xlu0 %v1076, 24
      %v1116 = vpop.permute.xlu0 %1115
      %1117 = vrot.lane.b32.xlu0 %v1077, 24
      %v1118 = vpop.permute.xlu0 %1117
      %1119 = vrot.lane.b32.xlu0 %v1078, 24
      %v1120 = vpop.permute.xlu0 %1119
      %1121 = vrot.lane.b32.xlu0 %v1079, 24
      %v1122 = vpop.permute.xlu0 %1121
      %1123 = vrot.lane.b32.xlu0 %v1080, 24
      %v1124 = vpop.permute.xlu0 %1123
      %1125 = vrot.lane.b32.xlu0 %v1081, 24
      %v1126 = vpop.permute.xlu0 %1125
      %1127 = vrot.lane.b32.xlu0 %v1082, 24
      %v1128 = vpop.permute.xlu0 %1127
      %1129 = vrot.lane.b32.xlu0 %v1083, 24
      %v1130 = vpop.permute.xlu0 %1129
      %1131 = vrot.lane.b32.xlu0 %v1084, 24
      %v1132 = vpop.permute.xlu0 %1131
      %vm1149 = vcmask 228544
      %1150 = vst.msk [vmem:[#allocation3] sm:$0xff] %vm1149, %v1102
      %1151 = vst.msk [vmem:[#allocation3 + $0x8] sm:$0xff] %vm1149, %v1104
      %1152 = vst.msk [vmem:[#allocation3 + $0x10] sm:$0xff] %vm1149, %v1106
      %1153 = vst.msk [vmem:[#allocation3 + $0x18] sm:$0xff] %vm1149, %v1108
      %1154 = vst.msk [vmem:[#allocation3 + $0x20] sm:$0xff] %vm1149, %v1110
      %1155 = vst.msk [vmem:[#allocation3 + $0x28] sm:$0xff] %vm1149, %v1112
      %1156 = vst.msk [vmem:[#allocation3 + $0x30] sm:$0xff] %vm1149, %v1114
      %1157 = vst.msk [vmem:[#allocation3 + $0x38] sm:$0xff] %vm1149, %v1116
      %1158 = vst.msk [vmem:[#allocation3 + $0x40] sm:$0xff] %vm1149, %v1118
      %1159 = vst.msk [vmem:[#allocation3 + $0x48] sm:$0xff] %vm1149, %v1120
      %1160 = vst.msk [vmem:[#allocation3 + $0x50] sm:$0xff] %vm1149, %v1122
      %1161 = vst.msk [vmem:[#allocation3 + $0x58] sm:$0xff] %vm1149, %v1124
      %1162 = vst.msk [vmem:[#allocation3 + $0x60] sm:$0xff] %vm1149, %v1126
      %1163 = vst.msk [vmem:[#allocation3 + $0x68] sm:$0xff] %vm1149, %v1128
      %1164 = vst.msk [vmem:[#allocation3 + $0x70] sm:$0xff] %vm1149, %v1130
      %1165 = vst.msk [vmem:[#allocation3 + $0x78] sm:$0xff] %vm1149, %v1132
      %v1166 = vld [vmem:[%s1036 + $0x1] sm:$0xff]
      %v1167 = vld [vmem:[%s1036 + $0x9] sm:$0xff]
      %v1168 = vld [vmem:[%s1036 + $0x19] sm:$0xff]
      %v1169 = vld [vmem:[%s1036 + $0x21] sm:$0xff]
      %v1170 = vld [vmem:[%s1036 + $0x31] sm:$0xff]
      %v1171 = vld [vmem:[%s1036 + $0x39] sm:$0xff]
      %v1172 = vld [vmem:[%s1036 + $0x49] sm:$0xff]
      %v1173 = vld [vmem:[%s1036 + $0x51] sm:$0xff]
      %v1174 = vld [vmem:[%s1036 + $0x61] sm:$0xff]
      %v1175 = vld [vmem:[%s1036 + $0x69] sm:$0xff]
      %v1176 = vld [vmem:[%s1036 + $0x79] sm:$0xff]
      %v1177 = vld [vmem:[%s1036 + $0x81] sm:$0xff]
      %v1178 = vld [vmem:[%s1036 + $0x91] sm:$0xff]
      %v1179 = vld [vmem:[%s1036 + $0x99] sm:$0xff]
      %v1180 = vld [vmem:[%s1036 + $0xa9] sm:$0xff]
      %v1181 = vld [vmem:[%s1036 + $0xb1] sm:$0xff]
      %v1182 = vld [vmem:[%s1036 + $0xc1] sm:$0xff]
      %v1183 = vld [vmem:[%s1036 + $0xc9] sm:$0xff]
      %v1184 = vld [vmem:[%s1036 + $0xd9] sm:$0xff]
      %v1185 = vld [vmem:[%s1036 + $0xe1] sm:$0xff]
      %v1186 = vld [vmem:[%s1036 + $0xf1] sm:$0xff]
      %v1187 = vld [vmem:[%s1036 + $0xf9] sm:$0xff]
      %v1188 = vld [vmem:[%s1036 + $0x109] sm:$0xff]
      %v1189 = vld [vmem:[%s1036 + $0x111] sm:$0xff]
      %v1190 = vld [vmem:[%s1036 + $0x121] sm:$0xff]
      %v1191 = vld [vmem:[%s1036 + $0x129] sm:$0xff]
      %v1192 = vld [vmem:[%s1036 + $0x139] sm:$0xff]
      %v1193 = vld [vmem:[%s1036 + $0x141] sm:$0xff]
      %v1194 = vld [vmem:[%s1036 + $0x151] sm:$0xff]
      %v1195 = vld [vmem:[%s1036 + $0x159] sm:$0xff]
      %v1196 = vld [vmem:[%s1036 + $0x169] sm:$0xff]
      %v1197 = vld [vmem:[%s1036 + $0x171] sm:$0xff]
      %v1198 = vpack.c.bf16 %v1167, %v1166
      %v1199 = vpack.c.bf16 %v1169, %v1168
      %v1200 = vpack.c.bf16 %v1171, %v1170
      %v1201 = vpack.c.bf16 %v1173, %v1172
      %v1202 = vpack.c.bf16 %v1175, %v1174
      %v1203 = vpack.c.bf16 %v1177, %v1176
      %v1204 = vpack.c.bf16 %v1179, %v1178
      %v1205 = vpack.c.bf16 %v1181, %v1180
      %v1206 = vpack.c.bf16 %v1183, %v1182
      %v1207 = vpack.c.bf16 %v1185, %v1184
      %v1208 = vpack.c.bf16 %v1187, %v1186
      %v1209 = vpack.c.bf16 %v1189, %v1188
      %v1210 = vpack.c.bf16 %v1191, %v1190
      %v1211 = vpack.c.bf16 %v1193, %v1192
      %v1212 = vpack.c.bf16 %v1195, %v1194
      %v1213 = vpack.c.bf16 %v1197, %v1196
      %1230 = vrot.lane.b32.xlu0 %v1198, 28
      %v1231 = vpop.permute.xlu0 %1230
      %1232 = vrot.lane.b32.xlu0 %v1199, 28
      %v1233 = vpop.permute.xlu0 %1232
      %1234 = vrot.lane.b32.xlu0 %v1200, 28
      %v1235 = vpop.permute.xlu0 %1234
      %1236 = vrot.lane.b32.xlu0 %v1201, 28
      %v1237 = vpop.permute.xlu0 %1236
      %1238 = vrot.lane.b32.xlu0 %v1202, 28
      %v1239 = vpop.permute.xlu0 %1238
      %1240 = vrot.lane.b32.xlu0 %v1203, 28
      %v1241 = vpop.permute.xlu0 %1240
      %1242 = vrot.lane.b32.xlu0 %v1204, 28
      %v1243 = vpop.permute.xlu0 %1242
      %1244 = vrot.lane.b32.xlu0 %v1205, 28
      %v1245 = vpop.permute.xlu0 %1244
      %1246 = vrot.lane.b32.xlu0 %v1206, 28
      %v1247 = vpop.permute.xlu0 %1246
      %1248 = vrot.lane.b32.xlu0 %v1207, 28
      %v1249 = vpop.permute.xlu0 %1248
      %1250 = vrot.lane.b32.xlu0 %v1208, 28
      %v1251 = vpop.permute.xlu0 %1250
      %1252 = vrot.lane.b32.xlu0 %v1209, 28
      %v1253 = vpop.permute.xlu0 %1252
      %1254 = vrot.lane.b32.xlu0 %v1210, 28
      %v1255 = vpop.permute.xlu0 %1254
      %1256 = vrot.lane.b32.xlu0 %v1211, 28
      %v1257 = vpop.permute.xlu0 %1256
      %1258 = vrot.lane.b32.xlu0 %v1212, 28
      %v1259 = vpop.permute.xlu0 %1258
      %1260 = vrot.lane.b32.xlu0 %v1213, 28
      %v1261 = vpop.permute.xlu0 %1260
      %vm1278 = vcmask 261344
      %1279 = vst.msk [vmem:[#allocation3] sm:$0xff] %vm1278, %v1231
      %1280 = vst.msk [vmem:[#allocation3 + $0x8] sm:$0xff] %vm1278, %v1233
      %1281 = vst.msk [vmem:[#allocation3 + $0x10] sm:$0xff] %vm1278, %v1235
      %1282 = vst.msk [vmem:[#allocation3 + $0x18] sm:$0xff] %vm1278, %v1237
      %1283 = vst.msk [vmem:[#allocation3 + $0x20] sm:$0xff] %vm1278, %v1239
      %1284 = vst.msk [vmem:[#allocation3 + $0x28] sm:$0xff] %vm1278, %v1241
      %1285 = vst.msk [vmem:[#allocation3 + $0x30] sm:$0xff] %vm1278, %v1243
      %1286 = vst.msk [vmem:[#allocation3 + $0x38] sm:$0xff] %vm1278, %v1245
      %1287 = vst.msk [vmem:[#allocation3 + $0x40] sm:$0xff] %vm1278, %v1247
      %1288 = vst.msk [vmem:[#allocation3 + $0x48] sm:$0xff] %vm1278, %v1249
      %1289 = vst.msk [vmem:[#allocation3 + $0x50] sm:$0xff] %vm1278, %v1251
      %1290 = vst.msk [vmem:[#allocation3 + $0x58] sm:$0xff] %vm1278, %v1253
      %1291 = vst.msk [vmem:[#allocation3 + $0x60] sm:$0xff] %vm1278, %v1255
      %1292 = vst.msk [vmem:[#allocation3 + $0x68] sm:$0xff] %vm1278, %v1257
      %1293 = vst.msk [vmem:[#allocation3 + $0x70] sm:$0xff] %vm1278, %v1259
      %1294 = vst.msk [vmem:[#allocation3 + $0x78] sm:$0xff] %vm1278, %v1261
      %v1295 = vld [vmem:[%s1036 + $0x2] sm:$0xff]
      %v1296 = vld [vmem:[%s1036 + $0xa] sm:$0xff]
      %v1297 = vld [vmem:[%s1036 + $0x1a] sm:$0xff]
      %v1298 = vld [vmem:[%s1036 + $0x22] sm:$0xff]
      %v1299 = vld [vmem:[%s1036 + $0x32] sm:$0xff]
      %v1300 = vld [vmem:[%s1036 + $0x3a] sm:$0xff]
      %v1301 = vld [vmem:[%s1036 + $0x4a] sm:$0xff]
      %v1302 = vld [vmem:[%s1036 + $0x52] sm:$0xff]
      %v1303 = vld [vmem:[%s1036 + $0x62] sm:$0xff]
      %v1304 = vld [vmem:[%s1036 + $0x6a] sm:$0xff]
      %v1305 = vld [vmem:[%s1036 + $0x7a] sm:$0xff]
      %v1306 = vld [vmem:[%s1036 + $0x82] sm:$0xff]
      %v1307 = vld [vmem:[%s1036 + $0x92] sm:$0xff]
      %v1308 = vld [vmem:[%s1036 + $0x9a] sm:$0xff]
      %v1309 = vld [vmem:[%s1036 + $0xaa] sm:$0xff]
      %v1310 = vld [vmem:[%s1036 + $0xb2] sm:$0xff]
      %v1311 = vld [vmem:[%s1036 + $0xc2] sm:$0xff]
      %v1312 = vld [vmem:[%s1036 + $0xca] sm:$0xff]
      %v1313 = vld [vmem:[%s1036 + $0xda] sm:$0xff]
      %v1314 = vld [vmem:[%s1036 + $0xe2] sm:$0xff]
      %v1315 = vld [vmem:[%s1036 + $0xf2] sm:$0xff]
      %v1316 = vld [vmem:[%s1036 + $0xfa] sm:$0xff]
      %v1317 = vld [vmem:[%s1036 + $0x10a] sm:$0xff]
      %v1318 = vld [vmem:[%s1036 + $0x112] sm:$0xff]
      %v1319 = vld [vmem:[%s1036 + $0x122] sm:$0xff]
      %v1320 = vld [vmem:[%s1036 + $0x12a] sm:$0xff]
      %v1321 = vld [vmem:[%s1036 + $0x13a] sm:$0xff]
      %v1322 = vld [vmem:[%s1036 + $0x142] sm:$0xff]
      %v1323 = vld [vmem:[%s1036 + $0x152] sm:$0xff]
      %v1324 = vld [vmem:[%s1036 + $0x15a] sm:$0xff]
      %v1325 = vld [vmem:[%s1036 + $0x16a] sm:$0xff]
      %v1326 = vld [vmem:[%s1036 + $0x172] sm:$0xff]
      %v1327 = vpack.c.bf16 %v1296, %v1295
      %v1328 = vpack.c.bf16 %v1298, %v1297
      %v1329 = vpack.c.bf16 %v1300, %v1299
      %v1330 = vpack.c.bf16 %v1302, %v1301
      %v1331 = vpack.c.bf16 %v1304, %v1303
      %v1332 = vpack.c.bf16 %v1306, %v1305
      %v1333 = vpack.c.bf16 %v1308, %v1307
      %v1334 = vpack.c.bf16 %v1310, %v1309
      %v1335 = vpack.c.bf16 %v1312, %v1311
      %v1336 = vpack.c.bf16 %v1314, %v1313
      %v1337 = vpack.c.bf16 %v1316, %v1315
      %v1338 = vpack.c.bf16 %v1318, %v1317
      %v1339 = vpack.c.bf16 %v1320, %v1319
      %v1340 = vpack.c.bf16 %v1322, %v1321
      %v1341 = vpack.c.bf16 %v1324, %v1323
      %v1342 = vpack.c.bf16 %v1326, %v1325
      %1359 = vrot.lane.b32.xlu0 %v1327, 32
      %v1360 = vpop.permute.xlu0 %1359
      %1361 = vrot.lane.b32.xlu0 %v1328, 32
      %v1362 = vpop.permute.xlu0 %1361
      %1363 = vrot.lane.b32.xlu0 %v1329, 32
      %v1364 = vpop.permute.xlu0 %1363
      %1365 = vrot.lane.b32.xlu0 %v1330, 32
      %v1366 = vpop.permute.xlu0 %1365
      %1367 = vrot.lane.b32.xlu0 %v1331, 32
      %v1368 = vpop.permute.xlu0 %1367
      %1369 = vrot.lane.b32.xlu0 %v1332, 32
      %v1370 = vpop.permute.xlu0 %1369
      %1371 = vrot.lane.b32.xlu0 %v1333, 32
      %v1372 = vpop.permute.xlu0 %1371
      %1373 = vrot.lane.b32.xlu0 %v1334, 32
      %v1374 = vpop.permute.xlu0 %1373
      %1375 = vrot.lane.b32.xlu0 %v1335, 32
      %v1376 = vpop.permute.xlu0 %1375
      %1377 = vrot.lane.b32.xlu0 %v1336, 32
      %v1378 = vpop.permute.xlu0 %1377
      %1379 = vrot.lane.b32.xlu0 %v1337, 32
      %v1380 = vpop.permute.xlu0 %1379
      %1381 = vrot.lane.b32.xlu0 %v1338, 32
      %v1382 = vpop.permute.xlu0 %1381
      %1383 = vrot.lane.b32.xlu0 %v1339, 32
      %v1384 = vpop.permute.xlu0 %1383
      %1385 = vrot.lane.b32.xlu0 %v1340, 32
      %v1386 = vpop.permute.xlu0 %1385
      %1387 = vrot.lane.b32.xlu0 %v1341, 32
      %v1388 = vpop.permute.xlu0 %1387
      %1389 = vrot.lane.b32.xlu0 %v1342, 32
      %v1390 = vpop.permute.xlu0 %1389
      %vm1407 = vcmask 294144
      %1408 = vst.msk [vmem:[#allocation3] sm:$0xff] %vm1407, %v1360
      %1409 = vst.msk [vmem:[#allocation3 + $0x8] sm:$0xff] %vm1407, %v1362
      %1410 = vst.msk [vmem:[#allocation3 + $0x10] sm:$0xff] %vm1407, %v1364
      %1411 = vst.msk [vmem:[#allocation3 + $0x18] sm:$0xff] %vm1407, %v1366
      %1412 = vst.msk [vmem:[#allocation3 + $0x20] sm:$0xff] %vm1407, %v1368
      %1413 = vst.msk [vmem:[#allocation3 + $0x28] sm:$0xff] %vm1407, %v1370
      %1414 = vst.msk [vmem:[#allocation3 + $0x30] sm:$0xff] %vm1407, %v1372
      %1415 = vst.msk [vmem:[#allocation3 + $0x38] sm:$0xff] %vm1407, %v1374
      %1416 = vst.msk [vmem:[#allocation3 + $0x40] sm:$0xff] %vm1407, %v1376
      %1417 = vst.msk [vmem:[#allocation3 + $0x48] sm:$0xff] %vm1407, %v1378
      %1418 = vst.msk [vmem:[#allocation3 + $0x50] sm:$0xff] %vm1407, %v1380
      %1419 = vst.msk [vmem:[#allocation3 + $0x58] sm:$0xff] %vm1407, %v1382
      %1420 = vst.msk [vmem:[#allocation3 + $0x60] sm:$0xff] %vm1407, %v1384
      %1421 = vst.msk [vmem:[#allocation3 + $0x68] sm:$0xff] %vm1407, %v1386
      %1422 = vst.msk [vmem:[#allocation3 + $0x70] sm:$0xff] %vm1407, %v1388
      %1423 = vst.msk [vmem:[#allocation3 + $0x78] sm:$0xff] %vm1407, %v1390
      %v1424 = vld [vmem:[#allocation3] sm:$0xff]
      %v1425 = vld [vmem:[#allocation3 + $0x8] sm:$0xff]
      %v1426 = vld [vmem:[#allocation3 + $0x10] sm:$0xff]
      %v1427 = vld [vmem:[#allocation3 + $0x18] sm:$0xff]
      %v1428 = vld [vmem:[#allocation3 + $0x20] sm:$0xff]
      %v1429 = vld [vmem:[#allocation3 + $0x28] sm:$0xff]
      %v1430 = vld [vmem:[#allocation3 + $0x30] sm:$0xff]
      %v1431 = vld [vmem:[#allocation3 + $0x38] sm:$0xff]
      %v1432 = vld [vmem:[#allocation3 + $0x40] sm:$0xff]
      %v1433 = vld [vmem:[#allocation3 + $0x48] sm:$0xff]
      %v1434 = vld [vmem:[#allocation3 + $0x50] sm:$0xff]
      %v1435 = vld [vmem:[#allocation3 + $0x58] sm:$0xff]
      %v1436 = vld [vmem:[#allocation3 + $0x60] sm:$0xff]
      %v1437 = vld [vmem:[#allocation3 + $0x68] sm:$0xff]
      %v1438 = vld [vmem:[#allocation3 + $0x70] sm:$0xff]
      %v1439 = vld [vmem:[#allocation3 + $0x78] sm:$0xff]
      %v1440 = vld [vmem:[%s1] sm:$0xf]
      %v1441 = vld [vmem:[%s1 + $0x4] sm:$0xf]
      %v1442 = vld [vmem:[%s1 + $0x8] sm:$0xf]
      %v1443 = vld [vmem:[%s1 + $0xc] sm:$0xf]
      %v1444 = vld [vmem:[%s1 + $0x10] sm:$0x3]
      %v1450 = vunpack.c.l.b16 %v1440
      %v1451 = vunpack.c.l.b16 %v1441
      %v1452 = vunpack.c.l.b16 %v1442
      %v1453 = vunpack.c.l.b16 %v1443
      %v1454 = vunpack.c.l.b16 %v1444
      %v1455 = vpack.c.b16 %v1451, %v1450
      %v1456 = vpack.c.b16 %v1453, %v1452
      %v1457 = vpack.c.b16 %v1454, %v1454
      %vm1460 = vcmask 293888
      %v1462 = vsel %vm1460, %v1424, 0
      %v1465 = vsel %vm1460, %v1425, 0
      %v1468 = vsel %vm1460, %v1426, 0
      %v1471 = vsel %vm1460, %v1427, 0
      %v1474 = vsel %vm1460, %v1428, 0
      %v1477 = vsel %vm1460, %v1429, 0
      %v1480 = vsel %vm1460, %v1430, 0
      %v1483 = vsel %vm1460, %v1431, 0
      %v1486 = vsel %vm1460, %v1432, 0
      %v1489 = vsel %vm1460, %v1433, 0
      %v1492 = vsel %vm1460, %v1434, 0
      %v1495 = vsel %vm1460, %v1435, 0
      %v1498 = vsel %vm1460, %v1436, 0
      %v1501 = vsel %vm1460, %v1437, 0
      %v1504 = vsel %vm1460, %v1438, 0
      %v1507 = vsel %vm1460, %v1439, 0
      %vm1509 = vcmask 1041408
      %v1511 = vsel %vm1509, %v1457, 0
      %1513 = vmatprep.subr.bf16.mxu0 0
      %1514 = vmatpush1.bf16.msra.mxu0 %v1455
      %1515 = vmatprep.subr.bf16.mxu0 0
      %1516 = vmatpush1.bf16.msra.mxu0 %v1456
      %1517 = vmatprep.subr.bf16.mxu0 0
      %1518 = vmatpush1.bf16.msra.mxu0 %v1511
      %1519 = vmatprep.subr.bf16.mxu0 0
      %1520 = vmatpush1.bf16.msra.mxu0 0
      %1521 = vmatprep.subr.bf16.mxu0 0
      %1522 = vmatpush1.bf16.msra.mxu0 0
      %1523 = vmatprep.subr.bf16.mxu0 0
      %1524 = vmatpush1.bf16.msra.mxu0 0
      %1525 = vmatprep.subr.bf16.mxu0 0
      %1526 = vmatpush1.bf16.msra.mxu0 0
      %1527 = vmatprep.subr.bf16.mxu0 0
      %1528 = vmatpush1.bf16.msra.mxu0 0
      %1529 = vmatprep.subr.bf16.mxu0 0
      %1530 = vmatpush1.bf16.msra.mxu0 0
      %1531 = vmatprep.subr.bf16.mxu0 0
      %1532 = vmatpush1.bf16.msra.mxu0 0
      %1533 = vmatprep.subr.bf16.mxu0 0
      %1534 = vmatpush1.bf16.msra.mxu0 0
      %1535 = vmatprep.subr.bf16.mxu0 0
      %1536 = vmatpush1.bf16.msra.mxu0 0
      %1537 = vmatprep.subr.bf16.mxu0 0
      %1538 = vmatpush1.bf16.msra.mxu0 0
      %1539 = vmatprep.subr.bf16.mxu0 0
      %1540 = vmatpush1.bf16.msra.mxu0 0
      %1541 = vmatprep.subr.bf16.mxu0 0
      %1542 = vmatpush1.bf16.msra.mxu0 0
      %1543 = vmatprep.subr.bf16.mxu0 0
      %1544 = vmatpush1.bf16.msra.mxu0 0
      %1545 = vmatprep.mubr.bf16.mxu0 0
      %1546 = vmatmul.mubr.bf16.gmra.mrb[0].mxu0 %v1462
      %v1547 = vpop.f32.mrb[0].mxu0
      %v1548 = vadd.f32 0.0, %v1547
      %v1549 = vpop.f32.mrb[0].mxu0
      %v1550 = vpop.f32.mrb[0].mxu0
      %v1551 = vadd.f32 0.0, %v1550
      %v1552 = vpop.f32.mrb[0].mxu0
      %1553 = vmatprep.mubr.bf16.mxu0 0
      %1554 = vmatmul.mubr.bf16.gmra.mrb[0].mxu0 %v1465
      %v1555 = vpop.f32.mrb[0].mxu0
      %v1556 = vadd.f32 0.0, %v1555
      %v1557 = vpop.f32.mrb[0].mxu0
      %v1558 = vpop.f32.mrb[0].mxu0
      %v1559 = vadd.f32 0.0, %v1558
      %v1560 = vpop.f32.mrb[0].mxu0
      %1561 = vmatprep.mubr.bf16.mxu0 0
      %1562 = vmatmul.mubr.bf16.gmra.mrb[0].mxu0 %v1468
      %v1563 = vpop.f32.mrb[0].mxu0
      %v1564 = vadd.f32 0.0, %v1563
      %v1565 = vpop.f32.mrb[0].mxu0
      %v1566 = vpop.f32.mrb[0].mxu0
      %v1567 = vadd.f32 0.0, %v1566
      %v1568 = vpop.f32.mrb[0].mxu0
      %1569 = vmatprep.mubr.bf16.mxu0 0
      %1570 = vmatmul.mubr.bf16.gmra.mrb[0].mxu0 %v1471
      %v1571 = vpop.f32.mrb[0].mxu0
      %v1572 = vadd.f32 0.0, %v1571
      %v1573 = vpop.f32.mrb[0].mxu0
      %v1574 = vpop.f32.mrb[0].mxu0
      %v1575 = vadd.f32 0.0, %v1574
      %v1576 = vpop.f32.mrb[0].mxu0
      %1577 = vmatprep.mubr.bf16.mxu0 0
      %1578 = vmatmul.mubr.bf16.gmra.mrb[0].mxu0 %v1474
      %v1579 = vpop.f32.mrb[0].mxu0
      %v1580 = vadd.f32 0.0, %v1579
      %v1581 = vpop.f32.mrb[0].mxu0
      %v1582 = vpop.f32.mrb[0].mxu0
      %v1583 = vadd.f32 0.0, %v1582
      %v1584 = vpop.f32.mrb[0].mxu0
      %1585 = vmatprep.mubr.bf16.mxu0 0
      %1586 = vmatmul.mubr.bf16.gmra.mrb[0].mxu0 %v1477
      %v1587 = vpop.f32.mrb[0].mxu0
      %v1588 = vadd.f32 0.0, %v1587
      %v1589 = vpop.f32.mrb[0].mxu0
      %v1590 = vpop.f32.mrb[0].mxu0
      %v1591 = vadd.f32 0.0, %v1590
      %v1592 = vpop.f32.mrb[0].mxu0
      %1593 = vmatprep.mubr.bf16.mxu0 0
      %1594 = vmatmul.mubr.bf16.gmra.mrb[0].mxu0 %v1480
      %v1595 = vpop.f32.mrb[0].mxu0
      %v1596 = vadd.f32 0.0, %v1595
      %v1597 = vpop.f32.mrb[0].mxu0
      %v1598 = vpop.f32.mrb[0].mxu0
      %v1599 = vadd.f32 0.0, %v1598
      %v1600 = vpop.f32.mrb[0].mxu0
      %1601 = vmatprep.mubr.bf16.mxu0 0
      %1602 = vmatmul.mubr.bf16.gmra.mrb[0].mxu0 %v1483
      %v1603 = vpop.f32.mrb[0].mxu0
      %v1604 = vadd.f32 0.0, %v1603
      %v1605 = vpop.f32.mrb[0].mxu0
      %v1606 = vpop.f32.mrb[0].mxu0
      %v1607 = vadd.f32 0.0, %v1606
      %v1608 = vpop.f32.mrb[0].mxu0
      %1609 = vmatprep.mubr.bf16.mxu0 0
      %1610 = vmatmul.mubr.bf16.gmra.mrb[0].mxu0 %v1486
      %v1611 = vpop.f32.mrb[0].mxu0
      %v1612 = vadd.f32 0.0, %v1611
      %v1613 = vpop.f32.mrb[0].mxu0
      %v1614 = vpop.f32.mrb[0].mxu0
      %v1615 = vadd.f32 0.0, %v1614
      %v1616 = vpop.f32.mrb[0].mxu0
      %1617 = vmatprep.mubr.bf16.mxu0 0
      %1618 = vmatmul.mubr.bf16.gmra.mrb[0].mxu0 %v1489
      %v1619 = vpop.f32.mrb[0].mxu0
      %v1620 = vadd.f32 0.0, %v1619
      %v1621 = vpop.f32.mrb[0].mxu0
      %v1622 = vpop.f32.mrb[0].mxu0
      %v1623 = vadd.f32 0.0, %v1622
      %v1624 = vpop.f32.mrb[0].mxu0
      %1625 = vmatprep.mubr.bf16.mxu0 0
      %1626 = vmatmul.mubr.bf16.gmra.mrb[0].mxu0 %v1492
      %v1627 = vpop.f32.mrb[0].mxu0
      %v1628 = vadd.f32 0.0, %v1627
      %v1629 = vpop.f32.mrb[0].mxu0
      %v1630 = vpop.f32.mrb[0].mxu0
      %v1631 = vadd.f32 0.0, %v1630
      %v1632 = vpop.f32.mrb[0].mxu0
      %1633 = vmatprep.mubr.bf16.mxu0 0
      %1634 = vmatmul.mubr.bf16.gmra.mrb[0].mxu0 %v1495
      %v1635 = vpop.f32.mrb[0].mxu0
      %v1636 = vadd.f32 0.0, %v1635
      %v1637 = vpop.f32.mrb[0].mxu0
      %v1638 = vpop.f32.mrb[0].mxu0
      %v1639 = vadd.f32 0.0, %v1638
      %v1640 = vpop.f32.mrb[0].mxu0
      %1641 = vmatprep.mubr.bf16.mxu0 0
      %1642 = vmatmul.mubr.bf16.gmra.mrb[0].mxu0 %v1498
      %v1643 = vpop.f32.mrb[0].mxu0
      %v1644 = vadd.f32 0.0, %v1643
      %v1645 = vpop.f32.mrb[0].mxu0
      %v1646 = vpop.f32.mrb[0].mxu0
      %v1647 = vadd.f32 0.0, %v1646
      %v1648 = vpop.f32.mrb[0].mxu0
      %1649 = vmatprep.mubr.bf16.mxu0 0
      %1650 = vmatmul.mubr.bf16.gmra.mrb[0].mxu0 %v1501
      %v1651 = vpop.f32.mrb[0].mxu0
      %v1652 = vadd.f32 0.0, %v1651
      %v1653 = vpop.f32.mrb[0].mxu0
      %v1654 = vpop.f32.mrb[0].mxu0
      %v1655 = vadd.f32 0.0, %v1654
      %v1656 = vpop.f32.mrb[0].mxu0
      %1657 = vmatprep.mubr.bf16.mxu0 0
      %1658 = vmatmul.mubr.bf16.gmra.mrb[0].mxu0 %v1504
      %v1659 = vpop.f32.mrb[0].mxu0
      %v1660 = vadd.f32 0.0, %v1659
      %v1661 = vpop.f32.mrb[0].mxu0
      %v1662 = vpop.f32.mrb[0].mxu0
      %v1663 = vadd.f32 0.0, %v1662
      %v1664 = vpop.f32.mrb[0].mxu0
      %1665 = vmatprep.mubr.bf16.mxu0 0
      %1666 = vmatmul.mubr.bf16.gmra.mrb[0].mxu0 %v1507
      %v1667 = vpop.f32.mrb[0].mxu0
      %v1668 = vadd.f32 0.0, %v1667
      %v1669 = vpop.f32.mrb[0].mxu0
      %v1670 = vpop.f32.mrb[0].mxu0
      %v1671 = vadd.f32 0.0, %v1670
      %v1672 = vpop.f32.mrb[0].mxu0
      %1673 = vdwg.mxu0
      %1674 = vst.msk [vmem:[%s208] sm:$0xff] %vm248, %v1548
      %1675 = vst.msk [vmem:[%s208 + $0x8] sm:$0xff] %vm248, %v1551
      %1676 = vst.msk [vmem:[%s208 + $0x10] sm:$0xff] %vm248, %v1556
      %1677 = vst.msk [vmem:[%s208 + $0x18] sm:$0xff] %vm248, %v1559
      %1678 = vst.msk [vmem:[%s208 + $0x20] sm:$0xff] %vm248, %v1564
      %1679 = vst.msk [vmem:[%s208 + $0x28] sm:$0xff] %vm248, %v1567
      %1680 = vst.msk [vmem:[%s208 + $0x30] sm:$0xff] %vm248, %v1572
      %1681 = vst.msk [vmem:[%s208 + $0x38] sm:$0xff] %vm248, %v1575
      %1682 = vst.msk [vmem:[%s208 + $0x40] sm:$0xff] %vm248, %v1580
      %1683 = vst.msk [vmem:[%s208 + $0x48] sm:$0xff] %vm248, %v1583
      %1684 = vst.msk [vmem:[%s208 + $0x50] sm:$0xff] %vm248, %v1588
      %1685 = vst.msk [vmem:[%s208 + $0x58] sm:$0xff] %vm248, %v1591
      %1686 = vst.msk [vmem:[%s208 + $0x60] sm:$0xff] %vm248, %v1596
      %1687 = vst.msk [vmem:[%s208 + $0x68] sm:$0xff] %vm248, %v1599
      %1688 = vst.msk [vmem:[%s208 + $0x70] sm:$0xff] %vm248, %v1604
      %1689 = vst.msk [vmem:[%s208 + $0x78] sm:$0xff] %vm248, %v1607
      %1690 = vst.msk [vmem:[%s208 + $0x80] sm:$0xff] %vm248, %v1612
      %1691 = vst.msk [vmem:[%s208 + $0x88] sm:$0xff] %vm248, %v1615
      %1692 = vst.msk [vmem:[%s208 + $0x90] sm:$0xff] %vm248, %v1620
      %1693 = vst.msk [vmem:[%s208 + $0x98] sm:$0xff] %vm248, %v1623
      %1694 = vst.msk [vmem:[%s208 + $0xa0] sm:$0xff] %vm248, %v1628
      %1695 = vst.msk [vmem:[%s208 + $0xa8] sm:$0xff] %vm248, %v1631
      %1696 = vst.msk [vmem:[%s208 + $0xb0] sm:$0xff] %vm248, %v1636
      %1697 = vst.msk [vmem:[%s208 + $0xb8] sm:$0xff] %vm248, %v1639
      %1698 = vst.msk [vmem:[%s208 + $0xc0] sm:$0xff] %vm248, %v1644
      %1699 = vst.msk [vmem:[%s208 + $0xc8] sm:$0xff] %vm248, %v1647
      %1700 = vst.msk [vmem:[%s208 + $0xd0] sm:$0xff] %vm248, %v1652
      %1701 = vst.msk [vmem:[%s208 + $0xd8] sm:$0xff] %vm248, %v1655
      %1702 = vst.msk [vmem:[%s208 + $0xe0] sm:$0xff] %vm248, %v1660
      %1703 = vst.msk [vmem:[%s208 + $0xe8] sm:$0xff] %vm248, %v1663
      %1704 = vst.msk [vmem:[%s208 + $0xf0] sm:$0xff] %vm248, %v1668
      %1705 = vst.msk [vmem:[%s208 + $0xf8] sm:$0xff] %vm248, %v1671
      %v1706 = vsel %vm248, %v1548, 0.0
      %v1707 = vsel %vm248, %v1551, 0.0
      %v1708 = vadd.f32 %v1706, %v1707
      %v1709 = vsel %vm248, %v1556, 0.0
      %v1710 = vadd.f32 %v1708, %v1709
      %v1711 = vsel %vm248, %v1559, 0.0
      %v1712 = vadd.f32 %v1710, %v1711
      %v1713 = vsel %vm248, %v1564, 0.0
      %v1714 = vadd.f32 %v1712, %v1713
      %v1715 = vsel %vm248, %v1567, 0.0
      %v1716 = vadd.f32 %v1714, %v1715
      %v1717 = vsel %vm248, %v1572, 0.0
      %v1718 = vadd.f32 %v1716, %v1717
      %v1719 = vsel %vm248, %v1575, 0.0
      %v1720 = vadd.f32 %v1718, %v1719
      %v1721 = vsel %vm248, %v1580, 0.0
      %v1722 = vadd.f32 %v1720, %v1721
      %v1723 = vsel %vm248, %v1583, 0.0
      %v1724 = vadd.f32 %v1722, %v1723
      %v1725 = vsel %vm248, %v1588, 0.0
      %v1726 = vadd.f32 %v1724, %v1725
      %v1727 = vsel %vm248, %v1591, 0.0
      %v1728 = vadd.f32 %v1726, %v1727
      %v1729 = vsel %vm248, %v1596, 0.0
      %v1730 = vadd.f32 %v1728, %v1729
      %v1731 = vsel %vm248, %v1599, 0.0
      %v1732 = vadd.f32 %v1730, %v1731
      %v1733 = vsel %vm248, %v1604, 0.0
      %v1734 = vadd.f32 %v1732, %v1733
      %v1735 = vsel %vm248, %v1607, 0.0
      %v1736 = vadd.f32 %v1734, %v1735
      %v1737 = vsel %vm248, %v1612, 0.0
      %v1738 = vadd.f32 %v1736, %v1737
      %v1739 = vsel %vm248, %v1615, 0.0
      %v1740 = vadd.f32 %v1738, %v1739
      %v1741 = vsel %vm248, %v1620, 0.0
      %v1742 = vadd.f32 %v1740, %v1741
      %v1743 = vsel %vm248, %v1623, 0.0
      %v1744 = vadd.f32 %v1742, %v1743
      %v1745 = vsel %vm248, %v1628, 0.0
      %v1746 = vadd.f32 %v1744, %v1745
      %v1747 = vsel %vm248, %v1631, 0.0
      %v1748 = vadd.f32 %v1746, %v1747
      %v1749 = vsel %vm248, %v1636, 0.0
      %v1750 = vadd.f32 %v1748, %v1749
      %v1751 = vsel %vm248, %v1639, 0.0
      %v1752 = vadd.f32 %v1750, %v1751
      %v1753 = vsel %vm248, %v1644, 0.0
      %v1754 = vadd.f32 %v1752, %v1753
      %v1755 = vsel %vm248, %v1647, 0.0
      %v1756 = vadd.f32 %v1754, %v1755
      %v1757 = vsel %vm248, %v1652, 0.0
      %v1758 = vadd.f32 %v1756, %v1757
      %v1759 = vsel %vm248, %v1655, 0.0
      %v1760 = vadd.f32 %v1758, %v1759
      %v1761 = vsel %vm248, %v1660, 0.0
      %v1762 = vadd.f32 %v1760, %v1761
      %v1763 = vsel %vm248, %v1663, 0.0
      %v1764 = vadd.f32 %v1762, %v1763
      %v1765 = vsel %vm248, %v1668, 0.0
      %v1766 = vadd.f32 %v1764, %v1765
      %v1767 = vsel %vm248, %v1671, 0.0
      %v1768 = vadd.f32 %v1766, %v1767
      %v1769 = vrot.slane %v1768, 4
      %v1770 = vadd.f32 %v1768, %v1769
      %v1771 = vrot.slane %v1770, 2
      %v1772 = vadd.f32 %v1770, %v1771
      %v1773 = vrot.slane %v1772, 1
      %v1774 = vadd.f32 %v1772, %v1773
      %1775 = vst.msk [vmem:[%s211] sm:$0x1] %vm257, %v1774
      %v1776 = vmul.f32 %v1548, %v1548
      %v1777 = vmul.f32 %v1551, %v1551
      %v1778 = vmul.f32 %v1556, %v1556
      %v1779 = vmul.f32 %v1559, %v1559
      %v1780 = vmul.f32 %v1564, %v1564
      %v1781 = vmul.f32 %v1567, %v1567
      %v1782 = vmul.f32 %v1572, %v1572
      %v1783 = vmul.f32 %v1575, %v1575
      %v1784 = vmul.f32 %v1580, %v1580
      %v1785 = vmul.f32 %v1583, %v1583
      %v1786 = vmul.f32 %v1588, %v1588
      %v1787 = vmul.f32 %v1591, %v1591
      %v1788 = vmul.f32 %v1596, %v1596
      %v1789 = vmul.f32 %v1599, %v1599
      %v1790 = vmul.f32 %v1604, %v1604
      %v1791 = vmul.f32 %v1607, %v1607
      %v1792 = vmul.f32 %v1612, %v1612
      %v1793 = vmul.f32 %v1615, %v1615
      %v1794 = vmul.f32 %v1620, %v1620
      %v1795 = vmul.f32 %v1623, %v1623
      %v1796 = vmul.f32 %v1628, %v1628
      %v1797 = vmul.f32 %v1631, %v1631
      %v1798 = vmul.f32 %v1636, %v1636
      %v1799 = vmul.f32 %v1639, %v1639
      %v1800 = vmul.f32 %v1644, %v1644
      %v1801 = vmul.f32 %v1647, %v1647
      %v1802 = vmul.f32 %v1652, %v1652
      %v1803 = vmul.f32 %v1655, %v1655
      %v1804 = vmul.f32 %v1660, %v1660
      %v1805 = vmul.f32 %v1663, %v1663
      %v1806 = vmul.f32 %v1668, %v1668
      %v1807 = vmul.f32 %v1671, %v1671
      %v1808 = vsel %vm248, %v1776, 0.0
      %v1809 = vsel %vm248, %v1777, 0.0
      %v1810 = vadd.f32 %v1808, %v1809
      %v1811 = vsel %vm248, %v1778, 0.0
      %v1812 = vadd.f32 %v1810, %v1811
      %v1813 = vsel %vm248, %v1779, 0.0
      %v1814 = vadd.f32 %v1812, %v1813
      %v1815 = vsel %vm248, %v1780, 0.0
      %v1816 = vadd.f32 %v1814, %v1815
      %v1817 = vsel %vm248, %v1781, 0.0
      %v1818 = vadd.f32 %v1816, %v1817
      %v1819 = vsel %vm248, %v1782, 0.0
      %v1820 = vadd.f32 %v1818, %v1819
      %v1821 = vsel %vm248, %v1783, 0.0
      %v1822 = vadd.f32 %v1820, %v1821
      %v1823 = vsel %vm248, %v1784, 0.0
      %v1824 = vadd.f32 %v1822, %v1823
      %v1825 = vsel %vm248, %v1785, 0.0
      %v1826 = vadd.f32 %v1824, %v1825
      %v1827 = vsel %vm248, %v1786, 0.0
      %v1828 = vadd.f32 %v1826, %v1827
      %v1829 = vsel %vm248, %v1787, 0.0
      %v1830 = vadd.f32 %v1828, %v1829
      %v1831 = vsel %vm248, %v1788, 0.0
      %v1832 = vadd.f32 %v1830, %v1831
      %v1833 = vsel %vm248, %v1789, 0.0
      %v1834 = vadd.f32 %v1832, %v1833
      %v1835 = vsel %vm248, %v1790, 0.0
      %v1836 = vadd.f32 %v1834, %v1835
      %v1837 = vsel %vm248, %v1791, 0.0
      %v1838 = vadd.f32 %v1836, %v1837
      %v1839 = vsel %vm248, %v1792, 0.0
      %v1840 = vadd.f32 %v1838, %v1839
      %v1841 = vsel %vm248, %v1793, 0.0
      %v1842 = vadd.f32 %v1840, %v1841
      %v1843 = vsel %vm248, %v1794, 0.0
      %v1844 = vadd.f32 %v1842, %v1843
      %v1845 = vsel %vm248, %v1795, 0.0
      %v1846 = vadd.f32 %v1844, %v1845
      %v1847 = vsel %vm248, %v1796, 0.0
      %v1848 = vadd.f32 %v1846, %v1847
      %v1849 = vsel %vm248, %v1797, 0.0
      %v1850 = vadd.f32 %v1848, %v1849
      %v1851 = vsel %vm248, %v1798, 0.0
      %v1852 = vadd.f32 %v1850, %v1851
      %v1853 = vsel %vm248, %v1799, 0.0
      %v1854 = vadd.f32 %v1852, %v1853
      %v1855 = vsel %vm248, %v1800, 0.0
      %v1856 = vadd.f32 %v1854, %v1855
      %v1857 = vsel %vm248, %v1801, 0.0
      %v1858 = vadd.f32 %v1856, %v1857
      %v1859 = vsel %vm248, %v1802, 0.0
      %v1860 = vadd.f32 %v1858, %v1859
      %v1861 = vsel %vm248, %v1803, 0.0
      %v1862 = vadd.f32 %v1860, %v1861
      %v1863 = vsel %vm248, %v1804, 0.0
      %v1864 = vadd.f32 %v1862, %v1863
      %v1865 = vsel %vm248, %v1805, 0.0
      %v1866 = vadd.f32 %v1864, %v1865
      %v1867 = vsel %vm248, %v1806, 0.0
      %v1868 = vadd.f32 %v1866, %v1867
      %v1869 = vsel %vm248, %v1807, 0.0
      %v1870 = vadd.f32 %v1868, %v1869
      %v1871 = vrot.slane %v1870, 4
      %v1872 = vadd.f32 %v1870, %v1871
      %v1873 = vrot.slane %v1872, 2
      %v1874 = vadd.f32 %v1872, %v1873
      %v1875 = vrot.slane %v1874, 1
      %v1876 = vadd.f32 %v1874, %v1875
      %1877 = vst.msk [vmem:[%s214] sm:$0x1] %vm257, %v1876
      %p1878 = scmp.lt.s32.totalorder %s16, 1
      %s1879 = scalar_select %p1878, %s16, 1
      %s1880 = smul.addr %s1879, 32
      %s1881 = smul.addr %s1880, 8
      %s1882 = scalar_lea.vmem %s2, %s1881
      %p1883 = scmp.lt.s32.totalorder %s16, 1
      %s1884 = scalar_select %p1883, %s16, 1
      %s1885 = scalar_lea.vmem %s3, %s1884
      %p1886 = scmp.lt.s32.totalorder %s16, 1
      %s1887 = scalar_select %p1886, %s16, 1
      %s1888 = scalar_lea.vmem %s4, %s1887
      // Predicated region
      $region29: #{basic_block_forward.3} parent=27 // pred_check
        %p1889 = pneg %p81
      $region30: #{basic_block_forward.3} parent=27 // pred_check_branch
        %1891 = sbr.rel (%p1889) target = $region32
      $region31: #{basic_block_forward.3} parent=27 // pred_region
        _
      $region32: #{basic_block_forward.3} parent=27 // pred_fallthru
        _
      // Predicated region
      $region33: #{basic_block_forward.3} parent=27 // pred_check
        %p1892 = pneg %p107
      $region34: #{basic_block_forward.3} parent=27 // pred_check_branch
        %1894 = sbr.rel (%p1892) target = $region36
      $region35: #{basic_block_forward.3} parent=27 // pred_region
        _
      $region36: #{basic_block_forward.3} parent=27 // pred_fallthru
        _
      // Predicated region
      $region37: #{basic_block_forward.3} parent=27 // pred_check
        %p1895 = pneg %p133
      $region38: #{basic_block_forward.3} parent=27 // pred_check_branch
        %1897 = sbr.rel (%p1895) target = $region40
      $region39: #{basic_block_forward.3} parent=27 // pred_region
        _
      $region40: #{basic_block_forward.3} parent=27 // pred_fallthru
        _
    $region28: #{basic_block_forward.3} parent=5 // pred_fallthru
      _
    %p1898 = scmp.le.s32.totalorder 2, %s11
    // Predicated region
    $region41: #{basic_block_forward.3} parent=5 // pred_check
      %p1899 = pneg %p1898
    $region42: #{basic_block_forward.3} parent=5 // pred_check_branch
      %1901 = sbr.rel (%p1899) target = $region44
    $region43: #{basic_block_forward.3} parent=5 // pred_region
      %s1902 = ssub.s32 %s11, 2
      // Predicated region
      $region45: #{basic_block_forward.3} parent=43 // pred_check
        %p1903 = pneg %p87
      $region46: #{basic_block_forward.3} parent=43 // pred_check_branch
        %1905 = sbr.rel (%p1903) target = $region48
      $region47: #{basic_block_forward.3} parent=43 // pred_region
        %p1906 = scmp.lt.s32.totalorder %s17, 1
        %s1907 = scalar_select %p1906, %s17, 1
        %s1908 = smul.addr %s1907, 32
        %s1909 = smul.addr %s1908, 8
        %s1910 = scalar_lea.vmem %s2, %s1909
      $region48: #{basic_block_forward.3} parent=43 // pred_fallthru
        _
      // Predicated region
      $region49: #{basic_block_forward.3} parent=43 // pred_check
        %p1911 = pneg %p113
      $region50: #{basic_block_forward.3} parent=43 // pred_check_branch
        %1913 = sbr.rel (%p1911) target = $region52
      $region51: #{basic_block_forward.3} parent=43 // pred_region
        %p1914 = scmp.lt.s32.totalorder %s17, 1
        %s1915 = scalar_select %p1914, %s17, 1
        %s1916 = scalar_lea.vmem %s3, %s1915
      $region52: #{basic_block_forward.3} parent=43 // pred_fallthru
        _
      // Predicated region
      $region53: #{basic_block_forward.3} parent=43 // pred_check
        %p1917 = pneg %p139
      $region54: #{basic_block_forward.3} parent=43 // pred_check_branch
        %1919 = sbr.rel (%p1917) target = $region56
      $region55: #{basic_block_forward.3} parent=43 // pred_region
        %p1920 = scmp.lt.s32.totalorder %s17, 1
        %s1921 = scalar_select %p1920, %s17, 1
        %s1922 = scalar_lea.vmem %s4, %s1921
      $region56: #{basic_block_forward.3} parent=43 // pred_fallthru
        _
    $region44: #{basic_block_forward.3} parent=5 // pred_fallthru
      _
  $region6: #{basic_block_forward.3} parent=0 // loop_footer
    %s15 = sadd.s32 1, %s11
  $region7: #{basic_block_forward.3} parent=0 // loop_footer_branch
    %10 = sbr.rel target = $region3
  $region8: #{basic_block_forward.3} parent=0 // loop_exit
    _

// kernel: basic_block_forward.4
$region0: #{basic_block_forward.4}
  #allocation0 [shape = 'u32[]', space=smem, size = 0x4, offset = 0x4, fixed_abs, tag = 'smem constant byte address 0x4 - core index']
  #allocation1 [shape = 'u32[144,128]{1,0:T(1,128)}', space=vmem, size = 0x12000, scoped, tag = 'internal scratch']
  #allocation2 [shape = 'f32[18,18,4]{2,1,0:T(8,128)}', space=vmem, size = 0x36000, scoped, tag = 'scratch operand']
  #allocation3 [shape = 'bf16[256,36]{1,0:T(16,128)(2,1)}', space=vmem, size = 0x10000, scoped, tag = 'scratch operand']
  %s0 = inlined_call_operand.vmem [shape: f32[2,256,4], index: 0, kind: input, shape index: {}]
  %s1 = inlined_call_operand.vmem [shape: f32[1,4], index: 1, kind: input, shape index: {}]
  %s2 = inlined_call_operand.vmem [shape: f32[1,4], index: 2, kind: input, shape index: {}]
  %s3 = inlined_call_operand.vmem [shape: bf16[36,4], index: 3, kind: input, shape index: {}]
  %s4 = inlined_call_operand.vmem [shape: f32[2,256,4], index: 4, kind: output, shape index: {0}]
  %s5 = inlined_call_operand.vmem [shape: f32[2,1,4], index: 5, kind: output, shape index: {1}]
  %s6 = inlined_call_operand.vmem [shape: f32[2,1,4], index: 6, kind: output, shape index: {2}]
  %7 = xla_tuple %s4, %s5, %s6
  %s8 = sld [smem:[#allocation0]]
  $region65: #{basic_block_forward.4} parent=0
    _
  %s10 = ssub.s32 1, %s8
  %s11 = scalar_select 0, %s10, %s8
  loop: start=0, step=1, limit=4
  $region2: #{basic_block_forward.4} parent=0 // loop_pre_header
    _
  $region3: #{basic_block_forward.4} parent=0 // loop_header
    %s13 = sphi 0, %s17
    %p14 = scmp.ge.s32.totalorder %s13, 4
    %s23 = sphi 0, %s25
    %s26 = sphi 0, %s23
    %s27 = sphi 0, %s26
    %s43 = sphi 0, %s27
    %s47 = sphi 0, %s47
    %s49 = sphi 0, %s47
    %s50 = sphi 0, %s49
    %s64 = sphi 0, %s50
    %s68 = sphi 0, %s68
    %s70 = sphi 0, %s68
    %s71 = sphi 0, %s70
    %s85 = sphi 0, %s71
    %s89 = sphi 0, %s89
    %s91 = sphi 0, %s89
    %s92 = sphi 0, %s91
    %s106 = sphi 0, %s92
    %s112 = sphi 0, %s114
    %s115 = sphi 0, %s112
    %s116 = sphi 0, %s115
    %s132 = sphi 0, %s116
    %s138 = sphi 0, %s140
    %s141 = sphi 0, %s138
    %s142 = sphi 0, %s141
    %s158 = sphi 0, %s142
    %s164 = sphi 0, %s166
    %s167 = sphi 0, %s164
    %s168 = sphi 0, %s167
    %s184 = sphi 0, %s168
  $region4: #{basic_block_forward.4} parent=0 // loop_header_branch
    %16 = sbr.rel (%p14) target = $region8
  $region5: #{basic_block_forward.4} parent=0 // loop_body
    %s18 = ssub.s32 %s13, 1
    %s19 = ssub.s32 %s13, 2
    %s20 = sadd.s32 %s13, 1
    %s21 = ssub.s32 %s13, %s20
    %p22 = scmp.eq.s32.totalorder %s21, 0
    %s24 = sadd.s32 %s23, 1
    %s25 = scalar_select %p22, %s23, %s24
    %p28 = pneg %p22
    %p29 = scmp.eq.s32.totalorder %s13, 1
    %p30 = por %p28, %p29
    %p31 = scmp.ne.s32.totalorder %s23, %s26
    %p32 = scmp.eq.s32.totalorder %s13, 0
    %p33 = por %p31, %p32
    %p34 = scmp.ne.s32.totalorder %s23, %s26
    %p35 = scmp.eq.s32.totalorder %s18, 1
    %p36 = por %p34, %p35
    %p37 = scmp.ne.s32.totalorder %s26, %s27
    %p38 = scmp.eq.s32.totalorder %s18, 0
    %p39 = por %p37, %p38
    %p40 = scmp.ne.s32.totalorder %s26, %s27
    %p41 = scmp.eq.s32.totalorder %s19, 1
    %p42 = por %p40, %p41
    %p44 = scmp.ne.s32.totalorder %s27, %s43
    %p45 = scmp.eq.s32.totalorder %s19, 0
    %p46 = por %p44, %p45
    %s48 = sadd.s32 %s47, 1
    %p51 = scmp.eq.s32.totalorder %s13, 1
    %p52 = scmp.ne.s32.totalorder %s47, %s49
    %p53 = scmp.eq.s32.totalorder %s13, 0
    %p54 = por %p52, %p53
    %p55 = scmp.ne.s32.totalorder %s47, %s49
    %p56 = scmp.eq.s32.totalorder %s18, 1
    %p57 = por %p55, %p56
    %p58 = scmp.ne.s32.totalorder %s49, %s50
    %p59 = scmp.eq.s32.totalorder %s18, 0
    %p60 = por %p58, %p59
    %p61 = scmp.ne.s32.totalorder %s49, %s50
    %p62 = scmp.eq.s32.totalorder %s19, 1
    %p63 = por %p61, %p62
    %p65 = scmp.ne.s32.totalorder %s50, %s64
    %p66 = scmp.eq.s32.totalorder %s19, 0
    %p67 = por %p65, %p66
    %s69 = sadd.s32 %s68, 1
    %p72 = scmp.eq.s32.totalorder %s13, 1
    %p73 = scmp.ne.s32.totalorder %s68, %s70
    %p74 = scmp.eq.s32.totalorder %s13, 0
    %p75 = por %p73, %p74
    %p76 = scmp.ne.s32.totalorder %s68, %s70
    %p77 = scmp.eq.s32.totalorder %s18, 1
    %p78 = por %p76, %p77
    %p79 = scmp.ne.s32.totalorder %s70, %s71
    %p80 = scmp.eq.s32.totalorder %s18, 0
    %p81 = por %p79, %p80
    %p82 = scmp.ne.s32.totalorder %s70, %s71
    %p83 = scmp.eq.s32.totalorder %s19, 1
    %p84 = por %p82, %p83
    %p86 = scmp.ne.s32.totalorder %s71, %s85
    %p87 = scmp.eq.s32.totalorder %s19, 0
    %p88 = por %p86, %p87
    %s90 = sadd.s32 %s89, 1
    %p93 = scmp.eq.s32.totalorder %s13, 1
    %p94 = scmp.ne.s32.totalorder %s89, %s91
    %p95 = scmp.eq.s32.totalorder %s13, 0
    %p96 = por %p94, %p95
    %p97 = scmp.ne.s32.totalorder %s89, %s91
    %p98 = scmp.eq.s32.totalorder %s18, 1
    %p99 = por %p97, %p98
    %p100 = scmp.ne.s32.totalorder %s91, %s92
    %p101 = scmp.eq.s32.totalorder %s18, 0
    %p102 = por %p100, %p101
    %p103 = scmp.ne.s32.totalorder %s91, %s92
    %p104 = scmp.eq.s32.totalorder %s19, 1
    %p105 = por %p103, %p104
    %p107 = scmp.ne.s32.totalorder %s92, %s106
    %p108 = scmp.eq.s32.totalorder %s19, 0
    %p109 = por %p107, %p108
    %s110 = ssub.s32 %s13, %s20
    %p111 = scmp.eq.s32.totalorder %s110, 0
    %s113 = sadd.s32 %s112, 1
    %s114 = scalar_select %p111, %s112, %s113
    %p117 = pneg %p111
    %p118 = scmp.eq.s32.totalorder %s13, 1
    %p119 = por %p117, %p118
    %p120 = scmp.ne.s32.totalorder %s112, %s115
    %p121 = scmp.eq.s32.totalorder %s13, 0
    %p122 = por %p120, %p121
    %p123 = scmp.ne.s32.totalorder %s112, %s115
    %p124 = scmp.eq.s32.totalorder %s18, 1
    %p125 = por %p123, %p124
    %p126 = scmp.ne.s32.totalorder %s115, %s116
    %p127 = scmp.eq.s32.totalorder %s18, 0
    %p128 = por %p126, %p127
    %p129 = scmp.ne.s32.totalorder %s115, %s116
    %p130 = scmp.eq.s32.totalorder %s19, 1
    %p131 = por %p129, %p130
    %p133 = scmp.ne.s32.totalorder %s116, %s132
    %p134 = scmp.eq.s32.totalorder %s19, 0
    %p135 = por %p133, %p134
    %s136 = ssub.s32 %s13, %s20
    %p137 = scmp.eq.s32.totalorder %s136, 0
    %s139 = sadd.s32 %s138, 1
    %s140 = scalar_select %p137, %s138, %s139
    %p143 = pneg %p137
    %p144 = scmp.eq.s32.totalorder %s13, 1
    %p145 = por %p143, %p144
    %p146 = scmp.ne.s32.totalorder %s138, %s141
    %p147 = scmp.eq.s32.totalorder %s13, 0
    %p148 = por %p146, %p147
    %p149 = scmp.ne.s32.totalorder %s138, %s141
    %p150 = scmp.eq.s32.totalorder %s18, 1
    %p151 = por %p149, %p150
    %p152 = scmp.ne.s32.totalorder %s141, %s142
    %p153 = scmp.eq.s32.totalorder %s18, 0
    %p154 = por %p152, %p153
    %p155 = scmp.ne.s32.totalorder %s141, %s142
    %p156 = scmp.eq.s32.totalorder %s19, 1
    %p157 = por %p155, %p156
    %p159 = scmp.ne.s32.totalorder %s142, %s158
    %p160 = scmp.eq.s32.totalorder %s19, 0
    %p161 = por %p159, %p160
    %s162 = ssub.s32 %s13, %s20
    %p163 = scmp.eq.s32.totalorder %s162, 0
    %s165 = sadd.s32 %s164, 1
    %s166 = scalar_select %p163, %s164, %s165
    %p169 = pneg %p163
    %p170 = scmp.eq.s32.totalorder %s13, 1
    %p171 = por %p169, %p170
    %p172 = scmp.ne.s32.totalorder %s164, %s167
    %p173 = scmp.eq.s32.totalorder %s13, 0
    %p174 = por %p172, %p173
    %p175 = scmp.ne.s32.totalorder %s164, %s167
    %p176 = scmp.eq.s32.totalorder %s18, 1
    %p177 = por %p175, %p176
    %p178 = scmp.ne.s32.totalorder %s167, %s168
    %p179 = scmp.eq.s32.totalorder %s18, 0
    %p180 = por %p178, %p179
    %p181 = scmp.ne.s32.totalorder %s167, %s168
    %p182 = scmp.eq.s32.totalorder %s19, 1
    %p183 = por %p181, %p182
    %p185 = scmp.ne.s32.totalorder %s168, %s184
    %p186 = scmp.eq.s32.totalorder %s19, 0
    %p187 = por %p185, %p186
    %p188 = scmp.le.s32.totalorder 1, %s13
    %p189 = scmp.lt.s32.totalorder %s13, 3
    %p190 = pnand %p188, %p189
    %p191 = pneg %p190
    // Predicated region
    $region9: #{basic_block_forward.4} parent=5 // pred_check
      _
    $region10: #{basic_block_forward.4} parent=5 // pred_check_branch
      %193 = sbr.rel (%p190) target = $region12
    $region11: #{basic_block_forward.4} parent=5 // pred_region
      %s194 = ssub.s32 %s13, 1
      // Predicated region
      $region13: #{basic_block_forward.4} parent=11 // pred_check
        %p195 = pneg %p60
      $region14: #{basic_block_forward.4} parent=11 // pred_check_branch
        %197 = sbr.rel (%p195) target = $region16
      $region15: #{basic_block_forward.4} parent=11 // pred_region
        _
      $region16: #{basic_block_forward.4} parent=11 // pred_fallthru
        _
      // Predicated region
      $region17: #{basic_block_forward.4} parent=11 // pred_check
        %p198 = pneg %p81
      $region18: #{basic_block_forward.4} parent=11 // pred_check_branch
        %200 = sbr.rel (%p198) target = $region20
      $region19: #{basic_block_forward.4} parent=11 // pred_region
        _
      $region20: #{basic_block_forward.4} parent=11 // pred_fallthru
        _
      // Predicated region
      $region21: #{basic_block_forward.4} parent=11 // pred_check
        %p201 = pneg %p102
      $region22: #{basic_block_forward.4} parent=11 // pred_check_branch
        %203 = sbr.rel (%p201) target = $region24
      $region23: #{basic_block_forward.4} parent=11 // pred_region
        _
      $region24: #{basic_block_forward.4} parent=11 // pred_fallthru
        _
    $region12: #{basic_block_forward.4} parent=5 // pred_fallthru
      _
    %p204 = scmp.lt.s32.totalorder %s13, 2
    // Predicated region
    $region25: #{basic_block_forward.4} parent=5 // pred_check
      %p205 = pneg %p204
    $region26: #{basic_block_forward.4} parent=5 // pred_check_branch
      %207 = sbr.rel (%p205) target = $region28
    $region27: #{basic_block_forward.4} parent=5 // pred_region
      // Predicated region
      $region29: #{basic_block_forward.4} parent=27 // pred_check
        %p208 = pneg %p33
      $region30: #{basic_block_forward.4} parent=27 // pred_check_branch
        %210 = sbr.rel (%p208) target = $region32
      $region31: #{basic_block_forward.4} parent=27 // pred_region
        %p211 = scmp.lt.s32.totalorder %s13, 1
        %s212 = scalar_select %p211, %s13, 1
        %s213 = smul.addr %s212, 32
        %s214 = smul.addr %s213, 8
        %s215 = scalar_lea.vmem %s0, %s214
      $region32: #{basic_block_forward.4} parent=27 // pred_fallthru
        _
    $region28: #{basic_block_forward.4} parent=5 // pred_fallthru
      _
    %p216 = scmp.le.s32.totalorder 1, %s13
    %p217 = scmp.lt.s32.totalorder %s13, 3
    %p218 = pnand %p216, %p217
    %p219 = pneg %p218
    // Predicated region
    $region33: #{basic_block_forward.4} parent=5 // pred_check
      _
    $region34: #{basic_block_forward.4} parent=5 // pred_check_branch
      %221 = sbr.rel (%p218) target = $region36
    $region35: #{basic_block_forward.4} parent=5 // pred_region
      %s222 = ssub.s32 %s13, 1
      %p223 = scmp.lt.s32.totalorder %s18, 1
      %s224 = scalar_select %p223, %s18, 1
      %s225 = smul.addr %s224, 32
      %s226 = smul.addr %s225, 8
      %s227 = scalar_lea.vmem %s0, %s226
      %p228 = pneg %p39
      %p229 = pneg %p36
      %p230 = pneg %p60
      %p231 = pneg %p57
      %p232 = pneg %p81
      %p233 = pneg %p78
      %p234 = pneg %p102
      %p235 = pneg %p99
      %p236 = pneg %p128
      %p237 = pneg %p125
      %p238 = scmp.lt.s32.totalorder %s18, 1
      %s239 = scalar_select %p238, %s18, 1
      %s240 = smul.addr %s239, 32
      %s241 = smul.addr %s240, 8
      %s242 = scalar_lea.vmem %s4, %s241
      %p243 = pneg %p154
      %p244 = pneg %p151
      %p245 = scmp.lt.s32.totalorder %s18, 1
      %s246 = scalar_select %p245, %s18, 1
      %s247 = scalar_lea.vmem %s5, %s246
      %p248 = pneg %p180
      %p249 = pneg %p177
      %p250 = scmp.lt.s32.totalorder %s18, 1
      %s251 = scalar_select %p250, %s18, 1
      %s252 = scalar_lea.vmem %s6, %s251
      %p253 = scmp.lt.s32.totalorder %s18, 1
      %s254 = scalar_select %p253, %s18, 1
      %s255 = smul.addr %s254, 32
      %s256 = smul.addr %s255, 8
      %s257 = scalar_lea.vmem %s0, %s256
      %p258 = scmp.lt.s32.totalorder %s18, 1
      %s259 = scalar_select %p258, %s18, 1
      %s260 = smul.addr %s259, 32
      %s261 = smul.addr %s260, 8
      %s262 = scalar_lea.vmem %s4, %s261
      %p263 = scmp.lt.s32.totalorder %s18, 1
      %s264 = scalar_select %p263, %s18, 1
      %s265 = scalar_lea.vmem %s5, %s264
      %p266 = scmp.lt.s32.totalorder %s18, 1
      %s267 = scalar_select %p266, %s18, 1
      %s268 = scalar_lea.vmem %s6, %s267
      %v270 = vld [vmem:[%s257] sm:$0xff]
      %v271 = vld [vmem:[%s257 + $0x8] sm:$0xff]
      %v272 = vld [vmem:[%s257 + $0x10] sm:$0xff]
      %v273 = vld [vmem:[%s257 + $0x18] sm:$0xff]
      %v274 = vld [vmem:[%s257 + $0x20] sm:$0xff]
      %v275 = vld [vmem:[%s257 + $0x28] sm:$0xff]
      %v276 = vld [vmem:[%s257 + $0x30] sm:$0xff]
      %v277 = vld [vmem:[%s257 + $0x38] sm:$0xff]
      %v278 = vld [vmem:[%s257 + $0x40] sm:$0xff]
      %v279 = vld [vmem:[%s257 + $0x48] sm:$0xff]
      %v280 = vld [vmem:[%s257 + $0x50] sm:$0xff]
      %v281 = vld [vmem:[%s257 + $0x58] sm:$0xff]
      %v282 = vld [vmem:[%s257 + $0x60] sm:$0xff]
      %v283 = vld [vmem:[%s257 + $0x68] sm:$0xff]
      %v284 = vld [vmem:[%s257 + $0x70] sm:$0xff]
      %v285 = vld [vmem:[%s257 + $0x78] sm:$0xff]
      %v286 = vld [vmem:[%s257 + $0x80] sm:$0xff]
      %v287 = vld [vmem:[%s257 + $0x88] sm:$0xff]
      %v288 = vld [vmem:[%s257 + $0x90] sm:$0xff]
      %v289 = vld [vmem:[%s257 + $0x98] sm:$0xff]
      %v290 = vld [vmem:[%s257 + $0xa0] sm:$0xff]
      %v291 = vld [vmem:[%s257 + $0xa8] sm:$0xff]
      %v292 = vld [vmem:[%s257 + $0xb0] sm:$0xff]
      %v293 = vld [vmem:[%s257 + $0xb8] sm:$0xff]
      %v294 = vld [vmem:[%s257 + $0xc0] sm:$0xff]
      %v295 = vld [vmem:[%s257 + $0xc8] sm:$0xff]
      %v296 = vld [vmem:[%s257 + $0xd0] sm:$0xff]
      %v297 = vld [vmem:[%s257 + $0xd8] sm:$0xff]
      %v298 = vld [vmem:[%s257 + $0xe0] sm:$0xff]
      %v299 = vld [vmem:[%s257 + $0xe8] sm:$0xff]
      %v300 = vld [vmem:[%s257 + $0xf0] sm:$0xff]
      %v301 = vld [vmem:[%s257 + $0xf8] sm:$0xff]
      %v302 = vld [vmem:[%s1] sm:$0x1]
      %v304 = vlaneseq
      %v305 = vshrl.u32 %v304, 7
      %v306 = vsub.s32 0, %v305
      %v307 = vrot.slane %v302, %v306
      %v309 = vmul.f32 %v270, %v307
      %v310 = vmul.f32 %v271, %v307
      %v311 = vmul.f32 %v272, %v307
      %v312 = vmul.f32 %v273, %v307
      %v313 = vmul.f32 %v274, %v307
      %v314 = vmul.f32 %v275, %v307
      %v315 = vmul.f32 %v276, %v307
      %v316 = vmul.f32 %v277, %v307
      %v317 = vmul.f32 %v278, %v307
      %v318 = vmul.f32 %v279, %v307
      %v319 = vmul.f32 %v280, %v307
      %v320 = vmul.f32 %v281, %v307
      %v321 = vmul.f32 %v282, %v307
      %v322 = vmul.f32 %v283, %v307
      %v323 = vmul.f32 %v284, %v307
      %v324 = vmul.f32 %v285, %v307
      %v325 = vmul.f32 %v286, %v307
      %v326 = vmul.f32 %v287, %v307
      %v327 = vmul.f32 %v288, %v307
      %v328 = vmul.f32 %v289, %v307
      %v329 = vmul.f32 %v290, %v307
      %v330 = vmul.f32 %v291, %v307
      %v331 = vmul.f32 %v292, %v307
      %v332 = vmul.f32 %v293, %v307
      %v333 = vmul.f32 %v294, %v307
      %v334 = vmul.f32 %v295, %v307
      %v335 = vmul.f32 %v296, %v307
      %v336 = vmul.f32 %v297, %v307
      %v337 = vmul.f32 %v298, %v307
      %v338 = vmul.f32 %v299, %v307
      %v339 = vmul.f32 %v300, %v307
      %v340 = vmul.f32 %v301, %v307
      %v341 = vld [vmem:[%s2] sm:$0x1]
      %v343 = vlaneseq
      %v344 = vshrl.u32 %v343, 7
      %v345 = vsub.s32 0, %v344
      %v346 = vrot.slane %v341, %v345
      %v348 = vadd.f32 %v309, %v346
      %v349 = vadd.f32 %v310, %v346
      %v350 = vadd.f32 %v311, %v346
      %v351 = vadd.f32 %v312, %v346
      %v352 = vadd.f32 %v313, %v346
      %v353 = vadd.f32 %v314, %v346
      %v354 = vadd.f32 %v315, %v346
      %v355 = vadd.f32 %v316, %v346
      %v356 = vadd.f32 %v317, %v346
      %v357 = vadd.f32 %v318, %v346
      %v358 = vadd.f32 %v319, %v346
      %v359 = vadd.f32 %v320, %v346
      %v360 = vadd.f32 %v321, %v346
      %v361 = vadd.f32 %v322, %v346
      %v362 = vadd.f32 %v323, %v346
      %v363 = vadd.f32 %v324, %v346
      %v364 = vadd.f32 %v325, %v346
      %v365 = vadd.f32 %v326, %v346
      %v366 = vadd.f32 %v327, %v346
      %v367 = vadd.f32 %v328, %v346
      %v368 = vadd.f32 %v329, %v346
      %v369 = vadd.f32 %v330, %v346
      %v370 = vadd.f32 %v331, %v346
      %v371 = vadd.f32 %v332, %v346
      %v372 = vadd.f32 %v333, %v346
      %v373 = vadd.f32 %v334, %v346
      %v374 = vadd.f32 %v335, %v346
      %v375 = vadd.f32 %v336, %v346
      %v376 = vadd.f32 %v337, %v346
      %v377 = vadd.f32 %v338, %v346
      %v378 = vadd.f32 %v339, %v346
      %v379 = vadd.f32 %v340, %v346
      %v380 = vmax.f32 %v348, 0.0
      %v381 = vmax.f32 %v349, 0.0
      %v382 = vmax.f32 %v350, 0.0
      %v383 = vmax.f32 %v351, 0.0
      %v384 = vmax.f32 %v352, 0.0
      %v385 = vmax.f32 %v353, 0.0
      %v386 = vmax.f32 %v354, 0.0
      %v387 = vmax.f32 %v355, 0.0
      %v388 = vmax.f32 %v356, 0.0
      %v389 = vmax.f32 %v357, 0.0
      %v390 = vmax.f32 %v358, 0.0
      %v391 = vmax.f32 %v359, 0.0
      %v392 = vmax.f32 %v360, 0.0
      %v393 = vmax.f32 %v361, 0.0
      %v394 = vmax.f32 %v362, 0.0
      %v395 = vmax.f32 %v363, 0.0
      %v396 = vmax.f32 %v364, 0.0
      %v397 = vmax.f32 %v365, 0.0
      %v398 = vmax.f32 %v366, 0.0
      %v399 = vmax.f32 %v367, 0.0
      %v400 = vmax.f32 %v368, 0.0
      %v401 = vmax.f32 %v369, 0.0
      %v402 = vmax.f32 %v370, 0.0
      %v403 = vmax.f32 %v371, 0.0
      %v404 = vmax.f32 %v372, 0.0
      %v405 = vmax.f32 %v373, 0.0
      %v406 = vmax.f32 %v374, 0.0
      %v407 = vmax.f32 %v375, 0.0
      %v408 = vmax.f32 %v376, 0.0
      %v409 = vmax.f32 %v377, 0.0
      %v410 = vmax.f32 %v378, 0.0
      %v411 = vmax.f32 %v379, 0.0
      %vm412 = vcmask 31744
      %413 = vst.msk [vmem:[#allocation2] sm:$0xff] %vm412, 0.0
      %414 = vst.msk [vmem:[#allocation2 + $0x8] sm:$0xff] %vm412, 0.0
      %vm415 = vcmask 25600
      %416 = vst.msk [vmem:[#allocation2 + $0x10] sm:$0x3] %vm415, 0.0
      %s417 = scalar_lea.vmem [#allocation2], 408
      %418 = vst.msk [vmem:[%s417] sm:$0xff] %vm412, 0.0
      %419 = vst.msk [vmem:[%s417 + $0x8] sm:$0xff] %vm412, 0.0
      %420 = vst.msk [vmem:[%s417 + $0x10] sm:$0x3] %vm415, 0.0
      %vm421 = vcmask 24576
      %422 = vst.msk [vmem:[#allocation2] sm:$0x1] %vm421, 0.0
      %423 = vst.msk [vmem:[#allocation2 + $0x18] sm:$0x1] %vm421, 0.0
      %424 = vst.msk [vmem:[#allocation2 + $0x30] sm:$0x1] %vm421, 0.0
      %425 = vst.msk [vmem:[#allocation2 + $0x48] sm:$0x1] %vm421, 0.0
      %426 = vst.msk [vmem:[#allocation2 + $0x60] sm:$0x1] %vm421, 0.0
      %427 = vst.msk [vmem:[#allocation2 + $0x78] sm:$0x1] %vm421, 0.0
      %428 = vst.msk [vmem:[#allocation2 + $0x90] sm:$0x1] %vm421, 0.0
      %429 = vst.msk [vmem:[#allocation2 + $0xa8] sm:$0x1] %vm421, 0.0
      %430 = vst.msk [vmem:[#allocation2 + $0xc0] sm:$0x1] %vm421, 0.0
      %431 = vst.msk [vmem:[#allocation2 + $0xd8] sm:$0x1] %vm421, 0.0
      %432 = vst.msk [vmem:[#allocation2 + $0xf0] sm:$0x1] %vm421, 0.0
      %433 = vst.msk [vmem:[#allocation2 + $0x108] sm:$0x1] %vm421, 0.0
      %434 = vst.msk [vmem:[#allocation2 + $0x120] sm:$0x1] %vm421, 0.0
      %435 = vst.msk [vmem:[#allocation2 + $0x138] sm:$0x1] %vm421, 0.0
      %436 = vst.msk [vmem:[#allocation2 + $0x150] sm:$0x1] %vm421, 0.0
      %437 = vst.msk [vmem:[#allocation2 + $0x168] sm:$0x1] %vm421, 0.0
      %438 = vst.msk [vmem:[#allocation2 + $0x180] sm:$0x1] %vm421, 0.0
      %439 = vst.msk [vmem:[#allocation2 + $0x198] sm:$0x1] %vm421, 0.0
      %440 = vst.msk [vmem:[#allocation2 + $0x11] sm:$0x1] %vm421, 0.0
      %441 = vst.msk [vmem:[#allocation2 + $0x29] sm:$0x1] %vm421, 0.0
      %442 = vst.msk [vmem:[#allocation2 + $0x41] sm:$0x1] %vm421, 0.0
      %443 = vst.msk [vmem:[#allocation2 + $0x59] sm:$0x1] %vm421, 0.0
      %444 = vst.msk [vmem:[#allocation2 + $0x71] sm:$0x1] %vm421, 0.0
      %445 = vst.msk [vmem:[#allocation2 + $0x89] sm:$0x1] %vm421, 0.0
      %446 = vst.msk [vmem:[#allocation2 + $0xa1] sm:$0x1] %vm421, 0.0
      %447 = vst.msk [vmem:[#allocation2 + $0xb9] sm:$0x1] %vm421, 0.0
      %448 = vst.msk [vmem:[#allocation2 + $0xd1] sm:$0x1] %vm421, 0.0
      %449 = vst.msk [vmem:[#allocation2 + $0xe9] sm:$0x1] %vm421, 0.0
      %450 = vst.msk [vmem:[#allocation2 + $0x101] sm:$0x1] %vm421, 0.0
      %451 = vst.msk [vmem:[#allocation2 + $0x119] sm:$0x1] %vm421, 0.0
      %452 = vst.msk [vmem:[#allocation2 + $0x131] sm:$0x1] %vm421, 0.0
      %453 = vst.msk [vmem:[#allocation2 + $0x149] sm:$0x1] %vm421, 0.0
      %454 = vst.msk [vmem:[#allocation2 + $0x161] sm:$0x1] %vm421, 0.0
      %455 = vst.msk [vmem:[#allocation2 + $0x179] sm:$0x1] %vm421, 0.0
      %456 = vst.msk [vmem:[#allocation2 + $0x191] sm:$0x1] %vm421, 0.0
      %457 = vst.msk [vmem:[#allocation2 + $0x1a9] sm:$0x1] %vm421, 0.0
      %s458 = scalar_lea.vmem [#allocation2], 24
      %459 = vst.msk [vmem:[%s458 + $0x1] sm:$0xff] %vm412, %v380
      %460 = vst.msk [vmem:[%s458 + $0x9] sm:$0xff] %vm412, %v381
      %461 = vst.msk [vmem:[%s458 + $0x19] sm:$0xff] %vm412, %v382
      %462 = vst.msk [vmem:[%s458 + $0x21] sm:$0xff] %vm412, %v383
      %463 = vst.msk [vmem:[%s458 + $0x31] sm:$0xff] %vm412, %v384
      %464 = vst.msk [vmem:[%s458 + $0x39] sm:$0xff] %vm412, %v385
      %465 = vst.msk [vmem:[%s458 + $0x49] sm:$0xff] %vm412, %v386
      %466 = vst.msk [vmem:[%s458 + $0x51] sm:$0xff] %vm412, %v387
      %467 = vst.msk [vmem:[%s458 + $0x61] sm:$0xff] %vm412, %v388
      %468 = vst.msk [vmem:[%s458 + $0x69] sm:$0xff] %vm412, %v389
      %469 = vst.msk [vmem:[%s458 + $0x79] sm:$0xff] %vm412, %v390
      %470 = vst.msk [vmem:[%s458 + $0x81] sm:$0xff] %vm412, %v391
      %471 = vst.msk [vmem:[%s458 + $0x91] sm:$0xff] %vm412, %v392
      %472 = vst.msk [vmem:[%s458 + $0x99] sm:$0xff] %vm412, %v393
      %473 = vst.msk [vmem:[%s458 + $0xa9] sm:$0xff] %vm412, %v394
      %474 = vst.msk [vmem:[%s458 + $0xb1] sm:$0xff] %vm412, %v395
      %475 = vst.msk [vmem:[%s458 + $0xc1] sm:$0xff] %vm412, %v396
      %476 = vst.msk [vmem:[%s458 + $0xc9] sm:$0xff] %vm412, %v397
      %477 = vst.msk [vmem:[%s458 + $0xd9] sm:$0xff] %vm412, %v398
      %478 = vst.msk [vmem:[%s458 + $0xe1] sm:$0xff] %vm412, %v399
      %479 = vst.msk [vmem:[%s458 + $0xf1] sm:$0xff] %vm412, %v400
      %480 = vst.msk [vmem:[%s458 + $0xf9] sm:$0xff] %vm412, %v401
      %481 = vst.msk [vmem:[%s458 + $0x109] sm:$0xff] %vm412, %v402
      %482 = vst.msk [vmem:[%s458 + $0x111] sm:$0xff] %vm412, %v403
      %483 = vst.msk [vmem:[%s458 + $0x121] sm:$0xff] %vm412, %v404
      %484 = vst.msk [vmem:[%s458 + $0x129] sm:$0xff] %vm412, %v405
      %485 = vst.msk [vmem:[%s458 + $0x139] sm:$0xff] %vm412, %v406
      %486 = vst.msk [vmem:[%s458 + $0x141] sm:$0xff] %vm412, %v407
      %487 = vst.msk [vmem:[%s458 + $0x151] sm:$0xff] %vm412, %v408
      %488 = vst.msk [vmem:[%s458 + $0x159] sm:$0xff] %vm412, %v409
      %489 = vst.msk [vmem:[%s458 + $0x169] sm:$0xff] %vm412, %v410
      %490 = vst.msk [vmem:[%s458 + $0x171] sm:$0xff] %vm412, %v411
      %v491 = vld [vmem:[#allocation2] sm:$0xff]
      %v492 = vld [vmem:[#allocation2 + $0x8] sm:$0xff]
      %v493 = vld [vmem:[#allocation2 + $0x18] sm:$0xff]
      %v494 = vld [vmem:[#allocation2 + $0x20] sm:$0xff]
      %v495 = vld [vmem:[#allocation2 + $0x30] sm:$0xff]
      %v496 = vld [vmem:[#allocation2 + $0x38] sm:$0xff]
      %v497 = vld [vmem:[#allocation2 + $0x48] sm:$0xff]
      %v498 = vld [vmem:[#allocation2 + $0x50] sm:$0xff]
      %v499 = vld [vmem:[#allocation2 + $0x60] sm:$0xff]
      %v500 = vld [vmem:[#allocation2 + $0x68] sm:$0xff]
      %v501 = vld [vmem:[#allocation2 + $0x78] sm:$0xff]
      %v502 = vld [vmem:[#allocation2 + $0x80] sm:$0xff]
      %v503 = vld [vmem:[#allocation2 + $0x90] sm:$0xff]
      %v504 = vld [vmem:[#allocation2 + $0x98] sm:$0xff]
      %v505 = vld [vmem:[#allocation2 + $0xa8] sm:$0xff]
      %v506 = vld [vmem:[#allocation2 + $0xb0] sm:$0xff]
      %v507 = vld [vmem:[#allocation2 + $0xc0] sm:$0xff]
      %v508 = vld [vmem:[#allocation2 + $0xc8] sm:$0xff]
      %v509 = vld [vmem:[#allocation2 + $0xd8] sm:$0xff]
      %v510 = vld [vmem:[#allocation2 + $0xe0] sm:$0xff]
      %v511 = vld [vmem:[#allocation2 + $0xf0] sm:$0xff]
      %v512 = vld [vmem:[#allocation2 + $0xf8] sm:$0xff]
      %v513 = vld [vmem:[#allocation2 + $0x108] sm:$0xff]
      %v514 = vld [vmem:[#allocation2 + $0x110] sm:$0xff]
      %v515 = vld [vmem:[#allocation2 + $0x120] sm:$0xff]
      %v516 = vld [vmem:[#allocation2 + $0x128] sm:$0xff]
      %v517 = vld [vmem:[#allocation2 + $0x138] sm:$0xff]
      %v518 = vld [vmem:[#allocation2 + $0x140] sm:$0xff]
      %v519 = vld [vmem:[#allocation2 + $0x150] sm:$0xff]
      %v520 = vld [vmem:[#allocation2 + $0x158] sm:$0xff]
      %v521 = vld [vmem:[#allocation2 + $0x168] sm:$0xff]
      %v522 = vld [vmem:[#allocation2 + $0x170] sm:$0xff]
      %v523 = vpack.c.bf16 %v492, %v491
      %v524 = vpack.c.bf16 %v494, %v493
      %v525 = vpack.c.bf16 %v496, %v495
      %v526 = vpack.c.bf16 %v498, %v497
      %v527 = vpack.c.bf16 %v500, %v499
      %v528 = vpack.c.bf16 %v502, %v501
      %v529 = vpack.c.bf16 %v504, %v503
      %v530 = vpack.c.bf16 %v506, %v505
      %v531 = vpack.c.bf16 %v508, %v507
      %v532 = vpack.c.bf16 %v510, %v509
      %v533 = vpack.c.bf16 %v512, %v511
      %v534 = vpack.c.bf16 %v514, %v513
      %v535 = vpack.c.bf16 %v516, %v515
      %v536 = vpack.c.bf16 %v518, %v517
      %v537 = vpack.c.bf16 %v520, %v519
      %v538 = vpack.c.bf16 %v522, %v521
      %539 = vst.msk [vmem:[#allocation3] sm:$0xff] %vm412, %v523
      %540 = vst.msk [vmem:[#allocation3 + $0x8] sm:$0xff] %vm412, %v524
      %541 = vst.msk [vmem:[#allocation3 + $0x10] sm:$0xff] %vm412, %v525
      %542 = vst.msk [vmem:[#allocation3 + $0x18] sm:$0xff] %vm412, %v526
      %543 = vst.msk [vmem:[#allocation3 + $0x20] sm:$0xff] %vm412, %v527
      %544 = vst.msk [vmem:[#allocation3 + $0x28] sm:$0xff] %vm412, %v528
      %545 = vst.msk [vmem:[#allocation3 + $0x30] sm:$0xff] %vm412, %v529
      %546 = vst.msk [vmem:[#allocation3 + $0x38] sm:$0xff] %vm412, %v530
      %547 = vst.msk [vmem:[#allocation3 + $0x40] sm:$0xff] %vm412, %v531
      %548 = vst.msk [vmem:[#allocation3 + $0x48] sm:$0xff] %vm412, %v532
      %549 = vst.msk [vmem:[#allocation3 + $0x50] sm:$0xff] %vm412, %v533
      %550 = vst.msk [vmem:[#allocation3 + $0x58] sm:$0xff] %vm412, %v534
      %551 = vst.msk [vmem:[#allocation3 + $0x60] sm:$0xff] %vm412, %v535
      %552 = vst.msk [vmem:[#allocation3 + $0x68] sm:$0xff] %vm412, %v536
      %553 = vst.msk [vmem:[#allocation3 + $0x70] sm:$0xff] %vm412, %v537
      %554 = vst.msk [vmem:[#allocation3 + $0x78] sm:$0xff] %vm412, %v538
      %v555 = vld [vmem:[#allocation2 + $0x1] sm:$0xff]
      %v556 = vld [vmem:[#allocation2 + $0x9] sm:$0xff]
      %v557 = vld [vmem:[#allocation2 + $0x19] sm:$0xff]
      %v558 = vld [vmem:[#allocation2 + $0x21] sm:$0xff]
      %v559 = vld [vmem:[#allocation2 + $0x31] sm:$0xff]
      %v560 = vld [vmem:[#allocation2 + $0x39] sm:$0xff]
      %v561 = vld [vmem:[#allocation2 + $0x49] sm:$0xff]
      %v562 = vld [vmem:[#allocation2 + $0x51] sm:$0xff]
      %v563 = vld [vmem:[#allocation2 + $0x61] sm:$0xff]
      %v564 = vld [vmem:[#allocation2 + $0x69] sm:$0xff]
      %v565 = vld [vmem:[#allocation2 + $0x79] sm:$0xff]
      %v566 = vld [vmem:[#allocation2 + $0x81] sm:$0xff]
      %v567 = vld [vmem:[#allocation2 + $0x91] sm:$0xff]
      %v568 = vld [vmem:[#allocation2 + $0x99] sm:$0xff]
      %v569 = vld [vmem:[#allocation2 + $0xa9] sm:$0xff]
      %v570 = vld [vmem:[#allocation2 + $0xb1] sm:$0xff]
      %v571 = vld [vmem:[#allocation2 + $0xc1] sm:$0xff]
      %v572 = vld [vmem:[#allocation2 + $0xc9] sm:$0xff]
      %v573 = vld [vmem:[#allocation2 + $0xd9] sm:$0xff]
      %v574 = vld [vmem:[#allocation2 + $0xe1] sm:$0xff]
      %v575 = vld [vmem:[#allocation2 + $0xf1] sm:$0xff]
      %v576 = vld [vmem:[#allocation2 + $0xf9] sm:$0xff]
      %v577 = vld [vmem:[#allocation2 + $0x109] sm:$0xff]
      %v578 = vld [vmem:[#allocation2 + $0x111] sm:$0xff]
      %v579 = vld [vmem:[#allocation2 + $0x121] sm:$0xff]
      %v580 = vld [vmem:[#allocation2 + $0x129] sm:$0xff]
      %v581 = vld [vmem:[#allocation2 + $0x139] sm:$0xff]
      %v582 = vld [vmem:[#allocation2 + $0x141] sm:$0xff]
      %v583 = vld [vmem:[#allocation2 + $0x151] sm:$0xff]
      %v584 = vld [vmem:[#allocation2 + $0x159] sm:$0xff]
      %v585 = vld [vmem:[#allocation2 + $0x169] sm:$0xff]
      %v586 = vld [vmem:[#allocation2 + $0x171] sm:$0xff]
      %v587 = vpack.c.bf16 %v556, %v555
      %v588 = vpack.c.bf16 %v558, %v557
      %v589 = vpack.c.bf16 %v560, %v559
      %v590 = vpack.c.bf16 %v562, %v561
      %v591 = vpack.c.bf16 %v564, %v563
      %v592 = vpack.c.bf16 %v566, %v565
      %v593 = vpack.c.bf16 %v568, %v567
      %v594 = vpack.c.bf16 %v570, %v569
      %v595 = vpack.c.bf16 %v572, %v571
      %v596 = vpack.c.bf16 %v574, %v573
      %v597 = vpack.c.bf16 %v576, %v575
      %v598 = vpack.c.bf16 %v578, %v577
      %v599 = vpack.c.bf16 %v580, %v579
      %v600 = vpack.c.bf16 %v582, %v581
      %v601 = vpack.c.bf16 %v584, %v583
      %v602 = vpack.c.bf16 %v586, %v585
      %619 = vrot.lane.b32.xlu0 %v587, 4
      %v620 = vpop.permute.xlu0 %619
      %621 = vrot.lane.b32.xlu0 %v588, 4
      %v622 = vpop.permute.xlu0 %621
      %623 = vrot.lane.b32.xlu0 %v589, 4
      %v624 = vpop.permute.xlu0 %623
      %625 = vrot.lane.b32.xlu0 %v590, 4
      %v626 = vpop.permute.xlu0 %625
      %627 = vrot.lane.b32.xlu0 %v591, 4
      %v628 = vpop.permute.xlu0 %627
      %629 = vrot.lane.b32.xlu0 %v592, 4
      %v630 = vpop.permute.xlu0 %629
      %631 = vrot.lane.b32.xlu0 %v593, 4
      %v632 = vpop.permute.xlu0 %631
      %633 = vrot.lane.b32.xlu0 %v594, 4
      %v634 = vpop.permute.xlu0 %633
      %635 = vrot.lane.b32.xlu0 %v595, 4
      %v636 = vpop.permute.xlu0 %635
      %637 = vrot.lane.b32.xlu0 %v596, 4
      %v638 = vpop.permute.xlu0 %637
      %639 = vrot.lane.b32.xlu0 %v597, 4
      %v640 = vpop.permute.xlu0 %639
      %641 = vrot.lane.b32.xlu0 %v598, 4
      %v642 = vpop.permute.xlu0 %641
      %643 = vrot.lane.b32.xlu0 %v599, 4
      %v644 = vpop.permute.xlu0 %643
      %645 = vrot.lane.b32.xlu0 %v600, 4
      %v646 = vpop.permute.xlu0 %645
      %647 = vrot.lane.b32.xlu0 %v601, 4
      %v648 = vpop.permute.xlu0 %647
      %649 = vrot.lane.b32.xlu0 %v602, 4
      %v650 = vpop.permute.xlu0 %649
      %vm667 = vcmask 64544
      %668 = vst.msk [vmem:[#allocation3] sm:$0xff] %vm667, %v620
      %669 = vst.msk [vmem:[#allocation3 + $0x8] sm:$0xff] %vm667, %v622
      %670 = vst.msk [vmem:[#allocation3 + $0x10] sm:$0xff] %vm667, %v624
      %671 = vst.msk [vmem:[#allocation3 + $0x18] sm:$0xff] %vm667, %v626
      %672 = vst.msk [vmem:[#allocation3 + $0x20] sm:$0xff] %vm667, %v628
      %673 = vst.msk [vmem:[#allocation3 + $0x28] sm:$0xff] %vm667, %v630
      %674 = vst.msk [vmem:[#allocation3 + $0x30] sm:$0xff] %vm667, %v632
      %675 = vst.msk [vmem:[#allocation3 + $0x38] sm:$0xff] %vm667, %v634
      %676 = vst.msk [vmem:[#allocation3 + $0x40] sm:$0xff] %vm667, %v636
      %677 = vst.msk [vmem:[#allocation3 + $0x48] sm:$0xff] %vm667, %v638
      %678 = vst.msk [vmem:[#allocation3 + $0x50] sm:$0xff] %vm667, %v640
      %679 = vst.msk [vmem:[#allocation3 + $0x58] sm:$0xff] %vm667, %v642
      %680 = vst.msk [vmem:[#allocation3 + $0x60] sm:$0xff] %vm667, %v644
      %681 = vst.msk [vmem:[#allocation3 + $0x68] sm:$0xff] %vm667, %v646
      %682 = vst.msk [vmem:[#allocation3 + $0x70] sm:$0xff] %vm667, %v648
      %683 = vst.msk [vmem:[#allocation3 + $0x78] sm:$0xff] %vm667, %v650
      %v684 = vld [vmem:[#allocation2 + $0x2] sm:$0xff]
      %v685 = vld [vmem:[#allocation2 + $0xa] sm:$0xff]
      %v686 = vld [vmem:[#allocation2 + $0x1a] sm:$0xff]
      %v687 = vld [vmem:[#allocation2 + $0x22] sm:$0xff]
      %v688 = vld [vmem:[#allocation2 + $0x32] sm:$0xff]
      %v689 = vld [vmem:[#allocation2 + $0x3a] sm:$0xff]
      %v690 = vld [vmem:[#allocation2 + $0x4a] sm:$0xff]
      %v691 = vld [vmem:[#allocation2 + $0x52] sm:$0xff]
      %v692 = vld [vmem:[#allocation2 + $0x62] sm:$0xff]
      %v693 = vld [vmem:[#allocation2 + $0x6a] sm:$0xff]
      %v694 = vld [vmem:[#allocation2 + $0x7a] sm:$0xff]
      %v695 = vld [vmem:[#allocation2 + $0x82] sm:$0xff]
      %v696 = vld [vmem:[#allocation2 + $0x92] sm:$0xff]
      %v697 = vld [vmem:[#allocation2 + $0x9a] sm:$0xff]
      %v698 = vld [vmem:[#allocation2 + $0xaa] sm:$0xff]
      %v699 = vld [vmem:[#allocation2 + $0xb2] sm:$0xff]
      %v700 = vld [vmem:[#allocation2 + $0xc2] sm:$0xff]
      %v701 = vld [vmem:[#allocation2 + $0xca] sm:$0xff]
      %v702 = vld [vmem:[#allocation2 + $0xda] sm:$0xff]
      %v703 = vld [vmem:[#allocation2 + $0xe2] sm:$0xff]
      %v704 = vld [vmem:[#allocation2 + $0xf2] sm:$0xff]
      %v705 = vld [vmem:[#allocation2 + $0xfa] sm:$0xff]
      %v706 = vld [vmem:[#allocation2 + $0x10a] sm:$0xff]
      %v707 = vld [vmem:[#allocation2 + $0x112] sm:$0xff]
      %v708 = vld [vmem:[#allocation2 + $0x122] sm:$0xff]
      %v709 = vld [vmem:[#allocation2 + $0x12a] sm:$0xff]
      %v710 = vld [vmem:[#allocation2 + $0x13a] sm:$0xff]
      %v711 = vld [vmem:[#allocation2 + $0x142] sm:$0xff]
      %v712 = vld [vmem:[#allocation2 + $0x152] sm:$0xff]
      %v713 = vld [vmem:[#allocation2 + $0x15a] sm:$0xff]
      %v714 = vld [vmem:[#allocation2 + $0x16a] sm:$0xff]
      %v715 = vld [vmem:[#allocation2 + $0x172] sm:$0xff]
      %v716 = vpack.c.bf16 %v685, %v684
      %v717 = vpack.c.bf16 %v687, %v686
      %v718 = vpack.c.bf16 %v689, %v688
      %v719 = vpack.c.bf16 %v691, %v690
      %v720 = vpack.c.bf16 %v693, %v692
      %v721 = vpack.c.bf16 %v695, %v694
      %v722 = vpack.c.bf16 %v697, %v696
      %v723 = vpack.c.bf16 %v699, %v698
      %v724 = vpack.c.bf16 %v701, %v700
      %v725 = vpack.c.bf16 %v703, %v702
      %v726 = vpack.c.bf16 %v705, %v704
      %v727 = vpack.c.bf16 %v707, %v706
      %v728 = vpack.c.bf16 %v709, %v708
      %v729 = vpack.c.bf16 %v711, %v710
      %v730 = vpack.c.bf16 %v713, %v712
      %v731 = vpack.c.bf16 %v715, %v714
      %748 = vrot.lane.b32.xlu0 %v716, 8
      %v749 = vpop.permute.xlu0 %748
      %750 = vrot.lane.b32.xlu0 %v717, 8
      %v751 = vpop.permute.xlu0 %750
      %752 = vrot.lane.b32.xlu0 %v718, 8
      %v753 = vpop.permute.xlu0 %752
      %754 = vrot.lane.b32.xlu0 %v719, 8
      %v755 = vpop.permute.xlu0 %754
      %756 = vrot.lane.b32.xlu0 %v720, 8
      %v757 = vpop.permute.xlu0 %756
      %758 = vrot.lane.b32.xlu0 %v721, 8
      %v759 = vpop.permute.xlu0 %758
      %760 = vrot.lane.b32.xlu0 %v722, 8
      %v761 = vpop.permute.xlu0 %760
      %762 = vrot.lane.b32.xlu0 %v723, 8
      %v763 = vpop.permute.xlu0 %762
      %764 = vrot.lane.b32.xlu0 %v724, 8
      %v765 = vpop.permute.xlu0 %764
      %766 = vrot.lane.b32.xlu0 %v725, 8
      %v767 = vpop.permute.xlu0 %766
      %768 = vrot.lane.b32.xlu0 %v726, 8
      %v769 = vpop.permute.xlu0 %768
      %770 = vrot.lane.b32.xlu0 %v727, 8
      %v771 = vpop.permute.xlu0 %770
      %772 = vrot.lane.b32.xlu0 %v728, 8
      %v773 = vpop.permute.xlu0 %772
      %774 = vrot.lane.b32.xlu0 %v729, 8
      %v775 = vpop.permute.xlu0 %774
      %776 = vrot.lane.b32.xlu0 %v730, 8
      %v777 = vpop.permute.xlu0 %776
      %778 = vrot.lane.b32.xlu0 %v731, 8
      %v779 = vpop.permute.xlu0 %778
      %vm796 = vcmask 97344
      %797 = vst.msk [vmem:[#allocation3] sm:$0xff] %vm796, %v749
      %798 = vst.msk [vmem:[#allocation3 + $0x8] sm:$0xff] %vm796, %v751
      %799 = vst.msk [vmem:[#allocation3 + $0x10] sm:$0xff] %vm796, %v753
      %800 = vst.msk [vmem:[#allocation3 + $0x18] sm:$0xff] %vm796, %v755
      %801 = vst.msk [vmem:[#allocation3 + $0x20] sm:$0xff] %vm796, %v757
      %802 = vst.msk [vmem:[#allocation3 + $0x28] sm:$0xff] %vm796, %v759
      %803 = vst.msk [vmem:[#allocation3 + $0x30] sm:$0xff] %vm796, %v761
      %804 = vst.msk [vmem:[#allocation3 + $0x38] sm:$0xff] %vm796, %v763
      %805 = vst.msk [vmem:[#allocation3 + $0x40] sm:$0xff] %vm796, %v765
      %806 = vst.msk [vmem:[#allocation3 + $0x48] sm:$0xff] %vm796, %v767
      %807 = vst.msk [vmem:[#allocation3 + $0x50] sm:$0xff] %vm796, %v769
      %808 = vst.msk [vmem:[#allocation3 + $0x58] sm:$0xff] %vm796, %v771
      %809 = vst.msk [vmem:[#allocation3 + $0x60] sm:$0xff] %vm796, %v773
      %810 = vst.msk [vmem:[#allocation3 + $0x68] sm:$0xff] %vm796, %v775
      %811 = vst.msk [vmem:[#allocation3 + $0x70] sm:$0xff] %vm796, %v777
      %812 = vst.msk [vmem:[#allocation3 + $0x78] sm:$0xff] %vm796, %v779
      %v813 = vld [vmem:[%s458] sm:$0xff]
      %v814 = vld [vmem:[%s458 + $0x8] sm:$0xff]
      %v815 = vld [vmem:[%s458 + $0x18] sm:$0xff]
      %v816 = vld [vmem:[%s458 + $0x20] sm:$0xff]
      %v817 = vld [vmem:[%s458 + $0x30] sm:$0xff]
      %v818 = vld [vmem:[%s458 + $0x38] sm:$0xff]
      %v819 = vld [vmem:[%s458 + $0x48] sm:$0xff]
      %v820 = vld [vmem:[%s458 + $0x50] sm:$0xff]
      %v821 = vld [vmem:[%s458 + $0x60] sm:$0xff]
      %v822 = vld [vmem:[%s458 + $0x68] sm:$0xff]
      %v823 = vld [vmem:[%s458 + $0x78] sm:$0xff]
      %v824 = vld [vmem:[%s458 + $0x80] sm:$0xff]
      %v825 = vld [vmem:[%s458 + $0x90] sm:$0xff]
      %v826 = vld [vmem:[%s458 + $0x98] sm:$0xff]
      %v827 = vld [vmem:[%s458 + $0xa8] sm:$0xff]
      %v828 = vld [vmem:[%s458 + $0xb0] sm:$0xff]
      %v829 = vld [vmem:[%s458 + $0xc0] sm:$0xff]
      %v830 = vld [vmem:[%s458 + $0xc8] sm:$0xff]
      %v831 = vld [vmem:[%s458 + $0xd8] sm:$0xff]
      %v832 = vld [vmem:[%s458 + $0xe0] sm:$0xff]
      %v833 = vld [vmem:[%s458 + $0xf0] sm:$0xff]
      %v834 = vld [vmem:[%s458 + $0xf8] sm:$0xff]
      %v835 = vld [vmem:[%s458 + $0x108] sm:$0xff]
      %v836 = vld [vmem:[%s458 + $0x110] sm:$0xff]
      %v837 = vld [vmem:[%s458 + $0x120] sm:$0xff]
      %v838 = vld [vmem:[%s458 + $0x128] sm:$0xff]
      %v839 = vld [vmem:[%s458 + $0x138] sm:$0xff]
      %v840 = vld [vmem:[%s458 + $0x140] sm:$0xff]
      %v841 = vld [vmem:[%s458 + $0x150] sm:$0xff]
      %v842 = vld [vmem:[%s458 + $0x158] sm:$0xff]
      %v843 = vld [vmem:[%s458 + $0x168] sm:$0xff]
      %v844 = vld [vmem:[%s458 + $0x170] sm:$0xff]
      %v845 = vpack.c.bf16 %v814, %v813
      %v846 = vpack.c.bf16 %v816, %v815
      %v847 = vpack.c.bf16 %v818, %v817
      %v848 = vpack.c.bf16 %v820, %v819
      %v849 = vpack.c.bf16 %v822, %v821
      %v850 = vpack.c.bf16 %v824, %v823
      %v851 = vpack.c.bf16 %v826, %v825
      %v852 = vpack.c.bf16 %v828, %v827
      %v853 = vpack.c.bf16 %v830, %v829
      %v854 = vpack.c.bf16 %v832, %v831
      %v855 = vpack.c.bf16 %v834, %v833
      %v856 = vpack.c.bf16 %v836, %v835
      %v857 = vpack.c.bf16 %v838, %v837
      %v858 = vpack.c.bf16 %v840, %v839
      %v859 = vpack.c.bf16 %v842, %v841
      %v860 = vpack.c.bf16 %v844, %v843
      %877 = vrot.lane.b32.xlu0 %v845, 12
      %v878 = vpop.permute.xlu0 %877
      %879 = vrot.lane.b32.xlu0 %v846, 12
      %v880 = vpop.permute.xlu0 %879
      %881 = vrot.lane.b32.xlu0 %v847, 12
      %v882 = vpop.permute.xlu0 %881
      %883 = vrot.lane.b32.xlu0 %v848, 12
      %v884 = vpop.permute.xlu0 %883
      %885 = vrot.lane.b32.xlu0 %v849, 12
      %v886 = vpop.permute.xlu0 %885
      %887 = vrot.lane.b32.xlu0 %v850, 12
      %v888 = vpop.permute.xlu0 %887
      %889 = vrot.lane.b32.xlu0 %v851, 12
      %v890 = vpop.permute.xlu0 %889
      %891 = vrot.lane.b32.xlu0 %v852, 12
      %v892 = vpop.permute.xlu0 %891
      %893 = vrot.lane.b32.xlu0 %v853, 12
      %v894 = vpop.permute.xlu0 %893
      %895 = vrot.lane.b32.xlu0 %v854, 12
      %v896 = vpop.permute.xlu0 %895
      %897 = vrot.lane.b32.xlu0 %v855, 12
      %v898 = vpop.permute.xlu0 %897
      %899 = vrot.lane.b32.xlu0 %v856, 12
      %v900 = vpop.permute.xlu0 %899
      %901 = vrot.lane.b32.xlu0 %v857, 12
      %v902 = vpop.permute.xlu0 %901
      %903 = vrot.lane.b32.xlu0 %v858, 12
      %v904 = vpop.permute.xlu0 %903
      %905 = vrot.lane.b32.xlu0 %v859, 12
      %v906 = vpop.permute.xlu0 %905
      %907 = vrot.lane.b32.xlu0 %v860, 12
      %v908 = vpop.permute.xlu0 %907
      %vm925 = vcmask 130144
      %926 = vst.msk [vmem:[#allocation3] sm:$0xff] %vm925, %v878
      %927 = vst.msk [vmem:[#allocation3 + $0x8] sm:$0xff] %vm925, %v880
      %928 = vst.msk [vmem:[#allocation3 + $0x10] sm:$0xff] %vm925, %v882
      %929 = vst.msk [vmem:[#allocation3 + $0x18] sm:$0xff] %vm925, %v884
      %930 = vst.msk [vmem:[#allocation3 + $0x20] sm:$0xff] %vm925, %v886
      %931 = vst.msk [vmem:[#allocation3 + $0x28] sm:$0xff] %vm925, %v888
      %932 = vst.msk [vmem:[#allocation3 + $0x30] sm:$0xff] %vm925, %v890
      %933 = vst.msk [vmem:[#allocation3 + $0x38] sm:$0xff] %vm925, %v892
      %934 = vst.msk [vmem:[#allocation3 + $0x40] sm:$0xff] %vm925, %v894
      %935 = vst.msk [vmem:[#allocation3 + $0x48] sm:$0xff] %vm925, %v896
      %936 = vst.msk [vmem:[#allocation3 + $0x50] sm:$0xff] %vm925, %v898
      %937 = vst.msk [vmem:[#allocation3 + $0x58] sm:$0xff] %vm925, %v900
      %938 = vst.msk [vmem:[#allocation3 + $0x60] sm:$0xff] %vm925, %v902
      %939 = vst.msk [vmem:[#allocation3 + $0x68] sm:$0xff] %vm925, %v904
      %940 = vst.msk [vmem:[#allocation3 + $0x70] sm:$0xff] %vm925, %v906
      %941 = vst.msk [vmem:[#allocation3 + $0x78] sm:$0xff] %vm925, %v908
      %v942 = vld [vmem:[%s458 + $0x1] sm:$0xff]
      %v943 = vld [vmem:[%s458 + $0x9] sm:$0xff]
      %v944 = vld [vmem:[%s458 + $0x19] sm:$0xff]
      %v945 = vld [vmem:[%s458 + $0x21] sm:$0xff]
      %v946 = vld [vmem:[%s458 + $0x31] sm:$0xff]
      %v947 = vld [vmem:[%s458 + $0x39] sm:$0xff]
      %v948 = vld [vmem:[%s458 + $0x49] sm:$0xff]
      %v949 = vld [vmem:[%s458 + $0x51] sm:$0xff]
      %v950 = vld [vmem:[%s458 + $0x61] sm:$0xff]
      %v951 = vld [vmem:[%s458 + $0x69] sm:$0xff]
      %v952 = vld [vmem:[%s458 + $0x79] sm:$0xff]
      %v953 = vld [vmem:[%s458 + $0x81] sm:$0xff]
      %v954 = vld [vmem:[%s458 + $0x91] sm:$0xff]
      %v955 = vld [vmem:[%s458 + $0x99] sm:$0xff]
      %v956 = vld [vmem:[%s458 + $0xa9] sm:$0xff]
      %v957 = vld [vmem:[%s458 + $0xb1] sm:$0xff]
      %v958 = vld [vmem:[%s458 + $0xc1] sm:$0xff]
      %v959 = vld [vmem:[%s458 + $0xc9] sm:$0xff]
      %v960 = vld [vmem:[%s458 + $0xd9] sm:$0xff]
      %v961 = vld [vmem:[%s458 + $0xe1] sm:$0xff]
      %v962 = vld [vmem:[%s458 + $0xf1] sm:$0xff]
      %v963 = vld [vmem:[%s458 + $0xf9] sm:$0xff]
      %v964 = vld [vmem:[%s458 + $0x109] sm:$0xff]
      %v965 = vld [vmem:[%s458 + $0x111] sm:$0xff]
      %v966 = vld [vmem:[%s458 + $0x121] sm:$0xff]
      %v967 = vld [vmem:[%s458 + $0x129] sm:$0xff]
      %v968 = vld [vmem:[%s458 + $0x139] sm:$0xff]
      %v969 = vld [vmem:[%s458 + $0x141] sm:$0xff]
      %v970 = vld [vmem:[%s458 + $0x151] sm:$0xff]
      %v971 = vld [vmem:[%s458 + $0x159] sm:$0xff]
      %v972 = vld [vmem:[%s458 + $0x169] sm:$0xff]
      %v973 = vld [vmem:[%s458 + $0x171] sm:$0xff]
      %v974 = vpack.c.bf16 %v943, %v942
      %v975 = vpack.c.bf16 %v945, %v944
      %v976 = vpack.c.bf16 %v947, %v946
      %v977 = vpack.c.bf16 %v949, %v948
      %v978 = vpack.c.bf16 %v951, %v950
      %v979 = vpack.c.bf16 %v953, %v952
      %v980 = vpack.c.bf16 %v955, %v954
      %v981 = vpack.c.bf16 %v957, %v956
      %v982 = vpack.c.bf16 %v959, %v958
      %v983 = vpack.c.bf16 %v961, %v960
      %v984 = vpack.c.bf16 %v963, %v962
      %v985 = vpack.c.bf16 %v965, %v964
      %v986 = vpack.c.bf16 %v967, %v966
      %v987 = vpack.c.bf16 %v969, %v968
      %v988 = vpack.c.bf16 %v971, %v970
      %v989 = vpack.c.bf16 %v973, %v972
      %1006 = vrot.lane.b32.xlu0 %v974, 16
      %v1007 = vpop.permute.xlu0 %1006
      %1008 = vrot.lane.b32.xlu0 %v975, 16
      %v1009 = vpop.permute.xlu0 %1008
      %1010 = vrot.lane.b32.xlu0 %v976, 16
      %v1011 = vpop.permute.xlu0 %1010
      %1012 = vrot.lane.b32.xlu0 %v977, 16
      %v1013 = vpop.permute.xlu0 %1012
      %1014 = vrot.lane.b32.xlu0 %v978, 16
      %v1015 = vpop.permute.xlu0 %1014
      %1016 = vrot.lane.b32.xlu0 %v979, 16
      %v1017 = vpop.permute.xlu0 %1016
      %1018 = vrot.lane.b32.xlu0 %v980, 16
      %v1019 = vpop.permute.xlu0 %1018
      %1020 = vrot.lane.b32.xlu0 %v981, 16
      %v1021 = vpop.permute.xlu0 %1020
      %1022 = vrot.lane.b32.xlu0 %v982, 16
      %v1023 = vpop.permute.xlu0 %1022
      %1024 = vrot.lane.b32.xlu0 %v983, 16
      %v1025 = vpop.permute.xlu0 %1024
      %1026 = vrot.lane.b32.xlu0 %v984, 16
      %v1027 = vpop.permute.xlu0 %1026
      %1028 = vrot.lane.b32.xlu0 %v985, 16
      %v1029 = vpop.permute.xlu0 %1028
      %1030 = vrot.lane.b32.xlu0 %v986, 16
      %v1031 = vpop.permute.xlu0 %1030
      %1032 = vrot.lane.b32.xlu0 %v987, 16
      %v1033 = vpop.permute.xlu0 %1032
      %1034 = vrot.lane.b32.xlu0 %v988, 16
      %v1035 = vpop.permute.xlu0 %1034
      %1036 = vrot.lane.b32.xlu0 %v989, 16
      %v1037 = vpop.permute.xlu0 %1036
      %vm1054 = vcmask 162944
      %1055 = vst.msk [vmem:[#allocation3] sm:$0xff] %vm1054, %v1007
      %1056 = vst.msk [vmem:[#allocation3 + $0x8] sm:$0xff] %vm1054, %v1009
      %1057 = vst.msk [vmem:[#allocation3 + $0x10] sm:$0xff] %vm1054, %v1011
      %1058 = vst.msk [vmem:[#allocation3 + $0x18] sm:$0xff] %vm1054, %v1013
      %1059 = vst.msk [vmem:[#allocation3 + $0x20] sm:$0xff] %vm1054, %v1015
      %1060 = vst.msk [vmem:[#allocation3 + $0x28] sm:$0xff] %vm1054, %v1017
      %1061 = vst.msk [vmem:[#allocation3 + $0x30] sm:$0xff] %vm1054, %v1019
      %1062 = vst.msk [vmem:[#allocation3 + $0x38] sm:$0xff] %vm1054, %v1021
      %1063 = vst.msk [vmem:[#allocation3 + $0x40] sm:$0xff] %vm1054, %v1023
      %1064 = vst.msk [vmem:[#allocation3 + $0x48] sm:$0xff] %vm1054, %v1025
      %1065 = vst.msk [vmem:[#allocation3 + $0x50] sm:$0xff] %vm1054, %v1027
      %1066 = vst.msk [vmem:[#allocation3 + $0x58] sm:$0xff] %vm1054, %v1029
      %1067 = vst.msk [vmem:[#allocation3 + $0x60] sm:$0xff] %vm1054, %v1031
      %1068 = vst.msk [vmem:[#allocation3 + $0x68] sm:$0xff] %vm1054, %v1033
      %1069 = vst.msk [vmem:[#allocation3 + $0x70] sm:$0xff] %vm1054, %v1035
      %1070 = vst.msk [vmem:[#allocation3 + $0x78] sm:$0xff] %vm1054, %v1037
      %v1071 = vld [vmem:[%s458 + $0x2] sm:$0xff]
      %v1072 = vld [vmem:[%s458 + $0xa] sm:$0xff]
      %v1073 = vld [vmem:[%s458 + $0x1a] sm:$0xff]
      %v1074 = vld [vmem:[%s458 + $0x22] sm:$0xff]
      %v1075 = vld [vmem:[%s458 + $0x32] sm:$0xff]
      %v1076 = vld [vmem:[%s458 + $0x3a] sm:$0xff]
      %v1077 = vld [vmem:[%s458 + $0x4a] sm:$0xff]
      %v1078 = vld [vmem:[%s458 + $0x52] sm:$0xff]
      %v1079 = vld [vmem:[%s458 + $0x62] sm:$0xff]
      %v1080 = vld [vmem:[%s458 + $0x6a] sm:$0xff]
      %v1081 = vld [vmem:[%s458 + $0x7a] sm:$0xff]
      %v1082 = vld [vmem:[%s458 + $0x82] sm:$0xff]
      %v1083 = vld [vmem:[%s458 + $0x92] sm:$0xff]
      %v1084 = vld [vmem:[%s458 + $0x9a] sm:$0xff]
      %v1085 = vld [vmem:[%s458 + $0xaa] sm:$0xff]
      %v1086 = vld [vmem:[%s458 + $0xb2] sm:$0xff]
      %v1087 = vld [vmem:[%s458 + $0xc2] sm:$0xff]
      %v1088 = vld [vmem:[%s458 + $0xca] sm:$0xff]
      %v1089 = vld [vmem:[%s458 + $0xda] sm:$0xff]
      %v1090 = vld [vmem:[%s458 + $0xe2] sm:$0xff]
      %v1091 = vld [vmem:[%s458 + $0xf2] sm:$0xff]
      %v1092 = vld [vmem:[%s458 + $0xfa] sm:$0xff]
      %v1093 = vld [vmem:[%s458 + $0x10a] sm:$0xff]
      %v1094 = vld [vmem:[%s458 + $0x112] sm:$0xff]
      %v1095 = vld [vmem:[%s458 + $0x122] sm:$0xff]
      %v1096 = vld [vmem:[%s458 + $0x12a] sm:$0xff]
      %v1097 = vld [vmem:[%s458 + $0x13a] sm:$0xff]
      %v1098 = vld [vmem:[%s458 + $0x142] sm:$0xff]
      %v1099 = vld [vmem:[%s458 + $0x152] sm:$0xff]
      %v1100 = vld [vmem:[%s458 + $0x15a] sm:$0xff]
      %v1101 = vld [vmem:[%s458 + $0x16a] sm:$0xff]
      %v1102 = vld [vmem:[%s458 + $0x172] sm:$0xff]
      %v1103 = vpack.c.bf16 %v1072, %v1071
      %v1104 = vpack.c.bf16 %v1074, %v1073
      %v1105 = vpack.c.bf16 %v1076, %v1075
      %v1106 = vpack.c.bf16 %v1078, %v1077
      %v1107 = vpack.c.bf16 %v1080, %v1079
      %v1108 = vpack.c.bf16 %v1082, %v1081
      %v1109 = vpack.c.bf16 %v1084, %v1083
      %v1110 = vpack.c.bf16 %v1086, %v1085
      %v1111 = vpack.c.bf16 %v1088, %v1087
      %v1112 = vpack.c.bf16 %v1090, %v1089
      %v1113 = vpack.c.bf16 %v1092, %v1091
      %v1114 = vpack.c.bf16 %v1094, %v1093
      %v1115 = vpack.c.bf16 %v1096, %v1095
      %v1116 = vpack.c.bf16 %v1098, %v1097
      %v1117 = vpack.c.bf16 %v1100, %v1099
      %v1118 = vpack.c.bf16 %v1102, %v1101
      %1135 = vrot.lane.b32.xlu0 %v1103, 20
      %v1136 = vpop.permute.xlu0 %1135
      %1137 = vrot.lane.b32.xlu0 %v1104, 20
      %v1138 = vpop.permute.xlu0 %1137
      %1139 = vrot.lane.b32.xlu0 %v1105, 20
      %v1140 = vpop.permute.xlu0 %1139
      %1141 = vrot.lane.b32.xlu0 %v1106, 20
      %v1142 = vpop.permute.xlu0 %1141
      %1143 = vrot.lane.b32.xlu0 %v1107, 20
      %v1144 = vpop.permute.xlu0 %1143
      %1145 = vrot.lane.b32.xlu0 %v1108, 20
      %v1146 = vpop.permute.xlu0 %1145
      %1147 = vrot.lane.b32.xlu0 %v1109, 20
      %v1148 = vpop.permute.xlu0 %1147
      %1149 = vrot.lane.b32.xlu0 %v1110, 20
      %v1150 = vpop.permute.xlu0 %1149
      %1151 = vrot.lane.b32.xlu0 %v1111, 20
      %v1152 = vpop.permute.xlu0 %1151
      %1153 = vrot.lane.b32.xlu0 %v1112, 20
      %v1154 = vpop.permute.xlu0 %1153
      %1155 = vrot.lane.b32.xlu0 %v1113, 20
      %v1156 = vpop.permute.xlu0 %1155
      %1157 = vrot.lane.b32.xlu0 %v1114, 20
      %v1158 = vpop.permute.xlu0 %1157
      %1159 = vrot.lane.b32.xlu0 %v1115, 20
      %v1160 = vpop.permute.xlu0 %1159
      %1161 = vrot.lane.b32.xlu0 %v1116, 20
      %v1162 = vpop.permute.xlu0 %1161
      %1163 = vrot.lane.b32.xlu0 %v1117, 20
      %v1164 = vpop.permute.xlu0 %1163
      %1165 = vrot.lane.b32.xlu0 %v1118, 20
      %v1166 = vpop.permute.xlu0 %1165
      %vm1183 = vcmask 195744
      %1184 = vst.msk [vmem:[#allocation3] sm:$0xff] %vm1183, %v1136
      %1185 = vst.msk [vmem:[#allocation3 + $0x8] sm:$0xff] %vm1183, %v1138
      %1186 = vst.msk [vmem:[#allocation3 + $0x10] sm:$0xff] %vm1183, %v1140
      %1187 = vst.msk [vmem:[#allocation3 + $0x18] sm:$0xff] %vm1183, %v1142
      %1188 = vst.msk [vmem:[#allocation3 + $0x20] sm:$0xff] %vm1183, %v1144
      %1189 = vst.msk [vmem:[#allocation3 + $0x28] sm:$0xff] %vm1183, %v1146
      %1190 = vst.msk [vmem:[#allocation3 + $0x30] sm:$0xff] %vm1183, %v1148
      %1191 = vst.msk [vmem:[#allocation3 + $0x38] sm:$0xff] %vm1183, %v1150
      %1192 = vst.msk [vmem:[#allocation3 + $0x40] sm:$0xff] %vm1183, %v1152
      %1193 = vst.msk [vmem:[#allocation3 + $0x48] sm:$0xff] %vm1183, %v1154
      %1194 = vst.msk [vmem:[#allocation3 + $0x50] sm:$0xff] %vm1183, %v1156
      %1195 = vst.msk [vmem:[#allocation3 + $0x58] sm:$0xff] %vm1183, %v1158
      %1196 = vst.msk [vmem:[#allocation3 + $0x60] sm:$0xff] %vm1183, %v1160
      %1197 = vst.msk [vmem:[#allocation3 + $0x68] sm:$0xff] %vm1183, %v1162
      %1198 = vst.msk [vmem:[#allocation3 + $0x70] sm:$0xff] %vm1183, %v1164
      %1199 = vst.msk [vmem:[#allocation3 + $0x78] sm:$0xff] %vm1183, %v1166
      %s1200 = scalar_lea.vmem [#allocation2], 48
      %v1201 = vld [vmem:[%s1200] sm:$0xff]
      %v1202 = vld [vmem:[%s1200 + $0x8] sm:$0xff]
      %v1203 = vld [vmem:[%s1200 + $0x18] sm:$0xff]
      %v1204 = vld [vmem:[%s1200 + $0x20] sm:$0xff]
      %v1205 = vld [vmem:[%s1200 + $0x30] sm:$0xff]
      %v1206 = vld [vmem:[%s1200 + $0x38] sm:$0xff]
      %v1207 = vld [vmem:[%s1200 + $0x48] sm:$0xff]
      %v1208 = vld [vmem:[%s1200 + $0x50] sm:$0xff]
      %v1209 = vld [vmem:[%s1200 + $0x60] sm:$0xff]
      %v1210 = vld [vmem:[%s1200 + $0x68] sm:$0xff]
      %v1211 = vld [vmem:[%s1200 + $0x78] sm:$0xff]
      %v1212 = vld [vmem:[%s1200 + $0x80] sm:$0xff]
      %v1213 = vld [vmem:[%s1200 + $0x90] sm:$0xff]
      %v1214 = vld [vmem:[%s1200 + $0x98] sm:$0xff]
      %v1215 = vld [vmem:[%s1200 + $0xa8] sm:$0xff]
      %v1216 = vld [vmem:[%s1200 + $0xb0] sm:$0xff]
      %v1217 = vld [vmem:[%s1200 + $0xc0] sm:$0xff]
      %v1218 = vld [vmem:[%s1200 + $0xc8] sm:$0xff]
      %v1219 = vld [vmem:[%s1200 + $0xd8] sm:$0xff]
      %v1220 = vld [vmem:[%s1200 + $0xe0] sm:$0xff]
      %v1221 = vld [vmem:[%s1200 + $0xf0] sm:$0xff]
      %v1222 = vld [vmem:[%s1200 + $0xf8] sm:$0xff]
      %v1223 = vld [vmem:[%s1200 + $0x108] sm:$0xff]
      %v1224 = vld [vmem:[%s1200 + $0x110] sm:$0xff]
      %v1225 = vld [vmem:[%s1200 + $0x120] sm:$0xff]
      %v1226 = vld [vmem:[%s1200 + $0x128] sm:$0xff]
      %v1227 = vld [vmem:[%s1200 + $0x138] sm:$0xff]
      %v1228 = vld [vmem:[%s1200 + $0x140] sm:$0xff]
      %v1229 = vld [vmem:[%s1200 + $0x150] sm:$0xff]
      %v1230 = vld [vmem:[%s1200 + $0x158] sm:$0xff]
      %v1231 = vld [vmem:[%s1200 + $0x168] sm:$0xff]
      %v1232 = vld [vmem:[%s1200 + $0x170] sm:$0xff]
      %v1233 = vpack.c.bf16 %v1202, %v1201
      %v1234 = vpack.c.bf16 %v1204, %v1203
      %v1235 = vpack.c.bf16 %v1206, %v1205
      %v1236 = vpack.c.bf16 %v1208, %v1207
      %v1237 = vpack.c.bf16 %v1210, %v1209
      %v1238 = vpack.c.bf16 %v1212, %v1211
      %v1239 = vpack.c.bf16 %v1214, %v1213
      %v1240 = vpack.c.bf16 %v1216, %v1215
      %v1241 = vpack.c.bf16 %v1218, %v1217
      %v1242 = vpack.c.bf16 %v1220, %v1219
      %v1243 = vpack.c.bf16 %v1222, %v1221
      %v1244 = vpack.c.bf16 %v1224, %v1223
      %v1245 = vpack.c.bf16 %v1226, %v1225
      %v1246 = vpack.c.bf16 %v1228, %v1227
      %v1247 = vpack.c.bf16 %v1230, %v1229
      %v1248 = vpack.c.bf16 %v1232, %v1231
      %1265 = vrot.lane.b32.xlu0 %v1233, 24
      %v1266 = vpop.permute.xlu0 %1265
      %1267 = vrot.lane.b32.xlu0 %v1234, 24
      %v1268 = vpop.permute.xlu0 %1267
      %1269 = vrot.lane.b32.xlu0 %v1235, 24
      %v1270 = vpop.permute.xlu0 %1269
      %1271 = vrot.lane.b32.xlu0 %v1236, 24
      %v1272 = vpop.permute.xlu0 %1271
      %1273 = vrot.lane.b32.xlu0 %v1237, 24
      %v1274 = vpop.permute.xlu0 %1273
      %1275 = vrot.lane.b32.xlu0 %v1238, 24
      %v1276 = vpop.permute.xlu0 %1275
      %1277 = vrot.lane.b32.xlu0 %v1239, 24
      %v1278 = vpop.permute.xlu0 %1277
      %1279 = vrot.lane.b32.xlu0 %v1240, 24
      %v1280 = vpop.permute.xlu0 %1279
      %1281 = vrot.lane.b32.xlu0 %v1241, 24
      %v1282 = vpop.permute.xlu0 %1281
      %1283 = vrot.lane.b32.xlu0 %v1242, 24
      %v1284 = vpop.permute.xlu0 %1283
      %1285 = vrot.lane.b32.xlu0 %v1243, 24
      %v1286 = vpop.permute.xlu0 %1285
      %1287 = vrot.lane.b32.xlu0 %v1244, 24
      %v1288 = vpop.permute.xlu0 %1287
      %1289 = vrot.lane.b32.xlu0 %v1245, 24
      %v1290 = vpop.permute.xlu0 %1289
      %1291 = vrot.lane.b32.xlu0 %v1246, 24
      %v1292 = vpop.permute.xlu0 %1291
      %1293 = vrot.lane.b32.xlu0 %v1247, 24
      %v1294 = vpop.permute.xlu0 %1293
      %1295 = vrot.lane.b32.xlu0 %v1248, 24
      %v1296 = vpop.permute.xlu0 %1295
      %vm1313 = vcmask 228544
      %1314 = vst.msk [vmem:[#allocation3] sm:$0xff] %vm1313, %v1266
      %1315 = vst.msk [vmem:[#allocation3 + $0x8] sm:$0xff] %vm1313, %v1268
      %1316 = vst.msk [vmem:[#allocation3 + $0x10] sm:$0xff] %vm1313, %v1270
      %1317 = vst.msk [vmem:[#allocation3 + $0x18] sm:$0xff] %vm1313, %v1272
      %1318 = vst.msk [vmem:[#allocation3 + $0x20] sm:$0xff] %vm1313, %v1274
      %1319 = vst.msk [vmem:[#allocation3 + $0x28] sm:$0xff] %vm1313, %v1276
      %1320 = vst.msk [vmem:[#allocation3 + $0x30] sm:$0xff] %vm1313, %v1278
      %1321 = vst.msk [vmem:[#allocation3 + $0x38] sm:$0xff] %vm1313, %v1280
      %1322 = vst.msk [vmem:[#allocation3 + $0x40] sm:$0xff] %vm1313, %v1282
      %1323 = vst.msk [vmem:[#allocation3 + $0x48] sm:$0xff] %vm1313, %v1284
      %1324 = vst.msk [vmem:[#allocation3 + $0x50] sm:$0xff] %vm1313, %v1286
      %1325 = vst.msk [vmem:[#allocation3 + $0x58] sm:$0xff] %vm1313, %v1288
      %1326 = vst.msk [vmem:[#allocation3 + $0x60] sm:$0xff] %vm1313, %v1290
      %1327 = vst.msk [vmem:[#allocation3 + $0x68] sm:$0xff] %vm1313, %v1292
      %1328 = vst.msk [vmem:[#allocation3 + $0x70] sm:$0xff] %vm1313, %v1294
      %1329 = vst.msk [vmem:[#allocation3 + $0x78] sm:$0xff] %vm1313, %v1296
      %v1330 = vld [vmem:[%s1200 + $0x1] sm:$0xff]
      %v1331 = vld [vmem:[%s1200 + $0x9] sm:$0xff]
      %v1332 = vld [vmem:[%s1200 + $0x19] sm:$0xff]
      %v1333 = vld [vmem:[%s1200 + $0x21] sm:$0xff]
      %v1334 = vld [vmem:[%s1200 + $0x31] sm:$0xff]
      %v1335 = vld [vmem:[%s1200 + $0x39] sm:$0xff]
      %v1336 = vld [vmem:[%s1200 + $0x49] sm:$0xff]
      %v1337 = vld [vmem:[%s1200 + $0x51] sm:$0xff]
      %v1338 = vld [vmem:[%s1200 + $0x61] sm:$0xff]
      %v1339 = vld [vmem:[%s1200 + $0x69] sm:$0xff]
      %v1340 = vld [vmem:[%s1200 + $0x79] sm:$0xff]
      %v1341 = vld [vmem:[%s1200 + $0x81] sm:$0xff]
      %v1342 = vld [vmem:[%s1200 + $0x91] sm:$0xff]
      %v1343 = vld [vmem:[%s1200 + $0x99] sm:$0xff]
      %v1344 = vld [vmem:[%s1200 + $0xa9] sm:$0xff]
      %v1345 = vld [vmem:[%s1200 + $0xb1] sm:$0xff]
      %v1346 = vld [vmem:[%s1200 + $0xc1] sm:$0xff]
      %v1347 = vld [vmem:[%s1200 + $0xc9] sm:$0xff]
      %v1348 = vld [vmem:[%s1200 + $0xd9] sm:$0xff]
      %v1349 = vld [vmem:[%s1200 + $0xe1] sm:$0xff]
      %v1350 = vld [vmem:[%s1200 + $0xf1] sm:$0xff]
      %v1351 = vld [vmem:[%s1200 + $0xf9] sm:$0xff]
      %v1352 = vld [vmem:[%s1200 + $0x109] sm:$0xff]
      %v1353 = vld [vmem:[%s1200 + $0x111] sm:$0xff]
      %v1354 = vld [vmem:[%s1200 + $0x121] sm:$0xff]
      %v1355 = vld [vmem:[%s1200 + $0x129] sm:$0xff]
      %v1356 = vld [vmem:[%s1200 + $0x139] sm:$0xff]
      %v1357 = vld [vmem:[%s1200 + $0x141] sm:$0xff]
      %v1358 = vld [vmem:[%s1200 + $0x151] sm:$0xff]
      %v1359 = vld [vmem:[%s1200 + $0x159] sm:$0xff]
      %v1360 = vld [vmem:[%s1200 + $0x169] sm:$0xff]
      %v1361 = vld [vmem:[%s1200 + $0x171] sm:$0xff]
      %v1362 = vpack.c.bf16 %v1331, %v1330
      %v1363 = vpack.c.bf16 %v1333, %v1332
      %v1364 = vpack.c.bf16 %v1335, %v1334
      %v1365 = vpack.c.bf16 %v1337, %v1336
      %v1366 = vpack.c.bf16 %v1339, %v1338
      %v1367 = vpack.c.bf16 %v1341, %v1340
      %v1368 = vpack.c.bf16 %v1343, %v1342
      %v1369 = vpack.c.bf16 %v1345, %v1344
      %v1370 = vpack.c.bf16 %v1347, %v1346
      %v1371 = vpack.c.bf16 %v1349, %v1348
      %v1372 = vpack.c.bf16 %v1351, %v1350
      %v1373 = vpack.c.bf16 %v1353, %v1352
      %v1374 = vpack.c.bf16 %v1355, %v1354
      %v1375 = vpack.c.bf16 %v1357, %v1356
      %v1376 = vpack.c.bf16 %v1359, %v1358
      %v1377 = vpack.c.bf16 %v1361, %v1360
      %1394 = vrot.lane.b32.xlu0 %v1362, 28
      %v1395 = vpop.permute.xlu0 %1394
      %1396 = vrot.lane.b32.xlu0 %v1363, 28
      %v1397 = vpop.permute.xlu0 %1396
      %1398 = vrot.lane.b32.xlu0 %v1364, 28
      %v1399 = vpop.permute.xlu0 %1398
      %1400 = vrot.lane.b32.xlu0 %v1365, 28
      %v1401 = vpop.permute.xlu0 %1400
      %1402 = vrot.lane.b32.xlu0 %v1366, 28
      %v1403 = vpop.permute.xlu0 %1402
      %1404 = vrot.lane.b32.xlu0 %v1367, 28
      %v1405 = vpop.permute.xlu0 %1404
      %1406 = vrot.lane.b32.xlu0 %v1368, 28
      %v1407 = vpop.permute.xlu0 %1406
      %1408 = vrot.lane.b32.xlu0 %v1369, 28
      %v1409 = vpop.permute.xlu0 %1408
      %1410 = vrot.lane.b32.xlu0 %v1370, 28
      %v1411 = vpop.permute.xlu0 %1410
      %1412 = vrot.lane.b32.xlu0 %v1371, 28
      %v1413 = vpop.permute.xlu0 %1412
      %1414 = vrot.lane.b32.xlu0 %v1372, 28
      %v1415 = vpop.permute.xlu0 %1414
      %1416 = vrot.lane.b32.xlu0 %v1373, 28
      %v1417 = vpop.permute.xlu0 %1416
      %1418 = vrot.lane.b32.xlu0 %v1374, 28
      %v1419 = vpop.permute.xlu0 %1418
      %1420 = vrot.lane.b32.xlu0 %v1375, 28
      %v1421 = vpop.permute.xlu0 %1420
      %1422 = vrot.lane.b32.xlu0 %v1376, 28
      %v1423 = vpop.permute.xlu0 %1422
      %1424 = vrot.lane.b32.xlu0 %v1377, 28
      %v1425 = vpop.permute.xlu0 %1424
      %vm1442 = vcmask 261344
      %1443 = vst.msk [vmem:[#allocation3] sm:$0xff] %vm1442, %v1395
      %1444 = vst.msk [vmem:[#allocation3 + $0x8] sm:$0xff] %vm1442, %v1397
      %1445 = vst.msk [vmem:[#allocation3 + $0x10] sm:$0xff] %vm1442, %v1399
      %1446 = vst.msk [vmem:[#allocation3 + $0x18] sm:$0xff] %vm1442, %v1401
      %1447 = vst.msk [vmem:[#allocation3 + $0x20] sm:$0xff] %vm1442, %v1403
      %1448 = vst.msk [vmem:[#allocation3 + $0x28] sm:$0xff] %vm1442, %v1405
      %1449 = vst.msk [vmem:[#allocation3 + $0x30] sm:$0xff] %vm1442, %v1407
      %1450 = vst.msk [vmem:[#allocation3 + $0x38] sm:$0xff] %vm1442, %v1409
      %1451 = vst.msk [vmem:[#allocation3 + $0x40] sm:$0xff] %vm1442, %v1411
      %1452 = vst.msk [vmem:[#allocation3 + $0x48] sm:$0xff] %vm1442, %v1413
      %1453 = vst.msk [vmem:[#allocation3 + $0x50] sm:$0xff] %vm1442, %v1415
      %1454 = vst.msk [vmem:[#allocation3 + $0x58] sm:$0xff] %vm1442, %v1417
      %1455 = vst.msk [vmem:[#allocation3 + $0x60] sm:$0xff] %vm1442, %v1419
      %1456 = vst.msk [vmem:[#allocation3 + $0x68] sm:$0xff] %vm1442, %v1421
      %1457 = vst.msk [vmem:[#allocation3 + $0x70] sm:$0xff] %vm1442, %v1423
      %1458 = vst.msk [vmem:[#allocation3 + $0x78] sm:$0xff] %vm1442, %v1425
      %v1459 = vld [vmem:[%s1200 + $0x2] sm:$0xff]
      %v1460 = vld [vmem:[%s1200 + $0xa] sm:$0xff]
      %v1461 = vld [vmem:[%s1200 + $0x1a] sm:$0xff]
      %v1462 = vld [vmem:[%s1200 + $0x22] sm:$0xff]
      %v1463 = vld [vmem:[%s1200 + $0x32] sm:$0xff]
      %v1464 = vld [vmem:[%s1200 + $0x3a] sm:$0xff]
      %v1465 = vld [vmem:[%s1200 + $0x4a] sm:$0xff]
      %v1466 = vld [vmem:[%s1200 + $0x52] sm:$0xff]
      %v1467 = vld [vmem:[%s1200 + $0x62] sm:$0xff]
      %v1468 = vld [vmem:[%s1200 + $0x6a] sm:$0xff]
      %v1469 = vld [vmem:[%s1200 + $0x7a] sm:$0xff]
      %v1470 = vld [vmem:[%s1200 + $0x82] sm:$0xff]
      %v1471 = vld [vmem:[%s1200 + $0x92] sm:$0xff]
      %v1472 = vld [vmem:[%s1200 + $0x9a] sm:$0xff]
      %v1473 = vld [vmem:[%s1200 + $0xaa] sm:$0xff]
      %v1474 = vld [vmem:[%s1200 + $0xb2] sm:$0xff]
      %v1475 = vld [vmem:[%s1200 + $0xc2] sm:$0xff]
      %v1476 = vld [vmem:[%s1200 + $0xca] sm:$0xff]
      %v1477 = vld [vmem:[%s1200 + $0xda] sm:$0xff]
      %v1478 = vld [vmem:[%s1200 + $0xe2] sm:$0xff]
      %v1479 = vld [vmem:[%s1200 + $0xf2] sm:$0xff]
      %v1480 = vld [vmem:[%s1200 + $0xfa] sm:$0xff]
      %v1481 = vld [vmem:[%s1200 + $0x10a] sm:$0xff]
      %v1482 = vld [vmem:[%s1200 + $0x112] sm:$0xff]
      %v1483 = vld [vmem:[%s1200 + $0x122] sm:$0xff]
      %v1484 = vld [vmem:[%s1200 + $0x12a] sm:$0xff]
      %v1485 = vld [vmem:[%s1200 + $0x13a] sm:$0xff]
      %v1486 = vld [vmem:[%s1200 + $0x142] sm:$0xff]
      %v1487 = vld [vmem:[%s1200 + $0x152] sm:$0xff]
      %v1488 = vld [vmem:[%s1200 + $0x15a] sm:$0xff]
      %v1489 = vld [vmem:[%s1200 + $0x16a] sm:$0xff]
      %v1490 = vld [vmem:[%s1200 + $0x172] sm:$0xff]
      %v1491 = vpack.c.bf16 %v1460, %v1459
      %v1492 = vpack.c.bf16 %v1462, %v1461
      %v1493 = vpack.c.bf16 %v1464, %v1463
      %v1494 = vpack.c.bf16 %v1466, %v1465
      %v1495 = vpack.c.bf16 %v1468, %v1467
      %v1496 = vpack.c.bf16 %v1470, %v1469
      %v1497 = vpack.c.bf16 %v1472, %v1471
      %v1498 = vpack.c.bf16 %v1474, %v1473
      %v1499 = vpack.c.bf16 %v1476, %v1475
      %v1500 = vpack.c.bf16 %v1478, %v1477
      %v1501 = vpack.c.bf16 %v1480, %v1479
      %v1502 = vpack.c.bf16 %v1482, %v1481
      %v1503 = vpack.c.bf16 %v1484, %v1483
      %v1504 = vpack.c.bf16 %v1486, %v1485
      %v1505 = vpack.c.bf16 %v1488, %v1487
      %v1506 = vpack.c.bf16 %v1490, %v1489
      %1523 = vrot.lane.b32.xlu0 %v1491, 32
      %v1524 = vpop.permute.xlu0 %1523
      %1525 = vrot.lane.b32.xlu0 %v1492, 32
      %v1526 = vpop.permute.xlu0 %1525
      %1527 = vrot.lane.b32.xlu0 %v1493, 32
      %v1528 = vpop.permute.xlu0 %1527
      %1529 = vrot.lane.b32.xlu0 %v1494, 32
      %v1530 = vpop.permute.xlu0 %1529
      %1531 = vrot.lane.b32.xlu0 %v1495, 32
      %v1532 = vpop.permute.xlu0 %1531
      %1533 = vrot.lane.b32.xlu0 %v1496, 32
      %v1534 = vpop.permute.xlu0 %1533
      %1535 = vrot.lane.b32.xlu0 %v1497, 32
      %v1536 = vpop.permute.xlu0 %1535
      %1537 = vrot.lane.b32.xlu0 %v1498, 32
      %v1538 = vpop.permute.xlu0 %1537
      %1539 = vrot.lane.b32.xlu0 %v1499, 32
      %v1540 = vpop.permute.xlu0 %1539
      %1541 = vrot.lane.b32.xlu0 %v1500, 32
      %v1542 = vpop.permute.xlu0 %1541
      %1543 = vrot.lane.b32.xlu0 %v1501, 32
      %v1544 = vpop.permute.xlu0 %1543
      %1545 = vrot.lane.b32.xlu0 %v1502, 32
      %v1546 = vpop.permute.xlu0 %1545
      %1547 = vrot.lane.b32.xlu0 %v1503, 32
      %v1548 = vpop.permute.xlu0 %1547
      %1549 = vrot.lane.b32.xlu0 %v1504, 32
      %v1550 = vpop.permute.xlu0 %1549
      %1551 = vrot.lane.b32.xlu0 %v1505, 32
      %v1552 = vpop.permute.xlu0 %1551
      %1553 = vrot.lane.b32.xlu0 %v1506, 32
      %v1554 = vpop.permute.xlu0 %1553
      %vm1571 = vcmask 294144
      %1572 = vst.msk [vmem:[#allocation3] sm:$0xff] %vm1571, %v1524
      %1573 = vst.msk [vmem:[#allocation3 + $0x8] sm:$0xff] %vm1571, %v1526
      %1574 = vst.msk [vmem:[#allocation3 + $0x10] sm:$0xff] %vm1571, %v1528
      %1575 = vst.msk [vmem:[#allocation3 + $0x18] sm:$0xff] %vm1571, %v1530
      %1576 = vst.msk [vmem:[#allocation3 + $0x20] sm:$0xff] %vm1571, %v1532
      %1577 = vst.msk [vmem:[#allocation3 + $0x28] sm:$0xff] %vm1571, %v1534
      %1578 = vst.msk [vmem:[#allocation3 + $0x30] sm:$0xff] %vm1571, %v1536
      %1579 = vst.msk [vmem:[#allocation3 + $0x38] sm:$0xff] %vm1571, %v1538
      %1580 = vst.msk [vmem:[#allocation3 + $0x40] sm:$0xff] %vm1571, %v1540
      %1581 = vst.msk [vmem:[#allocation3 + $0x48] sm:$0xff] %vm1571, %v1542
      %1582 = vst.msk [vmem:[#allocation3 + $0x50] sm:$0xff] %vm1571, %v1544
      %1583 = vst.msk [vmem:[#allocation3 + $0x58] sm:$0xff] %vm1571, %v1546
      %1584 = vst.msk [vmem:[#allocation3 + $0x60] sm:$0xff] %vm1571, %v1548
      %1585 = vst.msk [vmem:[#allocation3 + $0x68] sm:$0xff] %vm1571, %v1550
      %1586 = vst.msk [vmem:[#allocation3 + $0x70] sm:$0xff] %vm1571, %v1552
      %1587 = vst.msk [vmem:[#allocation3 + $0x78] sm:$0xff] %vm1571, %v1554
      %v1588 = vld [vmem:[#allocation3] sm:$0xff]
      %v1589 = vld [vmem:[#allocation3 + $0x8] sm:$0xff]
      %v1590 = vld [vmem:[#allocation3 + $0x10] sm:$0xff]
      %v1591 = vld [vmem:[#allocation3 + $0x18] sm:$0xff]
      %v1592 = vld [vmem:[#allocation3 + $0x20] sm:$0xff]
      %v1593 = vld [vmem:[#allocation3 + $0x28] sm:$0xff]
      %v1594 = vld [vmem:[#allocation3 + $0x30] sm:$0xff]
      %v1595 = vld [vmem:[#allocation3 + $0x38] sm:$0xff]
      %v1596 = vld [vmem:[#allocation3 + $0x40] sm:$0xff]
      %v1597 = vld [vmem:[#allocation3 + $0x48] sm:$0xff]
      %v1598 = vld [vmem:[#allocation3 + $0x50] sm:$0xff]
      %v1599 = vld [vmem:[#allocation3 + $0x58] sm:$0xff]
      %v1600 = vld [vmem:[#allocation3 + $0x60] sm:$0xff]
      %v1601 = vld [vmem:[#allocation3 + $0x68] sm:$0xff]
      %v1602 = vld [vmem:[#allocation3 + $0x70] sm:$0xff]
      %v1603 = vld [vmem:[#allocation3 + $0x78] sm:$0xff]
      %v1604 = vld [vmem:[%s3] sm:$0xf]
      %v1605 = vld [vmem:[%s3 + $0x4] sm:$0xf]
      %v1606 = vld [vmem:[%s3 + $0x8] sm:$0xf]
      %v1607 = vld [vmem:[%s3 + $0xc] sm:$0xf]
      %v1608 = vld [vmem:[%s3 + $0x10] sm:$0x3]
      %v1614 = vunpack.c.l.b16 %v1604
      %v1615 = vunpack.c.l.b16 %v1605
      %v1616 = vunpack.c.l.b16 %v1606
      %v1617 = vunpack.c.l.b16 %v1607
      %v1618 = vunpack.c.l.b16 %v1608
      %v1619 = vpack.c.b16 %v1615, %v1614
      %v1620 = vpack.c.b16 %v1617, %v1616
      %v1621 = vpack.c.b16 %v1618, %v1618
      %vm1624 = vcmask 293888
      %v1626 = vsel %vm1624, %v1588, 0
      %v1629 = vsel %vm1624, %v1589, 0
      %v1632 = vsel %vm1624, %v1590, 0
      %v1635 = vsel %vm1624, %v1591, 0
      %v1638 = vsel %vm1624, %v1592, 0
      %v1641 = vsel %vm1624, %v1593, 0
      %v1644 = vsel %vm1624, %v1594, 0
      %v1647 = vsel %vm1624, %v1595, 0
      %v1650 = vsel %vm1624, %v1596, 0
      %v1653 = vsel %vm1624, %v1597, 0
      %v1656 = vsel %vm1624, %v1598, 0
      %v1659 = vsel %vm1624, %v1599, 0
      %v1662 = vsel %vm1624, %v1600, 0
      %v1665 = vsel %vm1624, %v1601, 0
      %v1668 = vsel %vm1624, %v1602, 0
      %v1671 = vsel %vm1624, %v1603, 0
      %vm1673 = vcmask 1041408
      %v1675 = vsel %vm1673, %v1621, 0
      %1677 = vmatprep.subr.bf16.mxu0 0
      %1678 = vmatpush1.bf16.msra.mxu0 %v1619
      %1679 = vmatprep.subr.bf16.mxu0 0
      %1680 = vmatpush1.bf16.msra.mxu0 %v1620
      %1681 = vmatprep.subr.bf16.mxu0 0
      %1682 = vmatpush1.bf16.msra.mxu0 %v1675
      %1683 = vmatprep.subr.bf16.mxu0 0
      %1684 = vmatpush1.bf16.msra.mxu0 0
      %1685 = vmatprep.subr.bf16.mxu0 0
      %1686 = vmatpush1.bf16.msra.mxu0 0
      %1687 = vmatprep.subr.bf16.mxu0 0
      %1688 = vmatpush1.bf16.msra.mxu0 0
      %1689 = vmatprep.subr.bf16.mxu0 0
      %1690 = vmatpush1.bf16.msra.mxu0 0
      %1691 = vmatprep.subr.bf16.mxu0 0
      %1692 = vmatpush1.bf16.msra.mxu0 0
      %1693 = vmatprep.subr.bf16.mxu0 0
      %1694 = vmatpush1.bf16.msra.mxu0 0
      %1695 = vmatprep.subr.bf16.mxu0 0
      %1696 = vmatpush1.bf16.msra.mxu0 0
      %1697 = vmatprep.subr.bf16.mxu0 0
      %1698 = vmatpush1.bf16.msra.mxu0 0
      %1699 = vmatprep.subr.bf16.mxu0 0
      %1700 = vmatpush1.bf16.msra.mxu0 0
      %1701 = vmatprep.subr.bf16.mxu0 0
      %1702 = vmatpush1.bf16.msra.mxu0 0
      %1703 = vmatprep.subr.bf16.mxu0 0
      %1704 = vmatpush1.bf16.msra.mxu0 0
      %1705 = vmatprep.subr.bf16.mxu0 0
      %1706 = vmatpush1.bf16.msra.mxu0 0
      %1707 = vmatprep.subr.bf16.mxu0 0
      %1708 = vmatpush1.bf16.msra.mxu0 0
      %1709 = vmatprep.mubr.bf16.mxu0 0
      %1710 = vmatmul.mubr.bf16.gmra.mrb[0].mxu0 %v1626
      %v1711 = vpop.f32.mrb[0].mxu0
      %v1712 = vadd.f32 0.0, %v1711
      %v1713 = vpop.f32.mrb[0].mxu0
      %v1714 = vpop.f32.mrb[0].mxu0
      %v1715 = vadd.f32 0.0, %v1714
      %v1716 = vpop.f32.mrb[0].mxu0
      %1717 = vmatprep.mubr.bf16.mxu0 0
      %1718 = vmatmul.mubr.bf16.gmra.mrb[0].mxu0 %v1629
      %v1719 = vpop.f32.mrb[0].mxu0
      %v1720 = vadd.f32 0.0, %v1719
      %v1721 = vpop.f32.mrb[0].mxu0
      %v1722 = vpop.f32.mrb[0].mxu0
      %v1723 = vadd.f32 0.0, %v1722
      %v1724 = vpop.f32.mrb[0].mxu0
      %1725 = vmatprep.mubr.bf16.mxu0 0
      %1726 = vmatmul.mubr.bf16.gmra.mrb[0].mxu0 %v1632
      %v1727 = vpop.f32.mrb[0].mxu0
      %v1728 = vadd.f32 0.0, %v1727
      %v1729 = vpop.f32.mrb[0].mxu0
      %v1730 = vpop.f32.mrb[0].mxu0
      %v1731 = vadd.f32 0.0, %v1730
      %v1732 = vpop.f32.mrb[0].mxu0
      %1733 = vmatprep.mubr.bf16.mxu0 0
      %1734 = vmatmul.mubr.bf16.gmra.mrb[0].mxu0 %v1635
      %v1735 = vpop.f32.mrb[0].mxu0
      %v1736 = vadd.f32 0.0, %v1735
      %v1737 = vpop.f32.mrb[0].mxu0
      %v1738 = vpop.f32.mrb[0].mxu0
      %v1739 = vadd.f32 0.0, %v1738
      %v1740 = vpop.f32.mrb[0].mxu0
      %1741 = vmatprep.mubr.bf16.mxu0 0
      %1742 = vmatmul.mubr.bf16.gmra.mrb[0].mxu0 %v1638
      %v1743 = vpop.f32.mrb[0].mxu0
      %v1744 = vadd.f32 0.0, %v1743
      %v1745 = vpop.f32.mrb[0].mxu0
      %v1746 = vpop.f32.mrb[0].mxu0
      %v1747 = vadd.f32 0.0, %v1746
      %v1748 = vpop.f32.mrb[0].mxu0
      %1749 = vmatprep.mubr.bf16.mxu0 0
      %1750 = vmatmul.mubr.bf16.gmra.mrb[0].mxu0 %v1641
      %v1751 = vpop.f32.mrb[0].mxu0
      %v1752 = vadd.f32 0.0, %v1751
      %v1753 = vpop.f32.mrb[0].mxu0
      %v1754 = vpop.f32.mrb[0].mxu0
      %v1755 = vadd.f32 0.0, %v1754
      %v1756 = vpop.f32.mrb[0].mxu0
      %1757 = vmatprep.mubr.bf16.mxu0 0
      %1758 = vmatmul.mubr.bf16.gmra.mrb[0].mxu0 %v1644
      %v1759 = vpop.f32.mrb[0].mxu0
      %v1760 = vadd.f32 0.0, %v1759
      %v1761 = vpop.f32.mrb[0].mxu0
      %v1762 = vpop.f32.mrb[0].mxu0
      %v1763 = vadd.f32 0.0, %v1762
      %v1764 = vpop.f32.mrb[0].mxu0
      %1765 = vmatprep.mubr.bf16.mxu0 0
      %1766 = vmatmul.mubr.bf16.gmra.mrb[0].mxu0 %v1647
      %v1767 = vpop.f32.mrb[0].mxu0
      %v1768 = vadd.f32 0.0, %v1767
      %v1769 = vpop.f32.mrb[0].mxu0
      %v1770 = vpop.f32.mrb[0].mxu0
      %v1771 = vadd.f32 0.0, %v1770
      %v1772 = vpop.f32.mrb[0].mxu0
      %1773 = vmatprep.mubr.bf16.mxu0 0
      %1774 = vmatmul.mubr.bf16.gmra.mrb[0].mxu0 %v1650
      %v1775 = vpop.f32.mrb[0].mxu0
      %v1776 = vadd.f32 0.0, %v1775
      %v1777 = vpop.f32.mrb[0].mxu0
      %v1778 = vpop.f32.mrb[0].mxu0
      %v1779 = vadd.f32 0.0, %v1778
      %v1780 = vpop.f32.mrb[0].mxu0
      %1781 = vmatprep.mubr.bf16.mxu0 0
      %1782 = vmatmul.mubr.bf16.gmra.mrb[0].mxu0 %v1653
      %v1783 = vpop.f32.mrb[0].mxu0
      %v1784 = vadd.f32 0.0, %v1783
      %v1785 = vpop.f32.mrb[0].mxu0
      %v1786 = vpop.f32.mrb[0].mxu0
      %v1787 = vadd.f32 0.0, %v1786
      %v1788 = vpop.f32.mrb[0].mxu0
      %1789 = vmatprep.mubr.bf16.mxu0 0
      %1790 = vmatmul.mubr.bf16.gmra.mrb[0].mxu0 %v1656
      %v1791 = vpop.f32.mrb[0].mxu0
      %v1792 = vadd.f32 0.0, %v1791
      %v1793 = vpop.f32.mrb[0].mxu0
      %v1794 = vpop.f32.mrb[0].mxu0
      %v1795 = vadd.f32 0.0, %v1794
      %v1796 = vpop.f32.mrb[0].mxu0
      %1797 = vmatprep.mubr.bf16.mxu0 0
      %1798 = vmatmul.mubr.bf16.gmra.mrb[0].mxu0 %v1659
      %v1799 = vpop.f32.mrb[0].mxu0
      %v1800 = vadd.f32 0.0, %v1799
      %v1801 = vpop.f32.mrb[0].mxu0
      %v1802 = vpop.f32.mrb[0].mxu0
      %v1803 = vadd.f32 0.0, %v1802
      %v1804 = vpop.f32.mrb[0].mxu0
      %1805 = vmatprep.mubr.bf16.mxu0 0
      %1806 = vmatmul.mubr.bf16.gmra.mrb[0].mxu0 %v1662
      %v1807 = vpop.f32.mrb[0].mxu0
      %v1808 = vadd.f32 0.0, %v1807
      %v1809 = vpop.f32.mrb[0].mxu0
      %v1810 = vpop.f32.mrb[0].mxu0
      %v1811 = vadd.f32 0.0, %v1810
      %v1812 = vpop.f32.mrb[0].mxu0
      %1813 = vmatprep.mubr.bf16.mxu0 0
      %1814 = vmatmul.mubr.bf16.gmra.mrb[0].mxu0 %v1665
      %v1815 = vpop.f32.mrb[0].mxu0
      %v1816 = vadd.f32 0.0, %v1815
      %v1817 = vpop.f32.mrb[0].mxu0
      %v1818 = vpop.f32.mrb[0].mxu0
      %v1819 = vadd.f32 0.0, %v1818
      %v1820 = vpop.f32.mrb[0].mxu0
      %1821 = vmatprep.mubr.bf16.mxu0 0
      %1822 = vmatmul.mubr.bf16.gmra.mrb[0].mxu0 %v1668
      %v1823 = vpop.f32.mrb[0].mxu0
      %v1824 = vadd.f32 0.0, %v1823
      %v1825 = vpop.f32.mrb[0].mxu0
      %v1826 = vpop.f32.mrb[0].mxu0
      %v1827 = vadd.f32 0.0, %v1826
      %v1828 = vpop.f32.mrb[0].mxu0
      %1829 = vmatprep.mubr.bf16.mxu0 0
      %1830 = vmatmul.mubr.bf16.gmra.mrb[0].mxu0 %v1671
      %v1831 = vpop.f32.mrb[0].mxu0
      %v1832 = vadd.f32 0.0, %v1831
      %v1833 = vpop.f32.mrb[0].mxu0
      %v1834 = vpop.f32.mrb[0].mxu0
      %v1835 = vadd.f32 0.0, %v1834
      %v1836 = vpop.f32.mrb[0].mxu0
      %1837 = vdwg.mxu0
      %1838 = vst.msk [vmem:[%s262] sm:$0xff] %vm412, %v1712
      %1839 = vst.msk [vmem:[%s262 + $0x8] sm:$0xff] %vm412, %v1715
      %1840 = vst.msk [vmem:[%s262 + $0x10] sm:$0xff] %vm412, %v1720
      %1841 = vst.msk [vmem:[%s262 + $0x18] sm:$0xff] %vm412, %v1723
      %1842 = vst.msk [vmem:[%s262 + $0x20] sm:$0xff] %vm412, %v1728
      %1843 = vst.msk [vmem:[%s262 + $0x28] sm:$0xff] %vm412, %v1731
      %1844 = vst.msk [vmem:[%s262 + $0x30] sm:$0xff] %vm412, %v1736
      %1845 = vst.msk [vmem:[%s262 + $0x38] sm:$0xff] %vm412, %v1739
      %1846 = vst.msk [vmem:[%s262 + $0x40] sm:$0xff] %vm412, %v1744
      %1847 = vst.msk [vmem:[%s262 + $0x48] sm:$0xff] %vm412, %v1747
      %1848 = vst.msk [vmem:[%s262 + $0x50] sm:$0xff] %vm412, %v1752
      %1849 = vst.msk [vmem:[%s262 + $0x58] sm:$0xff] %vm412, %v1755
      %1850 = vst.msk [vmem:[%s262 + $0x60] sm:$0xff] %vm412, %v1760
      %1851 = vst.msk [vmem:[%s262 + $0x68] sm:$0xff] %vm412, %v1763
      %1852 = vst.msk [vmem:[%s262 + $0x70] sm:$0xff] %vm412, %v1768
      %1853 = vst.msk [vmem:[%s262 + $0x78] sm:$0xff] %vm412, %v1771
      %1854 = vst.msk [vmem:[%s262 + $0x80] sm:$0xff] %vm412, %v1776
      %1855 = vst.msk [vmem:[%s262 + $0x88] sm:$0xff] %vm412, %v1779
      %1856 = vst.msk [vmem:[%s262 + $0x90] sm:$0xff] %vm412, %v1784
      %1857 = vst.msk [vmem:[%s262 + $0x98] sm:$0xff] %vm412, %v1787
      %1858 = vst.msk [vmem:[%s262 + $0xa0] sm:$0xff] %vm412, %v1792
      %1859 = vst.msk [vmem:[%s262 + $0xa8] sm:$0xff] %vm412, %v1795
      %1860 = vst.msk [vmem:[%s262 + $0xb0] sm:$0xff] %vm412, %v1800
      %1861 = vst.msk [vmem:[%s262 + $0xb8] sm:$0xff] %vm412, %v1803
      %1862 = vst.msk [vmem:[%s262 + $0xc0] sm:$0xff] %vm412, %v1808
      %1863 = vst.msk [vmem:[%s262 + $0xc8] sm:$0xff] %vm412, %v1811
      %1864 = vst.msk [vmem:[%s262 + $0xd0] sm:$0xff] %vm412, %v1816
      %1865 = vst.msk [vmem:[%s262 + $0xd8] sm:$0xff] %vm412, %v1819
      %1866 = vst.msk [vmem:[%s262 + $0xe0] sm:$0xff] %vm412, %v1824
      %1867 = vst.msk [vmem:[%s262 + $0xe8] sm:$0xff] %vm412, %v1827
      %1868 = vst.msk [vmem:[%s262 + $0xf0] sm:$0xff] %vm412, %v1832
      %1869 = vst.msk [vmem:[%s262 + $0xf8] sm:$0xff] %vm412, %v1835
      %v1870 = vsel %vm412, %v1712, 0.0
      %v1871 = vsel %vm412, %v1715, 0.0
      %v1872 = vadd.f32 %v1870, %v1871
      %v1873 = vsel %vm412, %v1720, 0.0
      %v1874 = vadd.f32 %v1872, %v1873
      %v1875 = vsel %vm412, %v1723, 0.0
      %v1876 = vadd.f32 %v1874, %v1875
      %v1877 = vsel %vm412, %v1728, 0.0
      %v1878 = vadd.f32 %v1876, %v1877
      %v1879 = vsel %vm412, %v1731, 0.0
      %v1880 = vadd.f32 %v1878, %v1879
      %v1881 = vsel %vm412, %v1736, 0.0
      %v1882 = vadd.f32 %v1880, %v1881
      %v1883 = vsel %vm412, %v1739, 0.0
      %v1884 = vadd.f32 %v1882, %v1883
      %v1885 = vsel %vm412, %v1744, 0.0
      %v1886 = vadd.f32 %v1884, %v1885
      %v1887 = vsel %vm412, %v1747, 0.0
      %v1888 = vadd.f32 %v1886, %v1887
      %v1889 = vsel %vm412, %v1752, 0.0
      %v1890 = vadd.f32 %v1888, %v1889
      %v1891 = vsel %vm412, %v1755, 0.0
      %v1892 = vadd.f32 %v1890, %v1891
      %v1893 = vsel %vm412, %v1760, 0.0
      %v1894 = vadd.f32 %v1892, %v1893
      %v1895 = vsel %vm412, %v1763, 0.0
      %v1896 = vadd.f32 %v1894, %v1895
      %v1897 = vsel %vm412, %v1768, 0.0
      %v1898 = vadd.f32 %v1896, %v1897
      %v1899 = vsel %vm412, %v1771, 0.0
      %v1900 = vadd.f32 %v1898, %v1899
      %v1901 = vsel %vm412, %v1776, 0.0
      %v1902 = vadd.f32 %v1900, %v1901
      %v1903 = vsel %vm412, %v1779, 0.0
      %v1904 = vadd.f32 %v1902, %v1903
      %v1905 = vsel %vm412, %v1784, 0.0
      %v1906 = vadd.f32 %v1904, %v1905
      %v1907 = vsel %vm412, %v1787, 0.0
      %v1908 = vadd.f32 %v1906, %v1907
      %v1909 = vsel %vm412, %v1792, 0.0
      %v1910 = vadd.f32 %v1908, %v1909
      %v1911 = vsel %vm412, %v1795, 0.0
      %v1912 = vadd.f32 %v1910, %v1911
      %v1913 = vsel %vm412, %v1800, 0.0
      %v1914 = vadd.f32 %v1912, %v1913
      %v1915 = vsel %vm412, %v1803, 0.0
      %v1916 = vadd.f32 %v1914, %v1915
      %v1917 = vsel %vm412, %v1808, 0.0
      %v1918 = vadd.f32 %v1916, %v1917
      %v1919 = vsel %vm412, %v1811, 0.0
      %v1920 = vadd.f32 %v1918, %v1919
      %v1921 = vsel %vm412, %v1816, 0.0
      %v1922 = vadd.f32 %v1920, %v1921
      %v1923 = vsel %vm412, %v1819, 0.0
      %v1924 = vadd.f32 %v1922, %v1923
      %v1925 = vsel %vm412, %v1824, 0.0
      %v1926 = vadd.f32 %v1924, %v1925
      %v1927 = vsel %vm412, %v1827, 0.0
      %v1928 = vadd.f32 %v1926, %v1927
      %v1929 = vsel %vm412, %v1832, 0.0
      %v1930 = vadd.f32 %v1928, %v1929
      %v1931 = vsel %vm412, %v1835, 0.0
      %v1932 = vadd.f32 %v1930, %v1931
      %v1933 = vrot.slane %v1932, 4
      %v1934 = vadd.f32 %v1932, %v1933
      %v1935 = vrot.slane %v1934, 2
      %v1936 = vadd.f32 %v1934, %v1935
      %v1937 = vrot.slane %v1936, 1
      %v1938 = vadd.f32 %v1936, %v1937
      %1939 = vst.msk [vmem:[%s265] sm:$0x1] %vm421, %v1938
      %v1940 = vmul.f32 %v1712, %v1712
      %v1941 = vmul.f32 %v1715, %v1715
      %v1942 = vmul.f32 %v1720, %v1720
      %v1943 = vmul.f32 %v1723, %v1723
      %v1944 = vmul.f32 %v1728, %v1728
      %v1945 = vmul.f32 %v1731, %v1731
      %v1946 = vmul.f32 %v1736, %v1736
      %v1947 = vmul.f32 %v1739, %v1739
      %v1948 = vmul.f32 %v1744, %v1744
      %v1949 = vmul.f32 %v1747, %v1747
      %v1950 = vmul.f32 %v1752, %v1752
      %v1951 = vmul.f32 %v1755, %v1755
      %v1952 = vmul.f32 %v1760, %v1760
      %v1953 = vmul.f32 %v1763, %v1763
      %v1954 = vmul.f32 %v1768, %v1768
      %v1955 = vmul.f32 %v1771, %v1771
      %v1956 = vmul.f32 %v1776, %v1776
      %v1957 = vmul.f32 %v1779, %v1779
      %v1958 = vmul.f32 %v1784, %v1784
      %v1959 = vmul.f32 %v1787, %v1787
      %v1960 = vmul.f32 %v1792, %v1792
      %v1961 = vmul.f32 %v1795, %v1795
      %v1962 = vmul.f32 %v1800, %v1800
      %v1963 = vmul.f32 %v1803, %v1803
      %v1964 = vmul.f32 %v1808, %v1808
      %v1965 = vmul.f32 %v1811, %v1811
      %v1966 = vmul.f32 %v1816, %v1816
      %v1967 = vmul.f32 %v1819, %v1819
      %v1968 = vmul.f32 %v1824, %v1824
      %v1969 = vmul.f32 %v1827, %v1827
      %v1970 = vmul.f32 %v1832, %v1832
      %v1971 = vmul.f32 %v1835, %v1835
      %v1972 = vsel %vm412, %v1940, 0.0
      %v1973 = vsel %vm412, %v1941, 0.0
      %v1974 = vadd.f32 %v1972, %v1973
      %v1975 = vsel %vm412, %v1942, 0.0
      %v1976 = vadd.f32 %v1974, %v1975
      %v1977 = vsel %vm412, %v1943, 0.0
      %v1978 = vadd.f32 %v1976, %v1977
      %v1979 = vsel %vm412, %v1944, 0.0
      %v1980 = vadd.f32 %v1978, %v1979
      %v1981 = vsel %vm412, %v1945, 0.0
      %v1982 = vadd.f32 %v1980, %v1981
      %v1983 = vsel %vm412, %v1946, 0.0
      %v1984 = vadd.f32 %v1982, %v1983
      %v1985 = vsel %vm412, %v1947, 0.0
      %v1986 = vadd.f32 %v1984, %v1985
      %v1987 = vsel %vm412, %v1948, 0.0
      %v1988 = vadd.f32 %v1986, %v1987
      %v1989 = vsel %vm412, %v1949, 0.0
      %v1990 = vadd.f32 %v1988, %v1989
      %v1991 = vsel %vm412, %v1950, 0.0
      %v1992 = vadd.f32 %v1990, %v1991
      %v1993 = vsel %vm412, %v1951, 0.0
      %v1994 = vadd.f32 %v1992, %v1993
      %v1995 = vsel %vm412, %v1952, 0.0
      %v1996 = vadd.f32 %v1994, %v1995
      %v1997 = vsel %vm412, %v1953, 0.0
      %v1998 = vadd.f32 %v1996, %v1997
      %v1999 = vsel %vm412, %v1954, 0.0
      %v2000 = vadd.f32 %v1998, %v1999
      %v2001 = vsel %vm412, %v1955, 0.0
      %v2002 = vadd.f32 %v2000, %v2001
      %v2003 = vsel %vm412, %v1956, 0.0
      %v2004 = vadd.f32 %v2002, %v2003
      %v2005 = vsel %vm412, %v1957, 0.0
      %v2006 = vadd.f32 %v2004, %v2005
      %v2007 = vsel %vm412, %v1958, 0.0
      %v2008 = vadd.f32 %v2006, %v2007
      %v2009 = vsel %vm412, %v1959, 0.0
      %v2010 = vadd.f32 %v2008, %v2009
      %v2011 = vsel %vm412, %v1960, 0.0
      %v2012 = vadd.f32 %v2010, %v2011
      %v2013 = vsel %vm412, %v1961, 0.0
      %v2014 = vadd.f32 %v2012, %v2013
      %v2015 = vsel %vm412, %v1962, 0.0
      %v2016 = vadd.f32 %v2014, %v2015
      %v2017 = vsel %vm412, %v1963, 0.0
      %v2018 = vadd.f32 %v2016, %v2017
      %v2019 = vsel %vm412, %v1964, 0.0
      %v2020 = vadd.f32 %v2018, %v2019
      %v2021 = vsel %vm412, %v1965, 0.0
      %v2022 = vadd.f32 %v2020, %v2021
      %v2023 = vsel %vm412, %v1966, 0.0
      %v2024 = vadd.f32 %v2022, %v2023
      %v2025 = vsel %vm412, %v1967, 0.0
      %v2026 = vadd.f32 %v2024, %v2025
      %v2027 = vsel %vm412, %v1968, 0.0
      %v2028 = vadd.f32 %v2026, %v2027
      %v2029 = vsel %vm412, %v1969, 0.0
      %v2030 = vadd.f32 %v2028, %v2029
      %v2031 = vsel %vm412, %v1970, 0.0
      %v2032 = vadd.f32 %v2030, %v2031
      %v2033 = vsel %vm412, %v1971, 0.0
      %v2034 = vadd.f32 %v2032, %v2033
      %v2035 = vrot.slane %v2034, 4
      %v2036 = vadd.f32 %v2034, %v2035
      %v2037 = vrot.slane %v2036, 2
      %v2038 = vadd.f32 %v2036, %v2037
      %v2039 = vrot.slane %v2038, 1
      %v2040 = vadd.f32 %v2038, %v2039
      %2041 = vst.msk [vmem:[%s268] sm:$0x1] %vm421, %v2040
      %p2042 = scmp.lt.s32.totalorder %s18, 1
      %s2043 = scalar_select %p2042, %s18, 1
      %s2044 = smul.addr %s2043, 32
      %s2045 = smul.addr %s2044, 8
      %s2046 = scalar_lea.vmem %s4, %s2045
      %p2047 = scmp.lt.s32.totalorder %s18, 1
      %s2048 = scalar_select %p2047, %s18, 1
      %s2049 = scalar_lea.vmem %s5, %s2048
      %p2050 = scmp.lt.s32.totalorder %s18, 1
      %s2051 = scalar_select %p2050, %s18, 1
      %s2052 = scalar_lea.vmem %s6, %s2051
      // Predicated region
      $region37: #{basic_block_forward.4} parent=35 // pred_check
        %p2053 = pneg %p125
      $region38: #{basic_block_forward.4} parent=35 // pred_check_branch
        %2055 = sbr.rel (%p2053) target = $region40
      $region39: #{basic_block_forward.4} parent=35 // pred_region
        _
      $region40: #{basic_block_forward.4} parent=35 // pred_fallthru
        _
      // Predicated region
      $region41: #{basic_block_forward.4} parent=35 // pred_check
        %p2056 = pneg %p151
      $region42: #{basic_block_forward.4} parent=35 // pred_check_branch
        %2058 = sbr.rel (%p2056) target = $region44
      $region43: #{basic_block_forward.4} parent=35 // pred_region
        _
      $region44: #{basic_block_forward.4} parent=35 // pred_fallthru
        _
      // Predicated region
      $region45: #{basic_block_forward.4} parent=35 // pred_check
        %p2059 = pneg %p177
      $region46: #{basic_block_forward.4} parent=35 // pred_check_branch
        %2061 = sbr.rel (%p2059) target = $region48
      $region47: #{basic_block_forward.4} parent=35 // pred_region
        _
      $region48: #{basic_block_forward.4} parent=35 // pred_fallthru
        _
    $region36: #{basic_block_forward.4} parent=5 // pred_fallthru
      _
    %p2062 = scmp.le.s32.totalorder 2, %s13
    // Predicated region
    $region49: #{basic_block_forward.4} parent=5 // pred_check
      %p2063 = pneg %p2062
    $region50: #{basic_block_forward.4} parent=5 // pred_check_branch
      %2065 = sbr.rel (%p2063) target = $region52
    $region51: #{basic_block_forward.4} parent=5 // pred_region
      %s2066 = ssub.s32 %s13, 2
      // Predicated region
      $region53: #{basic_block_forward.4} parent=51 // pred_check
        %p2067 = pneg %p131
      $region54: #{basic_block_forward.4} parent=51 // pred_check_branch
        %2069 = sbr.rel (%p2067) target = $region56
      $region55: #{basic_block_forward.4} parent=51 // pred_region
        %p2070 = scmp.lt.s32.totalorder %s19, 1
        %s2071 = scalar_select %p2070, %s19, 1
        %s2072 = smul.addr %s2071, 32
        %s2073 = smul.addr %s2072, 8
        %s2074 = scalar_lea.vmem %s4, %s2073
      $region56: #{basic_block_forward.4} parent=51 // pred_fallthru
        _
      // Predicated region
      $region57: #{basic_block_forward.4} parent=51 // pred_check
        %p2075 = pneg %p157
      $region58: #{basic_block_forward.4} parent=51 // pred_check_branch
        %2077 = sbr.rel (%p2075) target = $region60
      $region59: #{basic_block_forward.4} parent=51 // pred_region
        %p2078 = scmp.lt.s32.totalorder %s19, 1
        %s2079 = scalar_select %p2078, %s19, 1
        %s2080 = scalar_lea.vmem %s5, %s2079
      $region60: #{basic_block_forward.4} parent=51 // pred_fallthru
        _
      // Predicated region
      $region61: #{basic_block_forward.4} parent=51 // pred_check
        %p2081 = pneg %p183
      $region62: #{basic_block_forward.4} parent=51 // pred_check_branch
        %2083 = sbr.rel (%p2081) target = $region64
      $region63: #{basic_block_forward.4} parent=51 // pred_region
        %p2084 = scmp.lt.s32.totalorder %s19, 1
        %s2085 = scalar_select %p2084, %s19, 1
        %s2086 = scalar_lea.vmem %s6, %s2085
      $region64: #{basic_block_forward.4} parent=51 // pred_fallthru
        _
    $region52: #{basic_block_forward.4} parent=5 // pred_fallthru
      _
  $region6: #{basic_block_forward.4} parent=0 // loop_footer
    %s17 = sadd.s32 1, %s13
  $region7: #{basic_block_forward.4} parent=0 // loop_footer_branch
    %12 = sbr.rel target = $region3
  $region8: #{basic_block_forward.4} parent=0 // loop_exit
    _

</llo_original>
